<compile_context>
chip_gen: v7x
topology: tpu7x:2x2x1
jax: 0.10.0
libtpu: 0.0.40
codegen_flags: <defaults>
</compile_context>

<pallas_src>
import functools

import jax
import jax.numpy as jnp
from jax import lax
from jax.experimental import pallas as pl
from jax.experimental.pallas import tpu as pltpu

EXPANSION = 4
EPS = 1e-5
LANE = 128
MXU_DTYPE = jnp.bfloat16   # MXU operand dtype; accumulation is always f32


def _round_up(n, m):
    return -(-n // m) * m


def _pad_last(a, target):
    return jnp.pad(a, [(0, 0)] * (a.ndim - 1) + [(0, target - a.shape[-1])])


def _bn_relu(y, gamma, beta):
    """Training-mode BatchNorm (batch stats, biased var) + ReLU in one pass.

    y: (NHW, C) f32; gamma/beta: (1, C) f32 (zero in padded lanes -> padded
    lanes stay exactly 0).  Per-element work collapses to one FMA.
    """
    inv_n = 1.0 / y.shape[0]
    mean = jnp.sum(y, axis=0, keepdims=True) * inv_n
    var = jnp.maximum(jnp.sum(y * y, axis=0, keepdims=True) * inv_n - mean * mean, 0.0)
    scale = gamma * lax.rsqrt(var + EPS)
    shift = beta - mean * scale
    return jnp.maximum(y * scale + shift, 0.0)


def block_kernel(N, H, W,
                 x_ref, w1_ref, g1_ref, be1_ref,
                 w2_ref, g2_ref, be2_ref,
                 w3_ref, g3_ref, be3_ref,
                 o_ref, pad_ref):
    NHW = N * H * W
    Cm = pad_ref.shape[-1]                          # lane-padded mid channels

    x2d = x_ref[...]                                # (NHW, Cin_p) f32

    # ---- conv1 (1x1) + BN1 + ReLU: plain channel matmul (bf16 in, f32 acc) ----
    y1 = jnp.dot(x2d.astype(MXU_DTYPE), w1_ref[...],
                 preferred_element_type=jnp.float32)
    y1 = _bn_relu(y1, g1_ref[...], be1_ref[...])    # (NHW, Cm) f32

    # ---- conv2 (3x3, stride 1, pad 1) -----------------------------------------
    # Stage y1 in a (N, H+2, W+2, Cm) VMEM buffer.  Zero ONLY the 1-px halo
    # frame (the interior is written exactly once with real data), then gather
    # the 9 shifted taps and run a single (NHW, 9*Cm) x (9*Cm, Cm) MXU matmul.
    pad_ref[:, 0:1, :, :] = jnp.zeros((N, 1, W + 2, Cm), jnp.float32)
    pad_ref[:, H + 1:H + 2, :, :] = jnp.zeros((N, 1, W + 2, Cm), jnp.float32)
    pad_ref[:, :, 0:1, :] = jnp.zeros((N, H + 2, 1, Cm), jnp.float32)
    pad_ref[:, :, W + 1:W + 2, :] = jnp.zeros((N, H + 2, 1, Cm), jnp.float32)
    pad_ref[:, 1:H + 1, 1:W + 1, :] = y1.reshape(N, H, W, Cm)

    patches = [pad_ref[:, kh:kh + H, kw:kw + W, :].reshape(NHW, Cm)
               for kh in range(3) for kw in range(3)]
    col = jnp.concatenate(patches, axis=-1).astype(MXU_DTYPE)     # (NHW, 9*Cm)
    y2 = jnp.dot(col, w2_ref[...], preferred_element_type=jnp.float32)
    y2 = _bn_relu(y2, g2_ref[...], be2_ref[...])    # (NHW, Cm) f32

    # ---- conv3 (1x1) + BN3 + ReLU ----
    y3 = jnp.dot(y2.astype(MXU_DTYPE), w3_ref[...],
                 preferred_element_type=jnp.float32)
    y3 = _bn_relu(y3, g3_ref[...], be3_ref[...])    # (NHW, Cout_p) f32

    # ---- residual add (identity, no downsample) + final ReLU; lane-dense store
    o_ref[...] = jnp.maximum(y3 + x2d, 0.0).astype(o_ref.dtype)


def block_forward(x_nchw, p):
    N, Cin, H, W = x_nchw.shape
    Cm = p["w1"].shape[1]
    Cout = p["w3"].shape[1]
    assert Cin == Cout, "identity_downsample is None -> channels must match"

    Cin_p, Cm_p, Cout_p = (_round_up(c, LANE) for c in (Cin, Cm, Cout))

    # NCHW -> NHWC -> lane-dense (NHW, C) slab, channels zero-padded to 128.
    x2d = _pad_last(jnp.transpose(x_nchw, (0, 2, 3, 1)).reshape(N * H * W, Cin), Cin_p)

    # Weights in matmul layouts, channel-padded, pre-cast to bf16 for the MXU.
    w1 = jnp.zeros((Cin_p, Cm_p), jnp.float32).at[:Cin, :Cm].set(p["w1"]).astype(MXU_DTYPE)
    w2 = (jnp.zeros((3, 3, Cm_p, Cm_p), jnp.float32).at[:, :, :Cm, :Cm].set(p["w2"])
          .reshape(9 * Cm_p, Cm_p).astype(MXU_DTYPE))   # rows ordered (kh, kw, cin)
    w3 = jnp.zeros((Cm_p, Cout_p), jnp.float32).at[:Cm, :Cout].set(p["w3"]).astype(MXU_DTYPE)

    # BN affine params; padded lanes get gamma=0 / beta=0 so they stay exactly 0.
    g1, be1 = _pad_last(p["g1"], Cm_p), _pad_last(p["be1"], Cm_p)
    g2, be2 = _pad_last(p["g2"], Cm_p), _pad_last(p["be2"], Cm_p)
    g3, be3 = _pad_last(p["g3"], Cout_p), _pad_last(p["be3"], Cout_p)

    kern = functools.partial(block_kernel, N, H, W)
    vmem = pl.BlockSpec(memory_space=pltpu.MemorySpace.VMEM)
    args = (x2d, w1, g1, be1, w2, g2, be2, w3, g3, be3)

    out2d = pl.pallas_call(
        kern,
        out_shape=jax.ShapeDtypeStruct((N * H * W, Cout_p), x_nchw.dtype),
        in_specs=[vmem] * len(args),
        out_specs=vmem,
        scratch_shapes=[pltpu.VMEM((N, H + 2, W + 2, Cm_p), jnp.float32)],
        compiler_params=pltpu.CompilerParams(vmem_limit_bytes=64 * 1024 * 1024),
    )(*args)

    out = out2d[:, :Cout].reshape(N, H, W, Cout)
    return jnp.transpose(out, (0, 3, 1, 2))         # NHWC -> NCHW


def init_params(key, in_channels, out_channels):
    Cm = out_channels
    Cout = out_channels * EXPANSION
    k = jax.random.split(key, 3)
    # Conv biases are omitted: a conv bias immediately followed by
    # training-mode BatchNorm is exactly cancelled by the mean subtraction,
    # so carrying them is dead work (per performance review).
    return {
        # conv weights in matmul-friendly layouts:
        # w1: (Cin, Cm), w2: (3, 3, Cm, Cm) [HWIO], w3: (Cm, Cout)
        "w1": jax.random.normal(k[0], (in_channels, Cm), jnp.float32) / jnp.sqrt(in_channels),
        "w2": jax.random.normal(k[1], (3, 3, Cm, Cm), jnp.float32) / jnp.sqrt(9.0 * Cm),
        "w3": jax.random.normal(k[2], (Cm, Cout), jnp.float32) / jnp.sqrt(Cm),
        # BatchNorm affine params (PyTorch default init: weight=1, bias=0)
        "g1": jnp.ones((1, Cm), jnp.float32), "be1": jnp.zeros((1, Cm), jnp.float32),
        "g2": jnp.ones((1, Cm), jnp.float32), "be2": jnp.zeros((1, Cm), jnp.float32),
        "g3": jnp.ones((1, Cout), jnp.float32), "be3": jnp.zeros((1, Cout), jnp.float32),
    }


def reference_forward(x_nchw, p):
    # Pure-JAX reference reproducing the PyTorch forward (training-mode BN).
    # Matmul/conv operands are cast to bf16 with f32 accumulation, mirroring the
    # kernel's MXU path (within bf16-input rounding of the f32 PyTorch math).
    x = jnp.transpose(x_nchw, (0, 2, 3, 1))

    def bn_relu(y, g, b):
        mean = jnp.mean(y, axis=(0, 1, 2), keepdims=True)
        var = jnp.mean((y - mean) ** 2, axis=(0, 1, 2), keepdims=True)
        yn = (y - mean) * lax.rsqrt(var + EPS) * g.reshape(1, 1, 1, -1) + b.reshape(1, 1, 1, -1)
        return jnp.maximum(yn, 0.0)

    y = jnp.einsum("nhwc,cd->nhwd", x.astype(MXU_DTYPE), p["w1"].astype(MXU_DTYPE),
                   preferred_element_type=jnp.float32)
    y = bn_relu(y, p["g1"], p["be1"])
    y = lax.conv_general_dilated(y.astype(MXU_DTYPE), p["w2"].astype(MXU_DTYPE), (1, 1), "SAME",
                                 dimension_numbers=("NHWC", "HWIO", "NHWC"),
                                 preferred_element_type=jnp.float32)
    y = bn_relu(y, p["g2"], p["be2"])
    y = jnp.einsum("nhwc,cd->nhwd", y.astype(MXU_DTYPE), p["w3"].astype(MXU_DTYPE),
                   preferred_element_type=jnp.float32)
    y = bn_relu(y, p["g3"], p["be3"])
    out = jnp.maximum(y + x, 0.0)
    return jnp.transpose(out, (0, 3, 1, 2))


if __name__ == "__main__":
    key = jax.random.PRNGKey(0)
    kx, kp = jax.random.split(key)

    out_channels = 4
    in_channels = out_channels * EXPANSION          # 16, so the residual add is valid
    N, H, W = 2, 16, 16

    x = jax.random.uniform(kx, (N, in_channels, H, W), jnp.float32)   # NCHW like PyTorch
    params = init_params(kp, in_channels, out_channels)

    out = jax.block_until_ready(block_forward(x, params))
    ref = jax.block_until_ready(reference_forward(x, params))

    assert out.shape == (N, out_channels * EXPANSION, H, W)
    assert jnp.allclose(out, ref, atol=2e-2, rtol=2e-2), float(jnp.max(jnp.abs(out - ref)))
    print("KERNEL_OK")
</pallas_src>

<mosaic_0001>
module attributes {stable_mosaic.version = 11 : i64} {
  func.func @block_kernel(%arg0: memref<512x128xf32, #tpu.memory_space<vmem>>, %arg1: memref<128x128xbf16, #tpu.memory_space<vmem>>, %arg2: memref<1x128xf32, #tpu.memory_space<vmem>>, %arg3: memref<1x128xf32, #tpu.memory_space<vmem>>, %arg4: memref<1152x128xbf16, #tpu.memory_space<vmem>>, %arg5: memref<1x128xf32, #tpu.memory_space<vmem>>, %arg6: memref<1x128xf32, #tpu.memory_space<vmem>>, %arg7: memref<128x128xbf16, #tpu.memory_space<vmem>>, %arg8: memref<1x128xf32, #tpu.memory_space<vmem>>, %arg9: memref<1x128xf32, #tpu.memory_space<vmem>>, %arg10: memref<512x128xf32, #tpu.memory_space<vmem>>, %arg11: memref<2x18x18x128xf32, #tpu.memory_space<vmem>>) attributes {dimension_semantics = [], scalar_prefetch = 0 : i64, scratch_operands = 1 : i64, tpu.core_type = #tpu.core_type<tc>} {
    %c0 = arith.constant 0 : index
    %c0_0 = arith.constant 0 : index
    %0 = vector.load %arg0[%c0, %c0_0] : memref<512x128xf32, #tpu.memory_space<vmem>>, vector<512x128xf32>
    %1 = arith.truncf %0 : vector<512x128xf32> to vector<512x128xbf16>
    %c0_1 = arith.constant 0 : index
    %c0_2 = arith.constant 0 : index
    %2 = vector.load %arg1[%c0_1, %c0_2] : memref<128x128xbf16, #tpu.memory_space<vmem>>, vector<128x128xbf16>
    %cst = arith.constant dense<0.000000e+00> : vector<512x128xf32>
    %3 = tpu.matmul %1, %2, %cst {dimension_numbers = #tpu.dot_dimension_numbers<[1], [0], [0], [1], [0, 0, 1, 1], [], []>} : vector<512x128xbf16>, vector<128x128xbf16>, vector<512x128xf32> -> vector<512x128xf32>
    %c0_3 = arith.constant 0 : index
    %c0_4 = arith.constant 0 : index
    %4 = vector.load %arg2[%c0_3, %c0_4] : memref<1x128xf32, #tpu.memory_space<vmem>>, vector<1x128xf32>
    %c0_5 = arith.constant 0 : index
    %c0_6 = arith.constant 0 : index
    %5 = vector.load %arg3[%c0_5, %c0_6] : memref<1x128xf32, #tpu.memory_space<vmem>>, vector<1x128xf32>
    %cst_7 = arith.constant dense<0.000000e+00> : vector<128xf32>
    %6 = vector.multi_reduction <add>, %3, %cst_7 [0] : vector<512x128xf32> to vector<128xf32>
    %7 = vector.shape_cast %6 : vector<128xf32> to vector<1x128xf32>
    %cst_8 = arith.constant 0.001953125 : f32
    %8 = vector.broadcast %cst_8 : f32 to vector<1x128xf32>
    %9 = arith.mulf %7, %8 : vector<1x128xf32>
    %10 = arith.mulf %3, %3 : vector<512x128xf32>
    %cst_9 = arith.constant dense<0.000000e+00> : vector<128xf32>
    %11 = vector.multi_reduction <add>, %10, %cst_9 [0] : vector<512x128xf32> to vector<128xf32>
    %12 = vector.shape_cast %11 : vector<128xf32> to vector<1x128xf32>
    %cst_10 = arith.constant 0.001953125 : f32
    %13 = vector.broadcast %cst_10 : f32 to vector<1x128xf32>
    %14 = arith.mulf %12, %13 : vector<1x128xf32>
    %15 = arith.mulf %9, %9 : vector<1x128xf32>
    %16 = arith.subf %14, %15 : vector<1x128xf32>
    %cst_11 = arith.constant 0.000000e+00 : f32
    %17 = vector.broadcast %cst_11 : f32 to vector<1x128xf32>
    %18 = arith.maximumf %16, %17 : vector<1x128xf32>
    %cst_12 = arith.constant 9.99999974E-6 : f32
    %19 = vector.broadcast %cst_12 : f32 to vector<1x128xf32>
    %20 = arith.addf %18, %19 : vector<1x128xf32>
    %21 = math.rsqrt %20 : vector<1x128xf32>
    %22 = arith.mulf %4, %21 : vector<1x128xf32>
    %23 = arith.mulf %9, %22 : vector<1x128xf32>
    %24 = arith.subf %5, %23 : vector<1x128xf32>
    %25 = vector.broadcast %22 : vector<1x128xf32> to vector<512x128xf32>
    %26 = arith.mulf %3, %25 : vector<512x128xf32>
    %27 = vector.broadcast %24 : vector<1x128xf32> to vector<512x128xf32>
    %28 = arith.addf %26, %27 : vector<512x128xf32>
    %cst_13 = arith.constant 0.000000e+00 : f32
    %29 = vector.broadcast %cst_13 : f32 to vector<512x128xf32>
    %30 = arith.maximumf %28, %29 : vector<512x128xf32>
    %cst_14 = arith.constant 0.000000e+00 : f32
    %31 = vector.broadcast %cst_14 : f32 to vector<2x1x18x128xf32>
    %c0_15 = arith.constant 0 : index
    %c0_16 = arith.constant 0 : index
    %c0_17 = arith.constant 0 : index
    %c0_18 = arith.constant 0 : index
    %32 = vector.load %arg11[%c0_15, %c0_16, %c0_17, %c0_18] : memref<2x18x18x128xf32, #tpu.memory_space<vmem>>, vector<2x1x18x128xf32>
    tpu.vector_store %arg11[%c0_15, %c0_16, %c0_17, %c0_18], %31 {strides = array<i32>} : memref<2x18x18x128xf32, #tpu.memory_space<vmem>>, vector<2x1x18x128xf32>,
    %cst_19 = arith.constant 0.000000e+00 : f32
    %33 = vector.broadcast %cst_19 : f32 to vector<2x1x18x128xf32>
    %c0_20 = arith.constant 0 : index
    %c17 = arith.constant 17 : index
    %c0_21 = arith.constant 0 : index
    %c0_22 = arith.constant 0 : index
    %34 = vector.load %arg11[%c0_20, %c17, %c0_21, %c0_22] : memref<2x18x18x128xf32, #tpu.memory_space<vmem>>, vector<2x1x18x128xf32>
    tpu.vector_store %arg11[%c0_20, %c17, %c0_21, %c0_22], %33 {strides = array<i32>} : memref<2x18x18x128xf32, #tpu.memory_space<vmem>>, vector<2x1x18x128xf32>,
    %cst_23 = arith.constant 0.000000e+00 : f32
    %35 = vector.broadcast %cst_23 : f32 to vector<2x18x1x128xf32>
    %c0_24 = arith.constant 0 : index
    %c0_25 = arith.constant 0 : index
    %c0_26 = arith.constant 0 : index
    %c0_27 = arith.constant 0 : index
    %36 = vector.load %arg11[%c0_24, %c0_25, %c0_26, %c0_27] : memref<2x18x18x128xf32, #tpu.memory_space<vmem>>, vector<2x18x1x128xf32>
    tpu.vector_store %arg11[%c0_24, %c0_25, %c0_26, %c0_27], %35 {strides = array<i32>} : memref<2x18x18x128xf32, #tpu.memory_space<vmem>>, vector<2x18x1x128xf32>,
    %cst_28 = arith.constant 0.000000e+00 : f32
    %37 = vector.broadcast %cst_28 : f32 to vector<2x18x1x128xf32>
    %c0_29 = arith.constant 0 : index
    %c0_30 = arith.constant 0 : index
    %c17_31 = arith.constant 17 : index
    %c0_32 = arith.constant 0 : index
    %38 = vector.load %arg11[%c0_29, %c0_30, %c17_31, %c0_32] : memref<2x18x18x128xf32, #tpu.memory_space<vmem>>, vector<2x18x1x128xf32>
    tpu.vector_store %arg11[%c0_29, %c0_30, %c17_31, %c0_32], %37 {strides = array<i32>} : memref<2x18x18x128xf32, #tpu.memory_space<vmem>>, vector<2x18x1x128xf32>,
    %39 = vector.shape_cast %30 : vector<512x128xf32> to vector<2x16x16x128xf32>
    %c0_33 = arith.constant 0 : index
    %c1 = arith.constant 1 : index
    %c1_34 = arith.constant 1 : index
    %c0_35 = arith.constant 0 : index
    %40 = vector.load %arg11[%c0_33, %c1, %c1_34, %c0_35] : memref<2x18x18x128xf32, #tpu.memory_space<vmem>>, vector<2x16x16x128xf32>
    tpu.vector_store %arg11[%c0_33, %c1, %c1_34, %c0_35], %39 {strides = array<i32>} : memref<2x18x18x128xf32, #tpu.memory_space<vmem>>, vector<2x16x16x128xf32>,
    %c0_36 = arith.constant 0 : index
    %c0_37 = arith.constant 0 : index
    %c0_38 = arith.constant 0 : index
    %c0_39 = arith.constant 0 : index
    %41 = vector.load %arg11[%c0_36, %c0_37, %c0_38, %c0_39] : memref<2x18x18x128xf32, #tpu.memory_space<vmem>>, vector<2x16x16x128xf32>
    %42 = vector.shape_cast %41 : vector<2x16x16x128xf32> to vector<512x128xf32>
    %c0_40 = arith.constant 0 : index
    %c0_41 = arith.constant 0 : index
    %c1_42 = arith.constant 1 : index
    %c0_43 = arith.constant 0 : index
    %43 = vector.load %arg11[%c0_40, %c0_41, %c1_42, %c0_43] : memref<2x18x18x128xf32, #tpu.memory_space<vmem>>, vector<2x16x16x128xf32>
    %44 = vector.shape_cast %43 : vector<2x16x16x128xf32> to vector<512x128xf32>
    %c0_44 = arith.constant 0 : index
    %c0_45 = arith.constant 0 : index
    %c2 = arith.constant 2 : index
    %c0_46 = arith.constant 0 : index
    %45 = vector.load %arg11[%c0_44, %c0_45, %c2, %c0_46] : memref<2x18x18x128xf32, #tpu.memory_space<vmem>>, vector<2x16x16x128xf32>
    %46 = vector.shape_cast %45 : vector<2x16x16x128xf32> to vector<512x128xf32>
    %c0_47 = arith.constant 0 : index
    %c1_48 = arith.constant 1 : index
    %c0_49 = arith.constant 0 : index
    %c0_50 = arith.constant 0 : index
    %47 = vector.load %arg11[%c0_47, %c1_48, %c0_49, %c0_50] : memref<2x18x18x128xf32, #tpu.memory_space<vmem>>, vector<2x16x16x128xf32>
    %48 = vector.shape_cast %47 : vector<2x16x16x128xf32> to vector<512x128xf32>
    %c0_51 = arith.constant 0 : index
    %c1_52 = arith.constant 1 : index
    %c1_53 = arith.constant 1 : index
    %c0_54 = arith.constant 0 : index
    %49 = vector.load %arg11[%c0_51, %c1_52, %c1_53, %c0_54] : memref<2x18x18x128xf32, #tpu.memory_space<vmem>>, vector<2x16x16x128xf32>
    %50 = vector.shape_cast %49 : vector<2x16x16x128xf32> to vector<512x128xf32>
    %c0_55 = arith.constant 0 : index
    %c1_56 = arith.constant 1 : index
    %c2_57 = arith.constant 2 : index
    %c0_58 = arith.constant 0 : index
    %51 = vector.load %arg11[%c0_55, %c1_56, %c2_57, %c0_58] : memref<2x18x18x128xf32, #tpu.memory_space<vmem>>, vector<2x16x16x128xf32>
    %52 = vector.shape_cast %51 : vector<2x16x16x128xf32> to vector<512x128xf32>
    %c0_59 = arith.constant 0 : index
    %c2_60 = arith.constant 2 : index
    %c0_61 = arith.constant 0 : index
    %c0_62 = arith.constant 0 : index
    %53 = vector.load %arg11[%c0_59, %c2_60, %c0_61, %c0_62] : memref<2x18x18x128xf32, #tpu.memory_space<vmem>>, vector<2x16x16x128xf32>
    %54 = vector.shape_cast %53 : vector<2x16x16x128xf32> to vector<512x128xf32>
    %c0_63 = arith.constant 0 : index
    %c2_64 = arith.constant 2 : index
    %c1_65 = arith.constant 1 : index
    %c0_66 = arith.constant 0 : index
    %55 = vector.load %arg11[%c0_63, %c2_64, %c1_65, %c0_66] : memref<2x18x18x128xf32, #tpu.memory_space<vmem>>, vector<2x16x16x128xf32>
    %56 = vector.shape_cast %55 : vector<2x16x16x128xf32> to vector<512x128xf32>
    %c0_67 = arith.constant 0 : index
    %c2_68 = arith.constant 2 : index
    %c2_69 = arith.constant 2 : index
    %c0_70 = arith.constant 0 : index
    %57 = vector.load %arg11[%c0_67, %c2_68, %c2_69, %c0_70] : memref<2x18x18x128xf32, #tpu.memory_space<vmem>>, vector<2x16x16x128xf32>
    %58 = vector.shape_cast %57 : vector<2x16x16x128xf32> to vector<512x128xf32>
    %59 = tpu.concatenate %42, %44, %46, %48, %50, %52, %54, %56, %58 in 1 : vector<512x128xf32>, vector<512x128xf32>, vector<512x128xf32>, vector<512x128xf32>, vector<512x128xf32>, vector<512x128xf32>, vector<512x128xf32>, vector<512x128xf32>, vector<512x128xf32> -> vector<512x1152xf32>
    %60 = arith.truncf %59 : vector<512x1152xf32> to vector<512x1152xbf16>
    %c0_71 = arith.constant 0 : index
    %c0_72 = arith.constant 0 : index
    %61 = vector.load %arg4[%c0_71, %c0_72] : memref<1152x128xbf16, #tpu.memory_space<vmem>>, vector<1152x128xbf16>
    %cst_73 = arith.constant dense<0.000000e+00> : vector<512x128xf32>
    %62 = tpu.matmul %60, %61, %cst_73 {dimension_numbers = #tpu.dot_dimension_numbers<[1], [0], [0], [1], [0, 0, 1, 1], [], []>} : vector<512x1152xbf16>, vector<1152x128xbf16>, vector<512x128xf32> -> vector<512x128xf32>
    %c0_74 = arith.constant 0 : index
    %c0_75 = arith.constant 0 : index
    %63 = vector.load %arg5[%c0_74, %c0_75] : memref<1x128xf32, #tpu.memory_space<vmem>>, vector<1x128xf32>
    %c0_76 = arith.constant 0 : index
    %c0_77 = arith.constant 0 : index
    %64 = vector.load %arg6[%c0_76, %c0_77] : memref<1x128xf32, #tpu.memory_space<vmem>>, vector<1x128xf32>
    %cst_78 = arith.constant dense<0.000000e+00> : vector<128xf32>
    %65 = vector.multi_reduction <add>, %62, %cst_78 [0] : vector<512x128xf32> to vector<128xf32>
    %66 = vector.shape_cast %65 : vector<128xf32> to vector<1x128xf32>
    %cst_79 = arith.constant 0.001953125 : f32
    %67 = vector.broadcast %cst_79 : f32 to vector<1x128xf32>
    %68 = arith.mulf %66, %67 : vector<1x128xf32>
    %69 = arith.mulf %62, %62 : vector<512x128xf32>
    %cst_80 = arith.constant dense<0.000000e+00> : vector<128xf32>
    %70 = vector.multi_reduction <add>, %69, %cst_80 [0] : vector<512x128xf32> to vector<128xf32>
    %71 = vector.shape_cast %70 : vector<128xf32> to vector<1x128xf32>
    %cst_81 = arith.constant 0.001953125 : f32
    %72 = vector.broadcast %cst_81 : f32 to vector<1x128xf32>
    %73 = arith.mulf %71, %72 : vector<1x128xf32>
    %74 = arith.mulf %68, %68 : vector<1x128xf32>
    %75 = arith.subf %73, %74 : vector<1x128xf32>
    %cst_82 = arith.constant 0.000000e+00 : f32
    %76 = vector.broadcast %cst_82 : f32 to vector<1x128xf32>
    %77 = arith.maximumf %75, %76 : vector<1x128xf32>
    %cst_83 = arith.constant 9.99999974E-6 : f32
    %78 = vector.broadcast %cst_83 : f32 to vector<1x128xf32>
    %79 = arith.addf %77, %78 : vector<1x128xf32>
    %80 = math.rsqrt %79 : vector<1x128xf32>
    %81 = arith.mulf %63, %80 : vector<1x128xf32>
    %82 = arith.mulf %68, %81 : vector<1x128xf32>
    %83 = arith.subf %64, %82 : vector<1x128xf32>
    %84 = vector.broadcast %81 : vector<1x128xf32> to vector<512x128xf32>
    %85 = arith.mulf %62, %84 : vector<512x128xf32>
    %86 = vector.broadcast %83 : vector<1x128xf32> to vector<512x128xf32>
    %87 = arith.addf %85, %86 : vector<512x128xf32>
    %cst_84 = arith.constant 0.000000e+00 : f32
    %88 = vector.broadcast %cst_84 : f32 to vector<512x128xf32>
    %89 = arith.maximumf %87, %88 : vector<512x128xf32>
    %90 = arith.truncf %89 : vector<512x128xf32> to vector<512x128xbf16>
    %c0_85 = arith.constant 0 : index
    %c0_86 = arith.constant 0 : index
    %91 = vector.load %arg7[%c0_85, %c0_86] : memref<128x128xbf16, #tpu.memory_space<vmem>>, vector<128x128xbf16>
    %cst_87 = arith.constant dense<0.000000e+00> : vector<512x128xf32>
    %92 = tpu.matmul %90, %91, %cst_87 {dimension_numbers = #tpu.dot_dimension_numbers<[1], [0], [0], [1], [0, 0, 1, 1], [], []>} : vector<512x128xbf16>, vector<128x128xbf16>, vector<512x128xf32> -> vector<512x128xf32>
    %c0_88 = arith.constant 0 : index
    %c0_89 = arith.constant 0 : index
    %93 = vector.load %arg8[%c0_88, %c0_89] : memref<1x128xf32, #tpu.memory_space<vmem>>, vector<1x128xf32>
    %c0_90 = arith.constant 0 : index
    %c0_91 = arith.constant 0 : index
    %94 = vector.load %arg9[%c0_90, %c0_91] : memref<1x128xf32, #tpu.memory_space<vmem>>, vector<1x128xf32>
    %cst_92 = arith.constant dense<0.000000e+00> : vector<128xf32>
    %95 = vector.multi_reduction <add>, %92, %cst_92 [0] : vector<512x128xf32> to vector<128xf32>
    %96 = vector.shape_cast %95 : vector<128xf32> to vector<1x128xf32>
    %cst_93 = arith.constant 0.001953125 : f32
    %97 = vector.broadcast %cst_93 : f32 to vector<1x128xf32>
    %98 = arith.mulf %96, %97 : vector<1x128xf32>
    %99 = arith.mulf %92, %92 : vector<512x128xf32>
    %cst_94 = arith.constant dense<0.000000e+00> : vector<128xf32>
    %100 = vector.multi_reduction <add>, %99, %cst_94 [0] : vector<512x128xf32> to vector<128xf32>
    %101 = vector.shape_cast %100 : vector<128xf32> to vector<1x128xf32>
    %cst_95 = arith.constant 0.001953125 : f32
    %102 = vector.broadcast %cst_95 : f32 to vector<1x128xf32>
    %103 = arith.mulf %101, %102 : vector<1x128xf32>
    %104 = arith.mulf %98, %98 : vector<1x128xf32>
    %105 = arith.subf %103, %104 : vector<1x128xf32>
    %cst_96 = arith.constant 0.000000e+00 : f32
    %106 = vector.broadcast %cst_96 : f32 to vector<1x128xf32>
    %107 = arith.maximumf %105, %106 : vector<1x128xf32>
    %cst_97 = arith.constant 9.99999974E-6 : f32
    %108 = vector.broadcast %cst_97 : f32 to vector<1x128xf32>
    %109 = arith.addf %107, %108 : vector<1x128xf32>
    %110 = math.rsqrt %109 : vector<1x128xf32>
    %111 = arith.mulf %93, %110 : vector<1x128xf32>
    %112 = arith.mulf %98, %111 : vector<1x128xf32>
    %113 = arith.subf %94, %112 : vector<1x128xf32>
    %114 = vector.broadcast %111 : vector<1x128xf32> to vector<512x128xf32>
    %115 = arith.mulf %92, %114 : vector<512x128xf32>
    %116 = vector.broadcast %113 : vector<1x128xf32> to vector<512x128xf32>
    %117 = arith.addf %115, %116 : vector<512x128xf32>
    %cst_98 = arith.constant 0.000000e+00 : f32
    %118 = vector.broadcast %cst_98 : f32 to vector<512x128xf32>
    %119 = arith.maximumf %117, %118 : vector<512x128xf32>
    %120 = arith.addf %119, %0 : vector<512x128xf32>
    %cst_99 = arith.constant 0.000000e+00 : f32
    %121 = vector.broadcast %cst_99 : f32 to vector<512x128xf32>
    %122 = arith.maximumf %120, %121 : vector<512x128xf32>
    %c0_100 = arith.constant 0 : index
    %c0_101 = arith.constant 0 : index
    %123 = vector.load %arg10[%c0_100, %c0_101] : memref<512x128xf32, #tpu.memory_space<vmem>>, vector<512x128xf32>
    tpu.vector_store %arg10[%c0_100, %c0_101], %122 {strides = array<i32>} : memref<512x128xf32, #tpu.memory_space<vmem>>, vector<512x128xf32>,
    return
  }
}

</mosaic_0001>

<llo_original>
// kernel: tpu_custom_call.1
$region0: #{tpu_custom_call.1}
  #allocation0 [shape = 'u32[]', space=smem, size = 0x4, offset = 0x4, fixed_abs, tag = 'smem constant byte address 0x4 - core index']
  #allocation1 [shape = 'u32[144,128]{1,0:T(1,128)}', space=vmem, size = 0x12000, scoped, tag = 'internal scratch']
  #allocation2 [shape = 'f32[2,18,18,128]{3,2,1,0:T(8,128)}', space=vmem, size = 0x6c000, scoped, tag = 'scratch operand']
  %s0 = inlined_call_operand.hbm [shape: f32[512,128], index: 0, kind: input, shape index: {}]
  %s1 = inlined_call_operand.hbm [shape: bf16[128,128], index: 1, kind: input, shape index: {}]
  %s2 = inlined_call_operand.hbm [shape: f32[1,128], index: 2, kind: input, shape index: {}]
  %s3 = inlined_call_operand.hbm [shape: f32[1,128], index: 3, kind: input, shape index: {}]
  %s4 = inlined_call_operand.hbm [shape: bf16[1152,128], index: 4, kind: input, shape index: {}]
  %s5 = inlined_call_operand.hbm [shape: f32[1,128], index: 5, kind: input, shape index: {}]
  %s6 = inlined_call_operand.hbm [shape: f32[1,128], index: 6, kind: input, shape index: {}]
  %s7 = inlined_call_operand.hbm [shape: bf16[128,128], index: 7, kind: input, shape index: {}]
  %s8 = inlined_call_operand.hbm [shape: f32[1,128], index: 8, kind: input, shape index: {}]
  %s9 = inlined_call_operand.hbm [shape: f32[1,128], index: 9, kind: input, shape index: {}]
  %s10 = inlined_call_operand.hbm [shape: f32[512,128], index: 10, kind: output, shape index: {}]
  %s11 = sld [smem:[#allocation0]]
  $region90: #{tpu_custom_call.1} parent=0
    _
  %s13 = ssub.s32 1, %s11
  %s14 = scalar_select 0, %s13, %s11
  $region1: #{tpu_custom_call.1} parent=0
    #allocation3 [shape = 'u8[262144]{0}', space=vmem, size = 0x40000, scoped, tag = 'input window, operand 0, single buffered']
    #allocation4 [shape = 's32[1]{0}', space=sflag, size = 0x4, scoped, tag = 'scoped memory for tpu_custom_call.1']
    #allocation5 [shape = 's32[1]{0}', space=sflag, size = 0x4, scoped, tag = 'scoped memory for tpu_custom_call.1']
    #allocation6 [shape = 'u8[32768]{0}', space=vmem, size = 0x8000, scoped, tag = 'input window, operand 1, single buffered']
    #allocation7 [shape = 's32[1]{0}', space=sflag, size = 0x4, scoped, tag = 'scoped memory for tpu_custom_call.1']
    #allocation8 [shape = 'u8[512]{0}', space=vmem, size = 0x400, scoped, tag = 'input window, operand 2, single buffered']
    #allocation9 [shape = 'u8[512]{0}', space=vmem, size = 0x400, scoped, tag = 'input window, operand 3, single buffered']
    #allocation10 [shape = 's32[1]{0}', space=sflag, size = 0x4, scoped, tag = 'scoped memory for tpu_custom_call.1']
    #allocation11 [shape = 'u8[294912]{0}', space=vmem, size = 0x48000, scoped, tag = 'input window, operand 4, single buffered']
    #allocation12 [shape = 'u8[512]{0}', space=vmem, size = 0x400, scoped, tag = 'input window, operand 5, single buffered']
    #allocation13 [shape = 's32[1]{0}', space=sflag, size = 0x4, scoped, tag = 'scoped memory for tpu_custom_call.1']
    #allocation14 [shape = 'u8[512]{0}', space=vmem, size = 0x400, scoped, tag = 'input window, operand 6, single buffered']
    #allocation15 [shape = 'u8[32768]{0}', space=vmem, size = 0x8000, scoped, tag = 'input window, operand 7, single buffered']
    #allocation16 [shape = 's32[1]{0}', space=sflag, size = 0x4, scoped, tag = 'scoped memory for tpu_custom_call.1']
    #allocation17 [shape = 'u8[512]{0}', space=vmem, size = 0x400, scoped, tag = 'input window, operand 8, single buffered']
    #allocation18 [shape = 'u8[512]{0}', space=vmem, size = 0x400, scoped, tag = 'input window, operand 9, single buffered']
    #allocation19 [shape = 's32[1]{0}', space=sflag, size = 0x4, scoped, tag = 'scoped memory for tpu_custom_call.1']
    #allocation20 [shape = 'u8[262144]{0}', space=vmem, size = 0x40000, scoped, tag = 'output window, operand 0, single buffered']
    %15 = vsyncpa [#allocation4], 0
    %16 = vsyncpa [#allocation7], 0
    %17 = vsyncpa [#allocation10], 0
    %18 = vsyncpa [#allocation13], 0
    %19 = vsyncpa [#allocation16], 0
    %20 = vsyncpa [#allocation19], 0
    %21 = vsyncpa [#allocation5], 0
    // Predicated region
    $region2: #{tpu_custom_call.1} parent=1 // pred_check
      _
    $region3: #{tpu_custom_call.1} parent=1 // pred_check_branch
      %23 = sbr.rel (0) target = $region5
    $region4: #{tpu_custom_call.1} parent=1 // pred_region
      %s25 = ssub.s32 8192, 8192
      %26 = vsyncadd [#allocation4], %s25
      %s27 = sshll.u32 [#allocation3], 4
      %s28 = int_to_ptr.vmem [resolvable:$true] %s27
      %33 = dma.hbm_to_vmem [thread:$0]  %s0, 8192, %s28, [#allocation4], 128, 128, 8
    $region5: #{tpu_custom_call.1} parent=1 // pred_fallthru
      _
    // Predicated region
    $region6: #{tpu_custom_call.1} parent=1 // pred_check
      _
    $region7: #{tpu_custom_call.1} parent=1 // pred_check_branch
      %35 = sbr.rel (0) target = $region9
    $region8: #{tpu_custom_call.1} parent=1 // pred_region
      %s37 = ssub.s32 1024, 1024
      %38 = vsyncadd [#allocation7], %s37
      %s39 = sshll.u32 [#allocation6], 4
      %s40 = int_to_ptr.vmem [resolvable:$true] %s39
      %45 = dma.hbm_to_vmem [thread:$0]  %s1, 1024, %s40, [#allocation7], 64, 64, 4
    $region9: #{tpu_custom_call.1} parent=1 // pred_fallthru
      _
    // Predicated region
    $region10: #{tpu_custom_call.1} parent=1 // pred_check
      _
    $region11: #{tpu_custom_call.1} parent=1 // pred_check_branch
      %47 = sbr.rel (0) target = $region13
    $region12: #{tpu_custom_call.1} parent=1 // pred_region
      %s49 = ssub.s32 16, 16
      %50 = vsyncadd [#allocation7], %s49
      %s52 = sshll.u32 [#allocation8], 4
      %s53 = int_to_ptr.vmem [resolvable:$true] %s52
      %55 = dma.hbm_to_vmem [thread:$0]  %s2, 16, %s53, [#allocation7]
    $region13: #{tpu_custom_call.1} parent=1 // pred_fallthru
      _
    // Predicated region
    $region14: #{tpu_custom_call.1} parent=1 // pred_check
      _
    $region15: #{tpu_custom_call.1} parent=1 // pred_check_branch
      %57 = sbr.rel (0) target = $region17
    $region16: #{tpu_custom_call.1} parent=1 // pred_region
      %s59 = ssub.s32 16, 16
      %60 = vsyncadd [#allocation10], %s59
      %s62 = sshll.u32 [#allocation9], 4
      %s63 = int_to_ptr.vmem [resolvable:$true] %s62
      %65 = dma.hbm_to_vmem [thread:$0]  %s3, 16, %s63, [#allocation10]
    $region17: #{tpu_custom_call.1} parent=1 // pred_fallthru
      _
    // Predicated region
    $region18: #{tpu_custom_call.1} parent=1 // pred_check
      _
    $region19: #{tpu_custom_call.1} parent=1 // pred_check_branch
      %67 = sbr.rel (0) target = $region21
    $region20: #{tpu_custom_call.1} parent=1 // pred_region
      %s69 = ssub.s32 9216, 9216
      %70 = vsyncadd [#allocation10], %s69
      %s71 = sshll.u32 [#allocation11], 4
      %s72 = int_to_ptr.vmem [resolvable:$true] %s71
      %77 = dma.hbm_to_vmem [thread:$0]  %s4, 9216, %s72, [#allocation10], 64, 64, 4
    $region21: #{tpu_custom_call.1} parent=1 // pred_fallthru
      _
    // Predicated region
    $region22: #{tpu_custom_call.1} parent=1 // pred_check
      _
    $region23: #{tpu_custom_call.1} parent=1 // pred_check_branch
      %79 = sbr.rel (0) target = $region25
    $region24: #{tpu_custom_call.1} parent=1 // pred_region
      %s81 = ssub.s32 16, 16
      %82 = vsyncadd [#allocation13], %s81
      %s84 = sshll.u32 [#allocation12], 4
      %s85 = int_to_ptr.vmem [resolvable:$true] %s84
      %87 = dma.hbm_to_vmem [thread:$0]  %s5, 16, %s85, [#allocation13]
    $region25: #{tpu_custom_call.1} parent=1 // pred_fallthru
      _
    // Predicated region
    $region26: #{tpu_custom_call.1} parent=1 // pred_check
      _
    $region27: #{tpu_custom_call.1} parent=1 // pred_check_branch
      %89 = sbr.rel (0) target = $region29
    $region28: #{tpu_custom_call.1} parent=1 // pred_region
      %s91 = ssub.s32 16, 16
      %92 = vsyncadd [#allocation13], %s91
      %s94 = sshll.u32 [#allocation14], 4
      %s95 = int_to_ptr.vmem [resolvable:$true] %s94
      %97 = dma.hbm_to_vmem [thread:$0]  %s6, 16, %s95, [#allocation13]
    $region29: #{tpu_custom_call.1} parent=1 // pred_fallthru
      _
    // Predicated region
    $region30: #{tpu_custom_call.1} parent=1 // pred_check
      _
    $region31: #{tpu_custom_call.1} parent=1 // pred_check_branch
      %99 = sbr.rel (0) target = $region33
    $region32: #{tpu_custom_call.1} parent=1 // pred_region
      %s101 = ssub.s32 1024, 1024
      %102 = vsyncadd [#allocation16], %s101
      %s103 = sshll.u32 [#allocation15], 4
      %s104 = int_to_ptr.vmem [resolvable:$true] %s103
      %109 = dma.hbm_to_vmem [thread:$0]  %s7, 1024, %s104, [#allocation16], 64, 64, 4
    $region33: #{tpu_custom_call.1} parent=1 // pred_fallthru
      _
    // Predicated region
    $region34: #{tpu_custom_call.1} parent=1 // pred_check
      _
    $region35: #{tpu_custom_call.1} parent=1 // pred_check_branch
      %111 = sbr.rel (0) target = $region37
    $region36: #{tpu_custom_call.1} parent=1 // pred_region
      %s113 = ssub.s32 16, 16
      %114 = vsyncadd [#allocation16], %s113
      %s116 = sshll.u32 [#allocation17], 4
      %s117 = int_to_ptr.vmem [resolvable:$true] %s116
      %119 = dma.hbm_to_vmem [thread:$0]  %s8, 16, %s117, [#allocation16]
    $region37: #{tpu_custom_call.1} parent=1 // pred_fallthru
      _
    // Predicated region
    $region38: #{tpu_custom_call.1} parent=1 // pred_check
      _
    $region39: #{tpu_custom_call.1} parent=1 // pred_check_branch
      %121 = sbr.rel (0) target = $region41
    $region40: #{tpu_custom_call.1} parent=1 // pred_region
      %s123 = ssub.s32 16, 16
      %124 = vsyncadd [#allocation19], %s123
      %s126 = sshll.u32 [#allocation18], 4
      %s127 = int_to_ptr.vmem [resolvable:$true] %s126
      %129 = dma.hbm_to_vmem [thread:$0]  %s9, 16, %s127, [#allocation19]
    $region41: #{tpu_custom_call.1} parent=1 // pred_fallthru
      _
    // Predicated region
    $region42: #{tpu_custom_call.1} parent=1 // pred_check
      _
    $region43: #{tpu_custom_call.1} parent=1 // pred_check_branch
      %131 = sbr.rel (0) target = $region45
    $region44: #{tpu_custom_call.1} parent=1 // pred_region
      %132 = dma.done [#allocation4], 8192
    $region45: #{tpu_custom_call.1} parent=1 // pred_fallthru
      _
    // Predicated region
    $region46: #{tpu_custom_call.1} parent=1 // pred_check
      _
    $region47: #{tpu_custom_call.1} parent=1 // pred_check_branch
      %134 = sbr.rel (0) target = $region49
    $region48: #{tpu_custom_call.1} parent=1 // pred_region
      %135 = dma.done [#allocation7], 1024
    $region49: #{tpu_custom_call.1} parent=1 // pred_fallthru
      _
    // Predicated region
    $region50: #{tpu_custom_call.1} parent=1 // pred_check
      _
    $region51: #{tpu_custom_call.1} parent=1 // pred_check_branch
      %137 = sbr.rel (0) target = $region53
    $region52: #{tpu_custom_call.1} parent=1 // pred_region
      %138 = dma.done [#allocation7], 16
    $region53: #{tpu_custom_call.1} parent=1 // pred_fallthru
      _
    // Predicated region
    $region54: #{tpu_custom_call.1} parent=1 // pred_check
      _
    $region55: #{tpu_custom_call.1} parent=1 // pred_check_branch
      %140 = sbr.rel (0) target = $region57
    $region56: #{tpu_custom_call.1} parent=1 // pred_region
      %141 = dma.done [#allocation10], 16
    $region57: #{tpu_custom_call.1} parent=1 // pred_fallthru
      _
    // Predicated region
    $region58: #{tpu_custom_call.1} parent=1 // pred_check
      _
    $region59: #{tpu_custom_call.1} parent=1 // pred_check_branch
      %143 = sbr.rel (0) target = $region61
    $region60: #{tpu_custom_call.1} parent=1 // pred_region
      %144 = dma.done [#allocation10], 9216
    $region61: #{tpu_custom_call.1} parent=1 // pred_fallthru
      _
    // Predicated region
    $region62: #{tpu_custom_call.1} parent=1 // pred_check
      _
    $region63: #{tpu_custom_call.1} parent=1 // pred_check_branch
      %146 = sbr.rel (0) target = $region65
    $region64: #{tpu_custom_call.1} parent=1 // pred_region
      %147 = dma.done [#allocation13], 16
    $region65: #{tpu_custom_call.1} parent=1 // pred_fallthru
      _
    // Predicated region
    $region66: #{tpu_custom_call.1} parent=1 // pred_check
      _
    $region67: #{tpu_custom_call.1} parent=1 // pred_check_branch
      %149 = sbr.rel (0) target = $region69
    $region68: #{tpu_custom_call.1} parent=1 // pred_region
      %150 = dma.done [#allocation13], 16
    $region69: #{tpu_custom_call.1} parent=1 // pred_fallthru
      _
    // Predicated region
    $region70: #{tpu_custom_call.1} parent=1 // pred_check
      _
    $region71: #{tpu_custom_call.1} parent=1 // pred_check_branch
      %152 = sbr.rel (0) target = $region73
    $region72: #{tpu_custom_call.1} parent=1 // pred_region
      %153 = dma.done [#allocation16], 1024
    $region73: #{tpu_custom_call.1} parent=1 // pred_fallthru
      _
    // Predicated region
    $region74: #{tpu_custom_call.1} parent=1 // pred_check
      _
    $region75: #{tpu_custom_call.1} parent=1 // pred_check_branch
      %155 = sbr.rel (0) target = $region77
    $region76: #{tpu_custom_call.1} parent=1 // pred_region
      %156 = dma.done [#allocation16], 16
    $region77: #{tpu_custom_call.1} parent=1 // pred_fallthru
      _
    // Predicated region
    $region78: #{tpu_custom_call.1} parent=1 // pred_check
      _
    $region79: #{tpu_custom_call.1} parent=1 // pred_check_branch
      %158 = sbr.rel (0) target = $region81
    $region80: #{tpu_custom_call.1} parent=1 // pred_region
      %159 = dma.done [#allocation19], 16
    $region81: #{tpu_custom_call.1} parent=1 // pred_fallthru
      _
    %v161 = vld [vmem:[#allocation3] sm:$0xff]
    %v162 = vld [vmem:[#allocation3 + $0x8] sm:$0xff]
    %v163 = vld [vmem:[#allocation3 + $0x10] sm:$0xff]
    %v164 = vld [vmem:[#allocation3 + $0x18] sm:$0xff]
    %v165 = vld [vmem:[#allocation3 + $0x20] sm:$0xff]
    %v166 = vld [vmem:[#allocation3 + $0x28] sm:$0xff]
    %v167 = vld [vmem:[#allocation3 + $0x30] sm:$0xff]
    %v168 = vld [vmem:[#allocation3 + $0x38] sm:$0xff]
    %v169 = vld [vmem:[#allocation3 + $0x40] sm:$0xff]
    %v170 = vld [vmem:[#allocation3 + $0x48] sm:$0xff]
    %v171 = vld [vmem:[#allocation3 + $0x50] sm:$0xff]
    %v172 = vld [vmem:[#allocation3 + $0x58] sm:$0xff]
    %v173 = vld [vmem:[#allocation3 + $0x60] sm:$0xff]
    %v174 = vld [vmem:[#allocation3 + $0x68] sm:$0xff]
    %v175 = vld [vmem:[#allocation3 + $0x70] sm:$0xff]
    %v176 = vld [vmem:[#allocation3 + $0x78] sm:$0xff]
    %v177 = vld [vmem:[#allocation3 + $0x80] sm:$0xff]
    %v178 = vld [vmem:[#allocation3 + $0x88] sm:$0xff]
    %v179 = vld [vmem:[#allocation3 + $0x90] sm:$0xff]
    %v180 = vld [vmem:[#allocation3 + $0x98] sm:$0xff]
    %v181 = vld [vmem:[#allocation3 + $0xa0] sm:$0xff]
    %v182 = vld [vmem:[#allocation3 + $0xa8] sm:$0xff]
    %v183 = vld [vmem:[#allocation3 + $0xb0] sm:$0xff]
    %v184 = vld [vmem:[#allocation3 + $0xb8] sm:$0xff]
    %v185 = vld [vmem:[#allocation3 + $0xc0] sm:$0xff]
    %v186 = vld [vmem:[#allocation3 + $0xc8] sm:$0xff]
    %v187 = vld [vmem:[#allocation3 + $0xd0] sm:$0xff]
    %v188 = vld [vmem:[#allocation3 + $0xd8] sm:$0xff]
    %v189 = vld [vmem:[#allocation3 + $0xe0] sm:$0xff]
    %v190 = vld [vmem:[#allocation3 + $0xe8] sm:$0xff]
    %v191 = vld [vmem:[#allocation3 + $0xf0] sm:$0xff]
    %v192 = vld [vmem:[#allocation3 + $0xf8] sm:$0xff]
    %v193 = vld [vmem:[#allocation3 + $0x100] sm:$0xff]
    %v194 = vld [vmem:[#allocation3 + $0x108] sm:$0xff]
    %v195 = vld [vmem:[#allocation3 + $0x110] sm:$0xff]
    %v196 = vld [vmem:[#allocation3 + $0x118] sm:$0xff]
    %v197 = vld [vmem:[#allocation3 + $0x120] sm:$0xff]
    %v198 = vld [vmem:[#allocation3 + $0x128] sm:$0xff]
    %v199 = vld [vmem:[#allocation3 + $0x130] sm:$0xff]
    %v200 = vld [vmem:[#allocation3 + $0x138] sm:$0xff]
    %v201 = vld [vmem:[#allocation3 + $0x140] sm:$0xff]
    %v202 = vld [vmem:[#allocation3 + $0x148] sm:$0xff]
    %v203 = vld [vmem:[#allocation3 + $0x150] sm:$0xff]
    %v204 = vld [vmem:[#allocation3 + $0x158] sm:$0xff]
    %v205 = vld [vmem:[#allocation3 + $0x160] sm:$0xff]
    %v206 = vld [vmem:[#allocation3 + $0x168] sm:$0xff]
    %v207 = vld [vmem:[#allocation3 + $0x170] sm:$0xff]
    %v208 = vld [vmem:[#allocation3 + $0x178] sm:$0xff]
    %v209 = vld [vmem:[#allocation3 + $0x180] sm:$0xff]
    %v210 = vld [vmem:[#allocation3 + $0x188] sm:$0xff]
    %v211 = vld [vmem:[#allocation3 + $0x190] sm:$0xff]
    %v212 = vld [vmem:[#allocation3 + $0x198] sm:$0xff]
    %v213 = vld [vmem:[#allocation3 + $0x1a0] sm:$0xff]
    %v214 = vld [vmem:[#allocation3 + $0x1a8] sm:$0xff]
    %v215 = vld [vmem:[#allocation3 + $0x1b0] sm:$0xff]
    %v216 = vld [vmem:[#allocation3 + $0x1b8] sm:$0xff]
    %v217 = vld [vmem:[#allocation3 + $0x1c0] sm:$0xff]
    %v218 = vld [vmem:[#allocation3 + $0x1c8] sm:$0xff]
    %v219 = vld [vmem:[#allocation3 + $0x1d0] sm:$0xff]
    %v220 = vld [vmem:[#allocation3 + $0x1d8] sm:$0xff]
    %v221 = vld [vmem:[#allocation3 + $0x1e0] sm:$0xff]
    %v222 = vld [vmem:[#allocation3 + $0x1e8] sm:$0xff]
    %v223 = vld [vmem:[#allocation3 + $0x1f0] sm:$0xff]
    %v224 = vld [vmem:[#allocation3 + $0x1f8] sm:$0xff]
    %v225 = vpack.c.bf16 %v162, %v161
    %v226 = vpack.c.bf16 %v164, %v163
    %v227 = vpack.c.bf16 %v166, %v165
    %v228 = vpack.c.bf16 %v168, %v167
    %v229 = vpack.c.bf16 %v170, %v169
    %v230 = vpack.c.bf16 %v172, %v171
    %v231 = vpack.c.bf16 %v174, %v173
    %v232 = vpack.c.bf16 %v176, %v175
    %v233 = vpack.c.bf16 %v178, %v177
    %v234 = vpack.c.bf16 %v180, %v179
    %v235 = vpack.c.bf16 %v182, %v181
    %v236 = vpack.c.bf16 %v184, %v183
    %v237 = vpack.c.bf16 %v186, %v185
    %v238 = vpack.c.bf16 %v188, %v187
    %v239 = vpack.c.bf16 %v190, %v189
    %v240 = vpack.c.bf16 %v192, %v191
    %v241 = vpack.c.bf16 %v194, %v193
    %v242 = vpack.c.bf16 %v196, %v195
    %v243 = vpack.c.bf16 %v198, %v197
    %v244 = vpack.c.bf16 %v200, %v199
    %v245 = vpack.c.bf16 %v202, %v201
    %v246 = vpack.c.bf16 %v204, %v203
    %v247 = vpack.c.bf16 %v206, %v205
    %v248 = vpack.c.bf16 %v208, %v207
    %v249 = vpack.c.bf16 %v210, %v209
    %v250 = vpack.c.bf16 %v212, %v211
    %v251 = vpack.c.bf16 %v214, %v213
    %v252 = vpack.c.bf16 %v216, %v215
    %v253 = vpack.c.bf16 %v218, %v217
    %v254 = vpack.c.bf16 %v220, %v219
    %v255 = vpack.c.bf16 %v222, %v221
    %v256 = vpack.c.bf16 %v224, %v223
    %v257 = vld [vmem:[#allocation6] sm:$0xf]
    %v258 = vld [vmem:[#allocation6 + $0x4] sm:$0xf]
    %v259 = vld [vmem:[#allocation6 + $0x8] sm:$0xf]
    %v260 = vld [vmem:[#allocation6 + $0xc] sm:$0xf]
    %v261 = vld [vmem:[#allocation6 + $0x10] sm:$0xf]
    %v262 = vld [vmem:[#allocation6 + $0x14] sm:$0xf]
    %v263 = vld [vmem:[#allocation6 + $0x18] sm:$0xf]
    %v264 = vld [vmem:[#allocation6 + $0x1c] sm:$0xf]
    %v265 = vld [vmem:[#allocation6 + $0x20] sm:$0xf]
    %v266 = vld [vmem:[#allocation6 + $0x24] sm:$0xf]
    %v267 = vld [vmem:[#allocation6 + $0x28] sm:$0xf]
    %v268 = vld [vmem:[#allocation6 + $0x2c] sm:$0xf]
    %v269 = vld [vmem:[#allocation6 + $0x30] sm:$0xf]
    %v270 = vld [vmem:[#allocation6 + $0x34] sm:$0xf]
    %v271 = vld [vmem:[#allocation6 + $0x38] sm:$0xf]
    %v272 = vld [vmem:[#allocation6 + $0x3c] sm:$0xf]
    %v289 = vunpack.c.l.b16 %v257
    %v290 = vunpack.c.l.b16 %v258
    %v291 = vunpack.c.l.b16 %v259
    %v292 = vunpack.c.l.b16 %v260
    %v293 = vunpack.c.l.b16 %v261
    %v294 = vunpack.c.l.b16 %v262
    %v295 = vunpack.c.l.b16 %v263
    %v296 = vunpack.c.l.b16 %v264
    %v297 = vunpack.c.l.b16 %v265
    %v298 = vunpack.c.l.b16 %v266
    %v299 = vunpack.c.l.b16 %v267
    %v300 = vunpack.c.l.b16 %v268
    %v301 = vunpack.c.l.b16 %v269
    %v302 = vunpack.c.l.b16 %v270
    %v303 = vunpack.c.l.b16 %v271
    %v304 = vunpack.c.l.b16 %v272
    %v305 = vpack.c.b16 %v290, %v289
    %v306 = vpack.c.b16 %v292, %v291
    %v307 = vpack.c.b16 %v294, %v293
    %v308 = vpack.c.b16 %v296, %v295
    %v309 = vpack.c.b16 %v298, %v297
    %v310 = vpack.c.b16 %v300, %v299
    %v311 = vpack.c.b16 %v302, %v301
    %v312 = vpack.c.b16 %v304, %v303
    %321 = vmatprep.subr.bf16.mxu0 0
    %322 = vmatpush1.bf16.msra.mxu0 %v305
    %323 = vmatprep.subr.bf16.mxu0 0
    %324 = vmatpush1.bf16.msra.mxu0 %v306
    %325 = vmatprep.subr.bf16.mxu0 0
    %326 = vmatpush1.bf16.msra.mxu0 %v307
    %327 = vmatprep.subr.bf16.mxu0 0
    %328 = vmatpush1.bf16.msra.mxu0 %v308
    %329 = vmatprep.subr.bf16.mxu0 0
    %330 = vmatpush1.bf16.msra.mxu0 %v309
    %331 = vmatprep.subr.bf16.mxu0 0
    %332 = vmatpush1.bf16.msra.mxu0 %v310
    %333 = vmatprep.subr.bf16.mxu0 0
    %334 = vmatpush1.bf16.msra.mxu0 %v311
    %335 = vmatprep.subr.bf16.mxu0 0
    %336 = vmatpush1.bf16.msra.mxu0 %v312
    %337 = vmatprep.subr.bf16.mxu0 0
    %338 = vmatpush1.bf16.msra.mxu0 0
    %339 = vmatprep.subr.bf16.mxu0 0
    %340 = vmatpush1.bf16.msra.mxu0 0
    %341 = vmatprep.subr.bf16.mxu0 0
    %342 = vmatpush1.bf16.msra.mxu0 0
    %343 = vmatprep.subr.bf16.mxu0 0
    %344 = vmatpush1.bf16.msra.mxu0 0
    %345 = vmatprep.subr.bf16.mxu0 0
    %346 = vmatpush1.bf16.msra.mxu0 0
    %347 = vmatprep.subr.bf16.mxu0 0
    %348 = vmatpush1.bf16.msra.mxu0 0
    %349 = vmatprep.subr.bf16.mxu0 0
    %350 = vmatpush1.bf16.msra.mxu0 0
    %351 = vmatprep.subr.bf16.mxu0 0
    %352 = vmatpush1.bf16.msra.mxu0 0
    %353 = vmatprep.mubr.bf16.mxu0 0
    %354 = vmatmul.mubr.bf16.gmra.mrb[0].mxu0 %v225
    %v355 = vpop.f32.mrb[0].mxu0
    %v356 = vadd.f32 0.0, %v355
    %v357 = vpop.f32.mrb[0].mxu0
    %v358 = vpop.f32.mrb[0].mxu0
    %v359 = vadd.f32 0.0, %v358
    %v360 = vpop.f32.mrb[0].mxu0
    %361 = vmatprep.mubr.bf16.mxu0 0
    %362 = vmatmul.mubr.bf16.gmra.mrb[0].mxu0 %v226
    %v363 = vpop.f32.mrb[0].mxu0
    %v364 = vadd.f32 0.0, %v363
    %v365 = vpop.f32.mrb[0].mxu0
    %v366 = vpop.f32.mrb[0].mxu0
    %v367 = vadd.f32 0.0, %v366
    %v368 = vpop.f32.mrb[0].mxu0
    %369 = vmatprep.mubr.bf16.mxu0 0
    %370 = vmatmul.mubr.bf16.gmra.mrb[0].mxu0 %v227
    %v371 = vpop.f32.mrb[0].mxu0
    %v372 = vadd.f32 0.0, %v371
    %v373 = vpop.f32.mrb[0].mxu0
    %v374 = vpop.f32.mrb[0].mxu0
    %v375 = vadd.f32 0.0, %v374
    %v376 = vpop.f32.mrb[0].mxu0
    %377 = vmatprep.mubr.bf16.mxu0 0
    %378 = vmatmul.mubr.bf16.gmra.mrb[0].mxu0 %v228
    %v379 = vpop.f32.mrb[0].mxu0
    %v380 = vadd.f32 0.0, %v379
    %v381 = vpop.f32.mrb[0].mxu0
    %v382 = vpop.f32.mrb[0].mxu0
    %v383 = vadd.f32 0.0, %v382
    %v384 = vpop.f32.mrb[0].mxu0
    %385 = vmatprep.mubr.bf16.mxu0 0
    %386 = vmatmul.mubr.bf16.gmra.mrb[0].mxu0 %v229
    %v387 = vpop.f32.mrb[0].mxu0
    %v388 = vadd.f32 0.0, %v387
    %v389 = vpop.f32.mrb[0].mxu0
    %v390 = vpop.f32.mrb[0].mxu0
    %v391 = vadd.f32 0.0, %v390
    %v392 = vpop.f32.mrb[0].mxu0
    %393 = vmatprep.mubr.bf16.mxu0 0
    %394 = vmatmul.mubr.bf16.gmra.mrb[0].mxu0 %v230
    %v395 = vpop.f32.mrb[0].mxu0
    %v396 = vadd.f32 0.0, %v395
    %v397 = vpop.f32.mrb[0].mxu0
    %v398 = vpop.f32.mrb[0].mxu0
    %v399 = vadd.f32 0.0, %v398
    %v400 = vpop.f32.mrb[0].mxu0
    %401 = vmatprep.mubr.bf16.mxu0 0
    %402 = vmatmul.mubr.bf16.gmra.mrb[0].mxu0 %v231
    %v403 = vpop.f32.mrb[0].mxu0
    %v404 = vadd.f32 0.0, %v403
    %v405 = vpop.f32.mrb[0].mxu0
    %v406 = vpop.f32.mrb[0].mxu0
    %v407 = vadd.f32 0.0, %v406
    %v408 = vpop.f32.mrb[0].mxu0
    %409 = vmatprep.mubr.bf16.mxu0 0
    %410 = vmatmul.mubr.bf16.gmra.mrb[0].mxu0 %v232
    %v411 = vpop.f32.mrb[0].mxu0
    %v412 = vadd.f32 0.0, %v411
    %v413 = vpop.f32.mrb[0].mxu0
    %v414 = vpop.f32.mrb[0].mxu0
    %v415 = vadd.f32 0.0, %v414
    %v416 = vpop.f32.mrb[0].mxu0
    %417 = vmatprep.mubr.bf16.mxu0 0
    %418 = vmatmul.mubr.bf16.gmra.mrb[0].mxu0 %v233
    %v419 = vpop.f32.mrb[0].mxu0
    %v420 = vadd.f32 0.0, %v419
    %v421 = vpop.f32.mrb[0].mxu0
    %v422 = vpop.f32.mrb[0].mxu0
    %v423 = vadd.f32 0.0, %v422
    %v424 = vpop.f32.mrb[0].mxu0
    %425 = vmatprep.mubr.bf16.mxu0 0
    %426 = vmatmul.mubr.bf16.gmra.mrb[0].mxu0 %v234
    %v427 = vpop.f32.mrb[0].mxu0
    %v428 = vadd.f32 0.0, %v427
    %v429 = vpop.f32.mrb[0].mxu0
    %v430 = vpop.f32.mrb[0].mxu0
    %v431 = vadd.f32 0.0, %v430
    %v432 = vpop.f32.mrb[0].mxu0
    %433 = vmatprep.mubr.bf16.mxu0 0
    %434 = vmatmul.mubr.bf16.gmra.mrb[0].mxu0 %v235
    %v435 = vpop.f32.mrb[0].mxu0
    %v436 = vadd.f32 0.0, %v435
    %v437 = vpop.f32.mrb[0].mxu0
    %v438 = vpop.f32.mrb[0].mxu0
    %v439 = vadd.f32 0.0, %v438
    %v440 = vpop.f32.mrb[0].mxu0
    %441 = vmatprep.mubr.bf16.mxu0 0
    %442 = vmatmul.mubr.bf16.gmra.mrb[0].mxu0 %v236
    %v443 = vpop.f32.mrb[0].mxu0
    %v444 = vadd.f32 0.0, %v443
    %v445 = vpop.f32.mrb[0].mxu0
    %v446 = vpop.f32.mrb[0].mxu0
    %v447 = vadd.f32 0.0, %v446
    %v448 = vpop.f32.mrb[0].mxu0
    %449 = vmatprep.mubr.bf16.mxu0 0
    %450 = vmatmul.mubr.bf16.gmra.mrb[0].mxu0 %v237
    %v451 = vpop.f32.mrb[0].mxu0
    %v452 = vadd.f32 0.0, %v451
    %v453 = vpop.f32.mrb[0].mxu0
    %v454 = vpop.f32.mrb[0].mxu0
    %v455 = vadd.f32 0.0, %v454
    %v456 = vpop.f32.mrb[0].mxu0
    %457 = vmatprep.mubr.bf16.mxu0 0
    %458 = vmatmul.mubr.bf16.gmra.mrb[0].mxu0 %v238
    %v459 = vpop.f32.mrb[0].mxu0
    %v460 = vadd.f32 0.0, %v459
    %v461 = vpop.f32.mrb[0].mxu0
    %v462 = vpop.f32.mrb[0].mxu0
    %v463 = vadd.f32 0.0, %v462
    %v464 = vpop.f32.mrb[0].mxu0
    %465 = vmatprep.mubr.bf16.mxu0 0
    %466 = vmatmul.mubr.bf16.gmra.mrb[0].mxu0 %v239
    %v467 = vpop.f32.mrb[0].mxu0
    %v468 = vadd.f32 0.0, %v467
    %v469 = vpop.f32.mrb[0].mxu0
    %v470 = vpop.f32.mrb[0].mxu0
    %v471 = vadd.f32 0.0, %v470
    %v472 = vpop.f32.mrb[0].mxu0
    %473 = vmatprep.mubr.bf16.mxu0 0
    %474 = vmatmul.mubr.bf16.gmra.mrb[0].mxu0 %v240
    %v475 = vpop.f32.mrb[0].mxu0
    %v476 = vadd.f32 0.0, %v475
    %v477 = vpop.f32.mrb[0].mxu0
    %v478 = vpop.f32.mrb[0].mxu0
    %v479 = vadd.f32 0.0, %v478
    %v480 = vpop.f32.mrb[0].mxu0
    %481 = vmatprep.mubr.bf16.mxu0 0
    %482 = vmatmul.mubr.bf16.gmra.mrb[0].mxu0 %v241
    %v483 = vpop.f32.mrb[0].mxu0
    %v484 = vadd.f32 0.0, %v483
    %v485 = vpop.f32.mrb[0].mxu0
    %v486 = vpop.f32.mrb[0].mxu0
    %v487 = vadd.f32 0.0, %v486
    %v488 = vpop.f32.mrb[0].mxu0
    %489 = vmatprep.mubr.bf16.mxu0 0
    %490 = vmatmul.mubr.bf16.gmra.mrb[0].mxu0 %v242
    %v491 = vpop.f32.mrb[0].mxu0
    %v492 = vadd.f32 0.0, %v491
    %v493 = vpop.f32.mrb[0].mxu0
    %v494 = vpop.f32.mrb[0].mxu0
    %v495 = vadd.f32 0.0, %v494
    %v496 = vpop.f32.mrb[0].mxu0
    %497 = vmatprep.mubr.bf16.mxu0 0
    %498 = vmatmul.mubr.bf16.gmra.mrb[0].mxu0 %v243
    %v499 = vpop.f32.mrb[0].mxu0
    %v500 = vadd.f32 0.0, %v499
    %v501 = vpop.f32.mrb[0].mxu0
    %v502 = vpop.f32.mrb[0].mxu0
    %v503 = vadd.f32 0.0, %v502
    %v504 = vpop.f32.mrb[0].mxu0
    %505 = vmatprep.mubr.bf16.mxu0 0
    %506 = vmatmul.mubr.bf16.gmra.mrb[0].mxu0 %v244
    %v507 = vpop.f32.mrb[0].mxu0
    %v508 = vadd.f32 0.0, %v507
    %v509 = vpop.f32.mrb[0].mxu0
    %v510 = vpop.f32.mrb[0].mxu0
    %v511 = vadd.f32 0.0, %v510
    %v512 = vpop.f32.mrb[0].mxu0
    %513 = vmatprep.mubr.bf16.mxu0 0
    %514 = vmatmul.mubr.bf16.gmra.mrb[0].mxu0 %v245
    %v515 = vpop.f32.mrb[0].mxu0
    %v516 = vadd.f32 0.0, %v515
    %v517 = vpop.f32.mrb[0].mxu0
    %v518 = vpop.f32.mrb[0].mxu0
    %v519 = vadd.f32 0.0, %v518
    %v520 = vpop.f32.mrb[0].mxu0
    %521 = vmatprep.mubr.bf16.mxu0 0
    %522 = vmatmul.mubr.bf16.gmra.mrb[0].mxu0 %v246
    %v523 = vpop.f32.mrb[0].mxu0
    %v524 = vadd.f32 0.0, %v523
    %v525 = vpop.f32.mrb[0].mxu0
    %v526 = vpop.f32.mrb[0].mxu0
    %v527 = vadd.f32 0.0, %v526
    %v528 = vpop.f32.mrb[0].mxu0
    %529 = vmatprep.mubr.bf16.mxu0 0
    %530 = vmatmul.mubr.bf16.gmra.mrb[0].mxu0 %v247
    %v531 = vpop.f32.mrb[0].mxu0
    %v532 = vadd.f32 0.0, %v531
    %v533 = vpop.f32.mrb[0].mxu0
    %v534 = vpop.f32.mrb[0].mxu0
    %v535 = vadd.f32 0.0, %v534
    %v536 = vpop.f32.mrb[0].mxu0
    %537 = vmatprep.mubr.bf16.mxu0 0
    %538 = vmatmul.mubr.bf16.gmra.mrb[0].mxu0 %v248
    %v539 = vpop.f32.mrb[0].mxu0
    %v540 = vadd.f32 0.0, %v539
    %v541 = vpop.f32.mrb[0].mxu0
    %v542 = vpop.f32.mrb[0].mxu0
    %v543 = vadd.f32 0.0, %v542
    %v544 = vpop.f32.mrb[0].mxu0
    %545 = vmatprep.mubr.bf16.mxu0 0
    %546 = vmatmul.mubr.bf16.gmra.mrb[0].mxu0 %v249
    %v547 = vpop.f32.mrb[0].mxu0
    %v548 = vadd.f32 0.0, %v547
    %v549 = vpop.f32.mrb[0].mxu0
    %v550 = vpop.f32.mrb[0].mxu0
    %v551 = vadd.f32 0.0, %v550
    %v552 = vpop.f32.mrb[0].mxu0
    %553 = vmatprep.mubr.bf16.mxu0 0
    %554 = vmatmul.mubr.bf16.gmra.mrb[0].mxu0 %v250
    %v555 = vpop.f32.mrb[0].mxu0
    %v556 = vadd.f32 0.0, %v555
    %v557 = vpop.f32.mrb[0].mxu0
    %v558 = vpop.f32.mrb[0].mxu0
    %v559 = vadd.f32 0.0, %v558
    %v560 = vpop.f32.mrb[0].mxu0
    %561 = vmatprep.mubr.bf16.mxu0 0
    %562 = vmatmul.mubr.bf16.gmra.mrb[0].mxu0 %v251
    %v563 = vpop.f32.mrb[0].mxu0
    %v564 = vadd.f32 0.0, %v563
    %v565 = vpop.f32.mrb[0].mxu0
    %v566 = vpop.f32.mrb[0].mxu0
    %v567 = vadd.f32 0.0, %v566
    %v568 = vpop.f32.mrb[0].mxu0
    %569 = vmatprep.mubr.bf16.mxu0 0
    %570 = vmatmul.mubr.bf16.gmra.mrb[0].mxu0 %v252
    %v571 = vpop.f32.mrb[0].mxu0
    %v572 = vadd.f32 0.0, %v571
    %v573 = vpop.f32.mrb[0].mxu0
    %v574 = vpop.f32.mrb[0].mxu0
    %v575 = vadd.f32 0.0, %v574
    %v576 = vpop.f32.mrb[0].mxu0
    %577 = vmatprep.mubr.bf16.mxu0 0
    %578 = vmatmul.mubr.bf16.gmra.mrb[0].mxu0 %v253
    %v579 = vpop.f32.mrb[0].mxu0
    %v580 = vadd.f32 0.0, %v579
    %v581 = vpop.f32.mrb[0].mxu0
    %v582 = vpop.f32.mrb[0].mxu0
    %v583 = vadd.f32 0.0, %v582
    %v584 = vpop.f32.mrb[0].mxu0
    %585 = vmatprep.mubr.bf16.mxu0 0
    %586 = vmatmul.mubr.bf16.gmra.mrb[0].mxu0 %v254
    %v587 = vpop.f32.mrb[0].mxu0
    %v588 = vadd.f32 0.0, %v587
    %v589 = vpop.f32.mrb[0].mxu0
    %v590 = vpop.f32.mrb[0].mxu0
    %v591 = vadd.f32 0.0, %v590
    %v592 = vpop.f32.mrb[0].mxu0
    %593 = vmatprep.mubr.bf16.mxu0 0
    %594 = vmatmul.mubr.bf16.gmra.mrb[0].mxu0 %v255
    %v595 = vpop.f32.mrb[0].mxu0
    %v596 = vadd.f32 0.0, %v595
    %v597 = vpop.f32.mrb[0].mxu0
    %v598 = vpop.f32.mrb[0].mxu0
    %v599 = vadd.f32 0.0, %v598
    %v600 = vpop.f32.mrb[0].mxu0
    %601 = vmatprep.mubr.bf16.mxu0 0
    %602 = vmatmul.mubr.bf16.gmra.mrb[0].mxu0 %v256
    %v603 = vpop.f32.mrb[0].mxu0
    %v604 = vadd.f32 0.0, %v603
    %v605 = vpop.f32.mrb[0].mxu0
    %v606 = vpop.f32.mrb[0].mxu0
    %v607 = vadd.f32 0.0, %v606
    %v608 = vpop.f32.mrb[0].mxu0
    %609 = vdwg.mxu0
    %v610 = vld [vmem:[#allocation8] sm:$0x1]
    %v611 = vld [vmem:[#allocation9] sm:$0x1]
    %v612 = vadd.f32 %v356, %v359
    %v613 = vadd.f32 %v612, %v364
    %v614 = vadd.f32 %v613, %v367
    %v615 = vadd.f32 %v614, %v372
    %v616 = vadd.f32 %v615, %v375
    %v617 = vadd.f32 %v616, %v380
    %v618 = vadd.f32 %v617, %v383
    %v619 = vadd.f32 %v618, %v388
    %v620 = vadd.f32 %v619, %v391
    %v621 = vadd.f32 %v620, %v396
    %v622 = vadd.f32 %v621, %v399
    %v623 = vadd.f32 %v622, %v404
    %v624 = vadd.f32 %v623, %v407
    %v625 = vadd.f32 %v624, %v412
    %v626 = vadd.f32 %v625, %v415
    %v627 = vadd.f32 %v626, %v420
    %v628 = vadd.f32 %v627, %v423
    %v629 = vadd.f32 %v628, %v428
    %v630 = vadd.f32 %v629, %v431
    %v631 = vadd.f32 %v630, %v436
    %v632 = vadd.f32 %v631, %v439
    %v633 = vadd.f32 %v632, %v444
    %v634 = vadd.f32 %v633, %v447
    %v635 = vadd.f32 %v634, %v452
    %v636 = vadd.f32 %v635, %v455
    %v637 = vadd.f32 %v636, %v460
    %v638 = vadd.f32 %v637, %v463
    %v639 = vadd.f32 %v638, %v468
    %v640 = vadd.f32 %v639, %v471
    %v641 = vadd.f32 %v640, %v476
    %v642 = vadd.f32 %v641, %v479
    %v643 = vadd.f32 %v642, %v484
    %v644 = vadd.f32 %v643, %v487
    %v645 = vadd.f32 %v644, %v492
    %v646 = vadd.f32 %v645, %v495
    %v647 = vadd.f32 %v646, %v500
    %v648 = vadd.f32 %v647, %v503
    %v649 = vadd.f32 %v648, %v508
    %v650 = vadd.f32 %v649, %v511
    %v651 = vadd.f32 %v650, %v516
    %v652 = vadd.f32 %v651, %v519
    %v653 = vadd.f32 %v652, %v524
    %v654 = vadd.f32 %v653, %v527
    %v655 = vadd.f32 %v654, %v532
    %v656 = vadd.f32 %v655, %v535
    %v657 = vadd.f32 %v656, %v540
    %v658 = vadd.f32 %v657, %v543
    %v659 = vadd.f32 %v658, %v548
    %v660 = vadd.f32 %v659, %v551
    %v661 = vadd.f32 %v660, %v556
    %v662 = vadd.f32 %v661, %v559
    %v663 = vadd.f32 %v662, %v564
    %v664 = vadd.f32 %v663, %v567
    %v665 = vadd.f32 %v664, %v572
    %v666 = vadd.f32 %v665, %v575
    %v667 = vadd.f32 %v666, %v580
    %v668 = vadd.f32 %v667, %v583
    %v669 = vadd.f32 %v668, %v588
    %v670 = vadd.f32 %v669, %v591
    %v671 = vadd.f32 %v670, %v596
    %v672 = vadd.f32 %v671, %v599
    %v673 = vadd.f32 %v672, %v604
    %v674 = vadd.f32 %v673, %v607
    %v675 = vrot.slane %v674, 4
    %v676 = vadd.f32 %v674, %v675
    %v677 = vrot.slane %v676, 2
    %v678 = vadd.f32 %v676, %v677
    %v679 = vrot.slane %v678, 1
    %v680 = vadd.f32 %v678, %v679
    %v681 = vmul.f32 %v680, 0.001953125
    %v682 = vmul.f32 %v356, %v356
    %v683 = vmul.f32 %v359, %v359
    %v684 = vmul.f32 %v364, %v364
    %v685 = vmul.f32 %v367, %v367
    %v686 = vmul.f32 %v372, %v372
    %v687 = vmul.f32 %v375, %v375
    %v688 = vmul.f32 %v380, %v380
    %v689 = vmul.f32 %v383, %v383
    %v690 = vmul.f32 %v388, %v388
    %v691 = vmul.f32 %v391, %v391
    %v692 = vmul.f32 %v396, %v396
    %v693 = vmul.f32 %v399, %v399
    %v694 = vmul.f32 %v404, %v404
    %v695 = vmul.f32 %v407, %v407
    %v696 = vmul.f32 %v412, %v412
    %v697 = vmul.f32 %v415, %v415
    %v698 = vmul.f32 %v420, %v420
    %v699 = vmul.f32 %v423, %v423
    %v700 = vmul.f32 %v428, %v428
    %v701 = vmul.f32 %v431, %v431
    %v702 = vmul.f32 %v436, %v436
    %v703 = vmul.f32 %v439, %v439
    %v704 = vmul.f32 %v444, %v444
    %v705 = vmul.f32 %v447, %v447
    %v706 = vmul.f32 %v452, %v452
    %v707 = vmul.f32 %v455, %v455
    %v708 = vmul.f32 %v460, %v460
    %v709 = vmul.f32 %v463, %v463
    %v710 = vmul.f32 %v468, %v468
    %v711 = vmul.f32 %v471, %v471
    %v712 = vmul.f32 %v476, %v476
    %v713 = vmul.f32 %v479, %v479
    %v714 = vmul.f32 %v484, %v484
    %v715 = vmul.f32 %v487, %v487
    %v716 = vmul.f32 %v492, %v492
    %v717 = vmul.f32 %v495, %v495
    %v718 = vmul.f32 %v500, %v500
    %v719 = vmul.f32 %v503, %v503
    %v720 = vmul.f32 %v508, %v508
    %v721 = vmul.f32 %v511, %v511
    %v722 = vmul.f32 %v516, %v516
    %v723 = vmul.f32 %v519, %v519
    %v724 = vmul.f32 %v524, %v524
    %v725 = vmul.f32 %v527, %v527
    %v726 = vmul.f32 %v532, %v532
    %v727 = vmul.f32 %v535, %v535
    %v728 = vmul.f32 %v540, %v540
    %v729 = vmul.f32 %v543, %v543
    %v730 = vmul.f32 %v548, %v548
    %v731 = vmul.f32 %v551, %v551
    %v732 = vmul.f32 %v556, %v556
    %v733 = vmul.f32 %v559, %v559
    %v734 = vmul.f32 %v564, %v564
    %v735 = vmul.f32 %v567, %v567
    %v736 = vmul.f32 %v572, %v572
    %v737 = vmul.f32 %v575, %v575
    %v738 = vmul.f32 %v580, %v580
    %v739 = vmul.f32 %v583, %v583
    %v740 = vmul.f32 %v588, %v588
    %v741 = vmul.f32 %v591, %v591
    %v742 = vmul.f32 %v596, %v596
    %v743 = vmul.f32 %v599, %v599
    %v744 = vmul.f32 %v604, %v604
    %v745 = vmul.f32 %v607, %v607
    %v746 = vadd.f32 %v682, %v683
    %v747 = vadd.f32 %v746, %v684
    %v748 = vadd.f32 %v747, %v685
    %v749 = vadd.f32 %v748, %v686
    %v750 = vadd.f32 %v749, %v687
    %v751 = vadd.f32 %v750, %v688
    %v752 = vadd.f32 %v751, %v689
    %v753 = vadd.f32 %v752, %v690
    %v754 = vadd.f32 %v753, %v691
    %v755 = vadd.f32 %v754, %v692
    %v756 = vadd.f32 %v755, %v693
    %v757 = vadd.f32 %v756, %v694
    %v758 = vadd.f32 %v757, %v695
    %v759 = vadd.f32 %v758, %v696
    %v760 = vadd.f32 %v759, %v697
    %v761 = vadd.f32 %v760, %v698
    %v762 = vadd.f32 %v761, %v699
    %v763 = vadd.f32 %v762, %v700
    %v764 = vadd.f32 %v763, %v701
    %v765 = vadd.f32 %v764, %v702
    %v766 = vadd.f32 %v765, %v703
    %v767 = vadd.f32 %v766, %v704
    %v768 = vadd.f32 %v767, %v705
    %v769 = vadd.f32 %v768, %v706
    %v770 = vadd.f32 %v769, %v707
    %v771 = vadd.f32 %v770, %v708
    %v772 = vadd.f32 %v771, %v709
    %v773 = vadd.f32 %v772, %v710
    %v774 = vadd.f32 %v773, %v711
    %v775 = vadd.f32 %v774, %v712
    %v776 = vadd.f32 %v775, %v713
    %v777 = vadd.f32 %v776, %v714
    %v778 = vadd.f32 %v777, %v715
    %v779 = vadd.f32 %v778, %v716
    %v780 = vadd.f32 %v779, %v717
    %v781 = vadd.f32 %v780, %v718
    %v782 = vadd.f32 %v781, %v719
    %v783 = vadd.f32 %v782, %v720
    %v784 = vadd.f32 %v783, %v721
    %v785 = vadd.f32 %v784, %v722
    %v786 = vadd.f32 %v785, %v723
    %v787 = vadd.f32 %v786, %v724
    %v788 = vadd.f32 %v787, %v725
    %v789 = vadd.f32 %v788, %v726
    %v790 = vadd.f32 %v789, %v727
    %v791 = vadd.f32 %v790, %v728
    %v792 = vadd.f32 %v791, %v729
    %v793 = vadd.f32 %v792, %v730
    %v794 = vadd.f32 %v793, %v731
    %v795 = vadd.f32 %v794, %v732
    %v796 = vadd.f32 %v795, %v733
    %v797 = vadd.f32 %v796, %v734
    %v798 = vadd.f32 %v797, %v735
    %v799 = vadd.f32 %v798, %v736
    %v800 = vadd.f32 %v799, %v737
    %v801 = vadd.f32 %v800, %v738
    %v802 = vadd.f32 %v801, %v739
    %v803 = vadd.f32 %v802, %v740
    %v804 = vadd.f32 %v803, %v741
    %v805 = vadd.f32 %v804, %v742
    %v806 = vadd.f32 %v805, %v743
    %v807 = vadd.f32 %v806, %v744
    %v808 = vadd.f32 %v807, %v745
    %v809 = vrot.slane %v808, 4
    %v810 = vadd.f32 %v808, %v809
    %v811 = vrot.slane %v810, 2
    %v812 = vadd.f32 %v810, %v811
    %v813 = vrot.slane %v812, 1
    %v814 = vadd.f32 %v812, %v813
    %v815 = vmul.f32 %v814, 0.001953125
    %v816 = vmul.f32 %v681, %v681
    %v817 = vsub.f32 %v815, %v816
    %v818 = vmax.f32 %v817, 0.0
    %v819 = vadd.f32 %v818, 1e-05
    %v820 = vrsqrt.pop %v819
    %v821 = vmul.f32 %v610, %v820
    %v822 = vmul.f32 %v681, %v821
    %v823 = vsub.f32 %v611, %v822
    %v825 = vlaneseq
    %v826 = vshrl.u32 %v825, 7
    %v827 = vsub.s32 0, %v826
    %v828 = vrot.slane %v821, %v827
    %v830 = vmul.f32 %v356, %v828
    %v831 = vmul.f32 %v359, %v828
    %v832 = vmul.f32 %v364, %v828
    %v833 = vmul.f32 %v367, %v828
    %v834 = vmul.f32 %v372, %v828
    %v835 = vmul.f32 %v375, %v828
    %v836 = vmul.f32 %v380, %v828
    %v837 = vmul.f32 %v383, %v828
    %v838 = vmul.f32 %v388, %v828
    %v839 = vmul.f32 %v391, %v828
    %v840 = vmul.f32 %v396, %v828
    %v841 = vmul.f32 %v399, %v828
    %v842 = vmul.f32 %v404, %v828
    %v843 = vmul.f32 %v407, %v828
    %v844 = vmul.f32 %v412, %v828
    %v845 = vmul.f32 %v415, %v828
    %v846 = vmul.f32 %v420, %v828
    %v847 = vmul.f32 %v423, %v828
    %v848 = vmul.f32 %v428, %v828
    %v849 = vmul.f32 %v431, %v828
    %v850 = vmul.f32 %v436, %v828
    %v851 = vmul.f32 %v439, %v828
    %v852 = vmul.f32 %v444, %v828
    %v853 = vmul.f32 %v447, %v828
    %v854 = vmul.f32 %v452, %v828
    %v855 = vmul.f32 %v455, %v828
    %v856 = vmul.f32 %v460, %v828
    %v857 = vmul.f32 %v463, %v828
    %v858 = vmul.f32 %v468, %v828
    %v859 = vmul.f32 %v471, %v828
    %v860 = vmul.f32 %v476, %v828
    %v861 = vmul.f32 %v479, %v828
    %v862 = vmul.f32 %v484, %v828
    %v863 = vmul.f32 %v487, %v828
    %v864 = vmul.f32 %v492, %v828
    %v865 = vmul.f32 %v495, %v828
    %v866 = vmul.f32 %v500, %v828
    %v867 = vmul.f32 %v503, %v828
    %v868 = vmul.f32 %v508, %v828
    %v869 = vmul.f32 %v511, %v828
    %v870 = vmul.f32 %v516, %v828
    %v871 = vmul.f32 %v519, %v828
    %v872 = vmul.f32 %v524, %v828
    %v873 = vmul.f32 %v527, %v828
    %v874 = vmul.f32 %v532, %v828
    %v875 = vmul.f32 %v535, %v828
    %v876 = vmul.f32 %v540, %v828
    %v877 = vmul.f32 %v543, %v828
    %v878 = vmul.f32 %v548, %v828
    %v879 = vmul.f32 %v551, %v828
    %v880 = vmul.f32 %v556, %v828
    %v881 = vmul.f32 %v559, %v828
    %v882 = vmul.f32 %v564, %v828
    %v883 = vmul.f32 %v567, %v828
    %v884 = vmul.f32 %v572, %v828
    %v885 = vmul.f32 %v575, %v828
    %v886 = vmul.f32 %v580, %v828
    %v887 = vmul.f32 %v583, %v828
    %v888 = vmul.f32 %v588, %v828
    %v889 = vmul.f32 %v591, %v828
    %v890 = vmul.f32 %v596, %v828
    %v891 = vmul.f32 %v599, %v828
    %v892 = vmul.f32 %v604, %v828
    %v893 = vmul.f32 %v607, %v828
    %v895 = vlaneseq
    %v896 = vshrl.u32 %v895, 7
    %v897 = vsub.s32 0, %v896
    %v898 = vrot.slane %v823, %v897
    %v900 = vadd.f32 %v830, %v898
    %v901 = vadd.f32 %v831, %v898
    %v902 = vadd.f32 %v832, %v898
    %v903 = vadd.f32 %v833, %v898
    %v904 = vadd.f32 %v834, %v898
    %v905 = vadd.f32 %v835, %v898
    %v906 = vadd.f32 %v836, %v898
    %v907 = vadd.f32 %v837, %v898
    %v908 = vadd.f32 %v838, %v898
    %v909 = vadd.f32 %v839, %v898
    %v910 = vadd.f32 %v840, %v898
    %v911 = vadd.f32 %v841, %v898
    %v912 = vadd.f32 %v842, %v898
    %v913 = vadd.f32 %v843, %v898
    %v914 = vadd.f32 %v844, %v898
    %v915 = vadd.f32 %v845, %v898
    %v916 = vadd.f32 %v846, %v898
    %v917 = vadd.f32 %v847, %v898
    %v918 = vadd.f32 %v848, %v898
    %v919 = vadd.f32 %v849, %v898
    %v920 = vadd.f32 %v850, %v898
    %v921 = vadd.f32 %v851, %v898
    %v922 = vadd.f32 %v852, %v898
    %v923 = vadd.f32 %v853, %v898
    %v924 = vadd.f32 %v854, %v898
    %v925 = vadd.f32 %v855, %v898
    %v926 = vadd.f32 %v856, %v898
    %v927 = vadd.f32 %v857, %v898
    %v928 = vadd.f32 %v858, %v898
    %v929 = vadd.f32 %v859, %v898
    %v930 = vadd.f32 %v860, %v898
    %v931 = vadd.f32 %v861, %v898
    %v932 = vadd.f32 %v862, %v898
    %v933 = vadd.f32 %v863, %v898
    %v934 = vadd.f32 %v864, %v898
    %v935 = vadd.f32 %v865, %v898
    %v936 = vadd.f32 %v866, %v898
    %v937 = vadd.f32 %v867, %v898
    %v938 = vadd.f32 %v868, %v898
    %v939 = vadd.f32 %v869, %v898
    %v940 = vadd.f32 %v870, %v898
    %v941 = vadd.f32 %v871, %v898
    %v942 = vadd.f32 %v872, %v898
    %v943 = vadd.f32 %v873, %v898
    %v944 = vadd.f32 %v874, %v898
    %v945 = vadd.f32 %v875, %v898
    %v946 = vadd.f32 %v876, %v898
    %v947 = vadd.f32 %v877, %v898
    %v948 = vadd.f32 %v878, %v898
    %v949 = vadd.f32 %v879, %v898
    %v950 = vadd.f32 %v880, %v898
    %v951 = vadd.f32 %v881, %v898
    %v952 = vadd.f32 %v882, %v898
    %v953 = vadd.f32 %v883, %v898
    %v954 = vadd.f32 %v884, %v898
    %v955 = vadd.f32 %v885, %v898
    %v956 = vadd.f32 %v886, %v898
    %v957 = vadd.f32 %v887, %v898
    %v958 = vadd.f32 %v888, %v898
    %v959 = vadd.f32 %v889, %v898
    %v960 = vadd.f32 %v890, %v898
    %v961 = vadd.f32 %v891, %v898
    %v962 = vadd.f32 %v892, %v898
    %v963 = vadd.f32 %v893, %v898
    %v964 = vmax.f32 %v900, 0.0
    %v965 = vmax.f32 %v901, 0.0
    %v966 = vmax.f32 %v902, 0.0
    %v967 = vmax.f32 %v903, 0.0
    %v968 = vmax.f32 %v904, 0.0
    %v969 = vmax.f32 %v905, 0.0
    %v970 = vmax.f32 %v906, 0.0
    %v971 = vmax.f32 %v907, 0.0
    %v972 = vmax.f32 %v908, 0.0
    %v973 = vmax.f32 %v909, 0.0
    %v974 = vmax.f32 %v910, 0.0
    %v975 = vmax.f32 %v911, 0.0
    %v976 = vmax.f32 %v912, 0.0
    %v977 = vmax.f32 %v913, 0.0
    %v978 = vmax.f32 %v914, 0.0
    %v979 = vmax.f32 %v915, 0.0
    %v980 = vmax.f32 %v916, 0.0
    %v981 = vmax.f32 %v917, 0.0
    %v982 = vmax.f32 %v918, 0.0
    %v983 = vmax.f32 %v919, 0.0
    %v984 = vmax.f32 %v920, 0.0
    %v985 = vmax.f32 %v921, 0.0
    %v986 = vmax.f32 %v922, 0.0
    %v987 = vmax.f32 %v923, 0.0
    %v988 = vmax.f32 %v924, 0.0
    %v989 = vmax.f32 %v925, 0.0
    %v990 = vmax.f32 %v926, 0.0
    %v991 = vmax.f32 %v927, 0.0
    %v992 = vmax.f32 %v928, 0.0
    %v993 = vmax.f32 %v929, 0.0
    %v994 = vmax.f32 %v930, 0.0
    %v995 = vmax.f32 %v931, 0.0
    %v996 = vmax.f32 %v932, 0.0
    %v997 = vmax.f32 %v933, 0.0
    %v998 = vmax.f32 %v934, 0.0
    %v999 = vmax.f32 %v935, 0.0
    %v1000 = vmax.f32 %v936, 0.0
    %v1001 = vmax.f32 %v937, 0.0
    %v1002 = vmax.f32 %v938, 0.0
    %v1003 = vmax.f32 %v939, 0.0
    %v1004 = vmax.f32 %v940, 0.0
    %v1005 = vmax.f32 %v941, 0.0
    %v1006 = vmax.f32 %v942, 0.0
    %v1007 = vmax.f32 %v943, 0.0
    %v1008 = vmax.f32 %v944, 0.0
    %v1009 = vmax.f32 %v945, 0.0
    %v1010 = vmax.f32 %v946, 0.0
    %v1011 = vmax.f32 %v947, 0.0
    %v1012 = vmax.f32 %v948, 0.0
    %v1013 = vmax.f32 %v949, 0.0
    %v1014 = vmax.f32 %v950, 0.0
    %v1015 = vmax.f32 %v951, 0.0
    %v1016 = vmax.f32 %v952, 0.0
    %v1017 = vmax.f32 %v953, 0.0
    %v1018 = vmax.f32 %v954, 0.0
    %v1019 = vmax.f32 %v955, 0.0
    %v1020 = vmax.f32 %v956, 0.0
    %v1021 = vmax.f32 %v957, 0.0
    %v1022 = vmax.f32 %v958, 0.0
    %v1023 = vmax.f32 %v959, 0.0
    %v1024 = vmax.f32 %v960, 0.0
    %v1025 = vmax.f32 %v961, 0.0
    %v1026 = vmax.f32 %v962, 0.0
    %v1027 = vmax.f32 %v963, 0.0
    %1028 = vst [vmem:[#allocation2] sm:$0xff] 0.0
    %1029 = vst [vmem:[#allocation2 + $0x8] sm:$0xff] 0.0
    %1030 = vst [vmem:[#allocation2 + $0x10] sm:$0x3] 0.0
    %1031 = vst [vmem:[#allocation2 + $0x1b0] sm:$0xff] 0.0
    %1032 = vst [vmem:[#allocation2 + $0x1b8] sm:$0xff] 0.0
    %1033 = vst [vmem:[#allocation2 + $0x1c0] sm:$0x3] 0.0
    %s1034 = scalar_lea.vmem [#allocation2], 408
    %1035 = vst [vmem:[%s1034] sm:$0xff] 0.0
    %1036 = vst [vmem:[%s1034 + $0x8] sm:$0xff] 0.0
    %1037 = vst [vmem:[%s1034 + $0x10] sm:$0x3] 0.0
    %1038 = vst [vmem:[%s1034 + $0x1b0] sm:$0xff] 0.0
    %1039 = vst [vmem:[%s1034 + $0x1b8] sm:$0xff] 0.0
    %1040 = vst [vmem:[%s1034 + $0x1c0] sm:$0x3] 0.0
    %1041 = vst [vmem:[#allocation2] sm:$0x1] 0.0
    %1042 = vst [vmem:[#allocation2 + $0x18] sm:$0x1] 0.0
    %1043 = vst [vmem:[#allocation2 + $0x30] sm:$0x1] 0.0
    %1044 = vst [vmem:[#allocation2 + $0x48] sm:$0x1] 0.0
    %1045 = vst [vmem:[#allocation2 + $0x60] sm:$0x1] 0.0
    %1046 = vst [vmem:[#allocation2 + $0x78] sm:$0x1] 0.0
    %1047 = vst [vmem:[#allocation2 + $0x90] sm:$0x1] 0.0
    %1048 = vst [vmem:[#allocation2 + $0xa8] sm:$0x1] 0.0
    %1049 = vst [vmem:[#allocation2 + $0xc0] sm:$0x1] 0.0
    %1050 = vst [vmem:[#allocation2 + $0xd8] sm:$0x1] 0.0
    %1051 = vst [vmem:[#allocation2 + $0xf0] sm:$0x1] 0.0
    %1052 = vst [vmem:[#allocation2 + $0x108] sm:$0x1] 0.0
    %1053 = vst [vmem:[#allocation2 + $0x120] sm:$0x1] 0.0
    %1054 = vst [vmem:[#allocation2 + $0x138] sm:$0x1] 0.0
    %1055 = vst [vmem:[#allocation2 + $0x150] sm:$0x1] 0.0
    %1056 = vst [vmem:[#allocation2 + $0x168] sm:$0x1] 0.0
    %1057 = vst [vmem:[#allocation2 + $0x180] sm:$0x1] 0.0
    %1058 = vst [vmem:[#allocation2 + $0x198] sm:$0x1] 0.0
    %1059 = vst [vmem:[#allocation2 + $0x1b0] sm:$0x1] 0.0
    %1060 = vst [vmem:[#allocation2 + $0x1c8] sm:$0x1] 0.0
    %1061 = vst [vmem:[#allocation2 + $0x1e0] sm:$0x1] 0.0
    %1062 = vst [vmem:[#allocation2 + $0x1f8] sm:$0x1] 0.0
    %1063 = vst [vmem:[#allocation2 + $0x210] sm:$0x1] 0.0
    %1064 = vst [vmem:[#allocation2 + $0x228] sm:$0x1] 0.0
    %1065 = vst [vmem:[#allocation2 + $0x240] sm:$0x1] 0.0
    %1066 = vst [vmem:[#allocation2 + $0x258] sm:$0x1] 0.0
    %1067 = vst [vmem:[#allocation2 + $0x270] sm:$0x1] 0.0
    %1068 = vst [vmem:[#allocation2 + $0x288] sm:$0x1] 0.0
    %1069 = vst [vmem:[#allocation2 + $0x2a0] sm:$0x1] 0.0
    %1070 = vst [vmem:[#allocation2 + $0x2b8] sm:$0x1] 0.0
    %1071 = vst [vmem:[#allocation2 + $0x2d0] sm:$0x1] 0.0
    %1072 = vst [vmem:[#allocation2 + $0x2e8] sm:$0x1] 0.0
    %1073 = vst [vmem:[#allocation2 + $0x300] sm:$0x1] 0.0
    %1074 = vst [vmem:[#allocation2 + $0x318] sm:$0x1] 0.0
    %1075 = vst [vmem:[#allocation2 + $0x330] sm:$0x1] 0.0
    %1076 = vst [vmem:[#allocation2 + $0x348] sm:$0x1] 0.0
    %1077 = vst [vmem:[#allocation2 + $0x11] sm:$0x1] 0.0
    %1078 = vst [vmem:[#allocation2 + $0x29] sm:$0x1] 0.0
    %1079 = vst [vmem:[#allocation2 + $0x41] sm:$0x1] 0.0
    %1080 = vst [vmem:[#allocation2 + $0x59] sm:$0x1] 0.0
    %1081 = vst [vmem:[#allocation2 + $0x71] sm:$0x1] 0.0
    %1082 = vst [vmem:[#allocation2 + $0x89] sm:$0x1] 0.0
    %1083 = vst [vmem:[#allocation2 + $0xa1] sm:$0x1] 0.0
    %1084 = vst [vmem:[#allocation2 + $0xb9] sm:$0x1] 0.0
    %1085 = vst [vmem:[#allocation2 + $0xd1] sm:$0x1] 0.0
    %1086 = vst [vmem:[#allocation2 + $0xe9] sm:$0x1] 0.0
    %1087 = vst [vmem:[#allocation2 + $0x101] sm:$0x1] 0.0
    %1088 = vst [vmem:[#allocation2 + $0x119] sm:$0x1] 0.0
    %1089 = vst [vmem:[#allocation2 + $0x131] sm:$0x1] 0.0
    %1090 = vst [vmem:[#allocation2 + $0x149] sm:$0x1] 0.0
    %1091 = vst [vmem:[#allocation2 + $0x161] sm:$0x1] 0.0
    %1092 = vst [vmem:[#allocation2 + $0x179] sm:$0x1] 0.0
    %1093 = vst [vmem:[#allocation2 + $0x191] sm:$0x1] 0.0
    %1094 = vst [vmem:[#allocation2 + $0x1a9] sm:$0x1] 0.0
    %1095 = vst [vmem:[#allocation2 + $0x1c1] sm:$0x1] 0.0
    %1096 = vst [vmem:[#allocation2 + $0x1d9] sm:$0x1] 0.0
    %1097 = vst [vmem:[#allocation2 + $0x1f1] sm:$0x1] 0.0
    %1098 = vst [vmem:[#allocation2 + $0x209] sm:$0x1] 0.0
    %1099 = vst [vmem:[#allocation2 + $0x221] sm:$0x1] 0.0
    %1100 = vst [vmem:[#allocation2 + $0x239] sm:$0x1] 0.0
    %1101 = vst [vmem:[#allocation2 + $0x251] sm:$0x1] 0.0
    %1102 = vst [vmem:[#allocation2 + $0x269] sm:$0x1] 0.0
    %1103 = vst [vmem:[#allocation2 + $0x281] sm:$0x1] 0.0
    %1104 = vst [vmem:[#allocation2 + $0x299] sm:$0x1] 0.0
    %1105 = vst [vmem:[#allocation2 + $0x2b1] sm:$0x1] 0.0
    %1106 = vst [vmem:[#allocation2 + $0x2c9] sm:$0x1] 0.0
    %1107 = vst [vmem:[#allocation2 + $0x2e1] sm:$0x1] 0.0
    %1108 = vst [vmem:[#allocation2 + $0x2f9] sm:$0x1] 0.0
    %1109 = vst [vmem:[#allocation2 + $0x311] sm:$0x1] 0.0
    %1110 = vst [vmem:[#allocation2 + $0x329] sm:$0x1] 0.0
    %1111 = vst [vmem:[#allocation2 + $0x341] sm:$0x1] 0.0
    %1112 = vst [vmem:[#allocation2 + $0x359] sm:$0x1] 0.0
    %s1113 = scalar_lea.vmem [#allocation2], 24
    %1114 = vst [vmem:[%s1113 + $0x1] sm:$0xff] %v964
    %1115 = vst [vmem:[%s1113 + $0x9] sm:$0xff] %v965
    %1116 = vst [vmem:[%s1113 + $0x19] sm:$0xff] %v966
    %1117 = vst [vmem:[%s1113 + $0x21] sm:$0xff] %v967
    %1118 = vst [vmem:[%s1113 + $0x31] sm:$0xff] %v968
    %1119 = vst [vmem:[%s1113 + $0x39] sm:$0xff] %v969
    %1120 = vst [vmem:[%s1113 + $0x49] sm:$0xff] %v970
    %1121 = vst [vmem:[%s1113 + $0x51] sm:$0xff] %v971
    %1122 = vst [vmem:[%s1113 + $0x61] sm:$0xff] %v972
    %1123 = vst [vmem:[%s1113 + $0x69] sm:$0xff] %v973
    %1124 = vst [vmem:[%s1113 + $0x79] sm:$0xff] %v974
    %1125 = vst [vmem:[%s1113 + $0x81] sm:$0xff] %v975
    %1126 = vst [vmem:[%s1113 + $0x91] sm:$0xff] %v976
    %1127 = vst [vmem:[%s1113 + $0x99] sm:$0xff] %v977
    %1128 = vst [vmem:[%s1113 + $0xa9] sm:$0xff] %v978
    %1129 = vst [vmem:[%s1113 + $0xb1] sm:$0xff] %v979
    %1130 = vst [vmem:[%s1113 + $0xc1] sm:$0xff] %v980
    %1131 = vst [vmem:[%s1113 + $0xc9] sm:$0xff] %v981
    %1132 = vst [vmem:[%s1113 + $0xd9] sm:$0xff] %v982
    %1133 = vst [vmem:[%s1113 + $0xe1] sm:$0xff] %v983
    %1134 = vst [vmem:[%s1113 + $0xf1] sm:$0xff] %v984
    %1135 = vst [vmem:[%s1113 + $0xf9] sm:$0xff] %v985
    %1136 = vst [vmem:[%s1113 + $0x109] sm:$0xff] %v986
    %1137 = vst [vmem:[%s1113 + $0x111] sm:$0xff] %v987
    %1138 = vst [vmem:[%s1113 + $0x121] sm:$0xff] %v988
    %1139 = vst [vmem:[%s1113 + $0x129] sm:$0xff] %v989
    %1140 = vst [vmem:[%s1113 + $0x139] sm:$0xff] %v990
    %1141 = vst [vmem:[%s1113 + $0x141] sm:$0xff] %v991
    %1142 = vst [vmem:[%s1113 + $0x151] sm:$0xff] %v992
    %1143 = vst [vmem:[%s1113 + $0x159] sm:$0xff] %v993
    %1144 = vst [vmem:[%s1113 + $0x169] sm:$0xff] %v994
    %1145 = vst [vmem:[%s1113 + $0x171] sm:$0xff] %v995
    %1146 = vst [vmem:[%s1113 + $0x1b1] sm:$0xff] %v996
    %1147 = vst [vmem:[%s1113 + $0x1b9] sm:$0xff] %v997
    %1148 = vst [vmem:[%s1113 + $0x1c9] sm:$0xff] %v998
    %1149 = vst [vmem:[%s1113 + $0x1d1] sm:$0xff] %v999
    %1150 = vst [vmem:[%s1113 + $0x1e1] sm:$0xff] %v1000
    %1151 = vst [vmem:[%s1113 + $0x1e9] sm:$0xff] %v1001
    %1152 = vst [vmem:[%s1113 + $0x1f9] sm:$0xff] %v1002
    %1153 = vst [vmem:[%s1113 + $0x201] sm:$0xff] %v1003
    %1154 = vst [vmem:[%s1113 + $0x211] sm:$0xff] %v1004
    %1155 = vst [vmem:[%s1113 + $0x219] sm:$0xff] %v1005
    %1156 = vst [vmem:[%s1113 + $0x229] sm:$0xff] %v1006
    %1157 = vst [vmem:[%s1113 + $0x231] sm:$0xff] %v1007
    %1158 = vst [vmem:[%s1113 + $0x241] sm:$0xff] %v1008
    %1159 = vst [vmem:[%s1113 + $0x249] sm:$0xff] %v1009
    %1160 = vst [vmem:[%s1113 + $0x259] sm:$0xff] %v1010
    %1161 = vst [vmem:[%s1113 + $0x261] sm:$0xff] %v1011
    %1162 = vst [vmem:[%s1113 + $0x271] sm:$0xff] %v1012
    %1163 = vst [vmem:[%s1113 + $0x279] sm:$0xff] %v1013
    %1164 = vst [vmem:[%s1113 + $0x289] sm:$0xff] %v1014
    %1165 = vst [vmem:[%s1113 + $0x291] sm:$0xff] %v1015
    %1166 = vst [vmem:[%s1113 + $0x2a1] sm:$0xff] %v1016
    %1167 = vst [vmem:[%s1113 + $0x2a9] sm:$0xff] %v1017
    %1168 = vst [vmem:[%s1113 + $0x2b9] sm:$0xff] %v1018
    %1169 = vst [vmem:[%s1113 + $0x2c1] sm:$0xff] %v1019
    %1170 = vst [vmem:[%s1113 + $0x2d1] sm:$0xff] %v1020
    %1171 = vst [vmem:[%s1113 + $0x2d9] sm:$0xff] %v1021
    %1172 = vst [vmem:[%s1113 + $0x2e9] sm:$0xff] %v1022
    %1173 = vst [vmem:[%s1113 + $0x2f1] sm:$0xff] %v1023
    %1174 = vst [vmem:[%s1113 + $0x301] sm:$0xff] %v1024
    %1175 = vst [vmem:[%s1113 + $0x309] sm:$0xff] %v1025
    %1176 = vst [vmem:[%s1113 + $0x319] sm:$0xff] %v1026
    %1177 = vst [vmem:[%s1113 + $0x321] sm:$0xff] %v1027
    %v1178 = vld [vmem:[#allocation2] sm:$0xff]
    %v1179 = vld [vmem:[#allocation2 + $0x8] sm:$0xff]
    %v1180 = vld [vmem:[#allocation2 + $0x18] sm:$0xff]
    %v1181 = vld [vmem:[#allocation2 + $0x20] sm:$0xff]
    %v1182 = vld [vmem:[#allocation2 + $0x30] sm:$0xff]
    %v1183 = vld [vmem:[#allocation2 + $0x38] sm:$0xff]
    %v1184 = vld [vmem:[#allocation2 + $0x48] sm:$0xff]
    %v1185 = vld [vmem:[#allocation2 + $0x50] sm:$0xff]
    %v1186 = vld [vmem:[#allocation2 + $0x60] sm:$0xff]
    %v1187 = vld [vmem:[#allocation2 + $0x68] sm:$0xff]
    %v1188 = vld [vmem:[#allocation2 + $0x78] sm:$0xff]
    %v1189 = vld [vmem:[#allocation2 + $0x80] sm:$0xff]
    %v1190 = vld [vmem:[#allocation2 + $0x90] sm:$0xff]
    %v1191 = vld [vmem:[#allocation2 + $0x98] sm:$0xff]
    %v1192 = vld [vmem:[#allocation2 + $0xa8] sm:$0xff]
    %v1193 = vld [vmem:[#allocation2 + $0xb0] sm:$0xff]
    %v1194 = vld [vmem:[#allocation2 + $0xc0] sm:$0xff]
    %v1195 = vld [vmem:[#allocation2 + $0xc8] sm:$0xff]
    %v1196 = vld [vmem:[#allocation2 + $0xd8] sm:$0xff]
    %v1197 = vld [vmem:[#allocation2 + $0xe0] sm:$0xff]
    %v1198 = vld [vmem:[#allocation2 + $0xf0] sm:$0xff]
    %v1199 = vld [vmem:[#allocation2 + $0xf8] sm:$0xff]
    %v1200 = vld [vmem:[#allocation2 + $0x108] sm:$0xff]
    %v1201 = vld [vmem:[#allocation2 + $0x110] sm:$0xff]
    %v1202 = vld [vmem:[#allocation2 + $0x120] sm:$0xff]
    %v1203 = vld [vmem:[#allocation2 + $0x128] sm:$0xff]
    %v1204 = vld [vmem:[#allocation2 + $0x138] sm:$0xff]
    %v1205 = vld [vmem:[#allocation2 + $0x140] sm:$0xff]
    %v1206 = vld [vmem:[#allocation2 + $0x150] sm:$0xff]
    %v1207 = vld [vmem:[#allocation2 + $0x158] sm:$0xff]
    %v1208 = vld [vmem:[#allocation2 + $0x168] sm:$0xff]
    %v1209 = vld [vmem:[#allocation2 + $0x170] sm:$0xff]
    %v1210 = vld [vmem:[#allocation2 + $0x1b0] sm:$0xff]
    %v1211 = vld [vmem:[#allocation2 + $0x1b8] sm:$0xff]
    %v1212 = vld [vmem:[#allocation2 + $0x1c8] sm:$0xff]
    %v1213 = vld [vmem:[#allocation2 + $0x1d0] sm:$0xff]
    %v1214 = vld [vmem:[#allocation2 + $0x1e0] sm:$0xff]
    %v1215 = vld [vmem:[#allocation2 + $0x1e8] sm:$0xff]
    %v1216 = vld [vmem:[#allocation2 + $0x1f8] sm:$0xff]
    %v1217 = vld [vmem:[#allocation2 + $0x200] sm:$0xff]
    %v1218 = vld [vmem:[#allocation2 + $0x210] sm:$0xff]
    %v1219 = vld [vmem:[#allocation2 + $0x218] sm:$0xff]
    %v1220 = vld [vmem:[#allocation2 + $0x228] sm:$0xff]
    %v1221 = vld [vmem:[#allocation2 + $0x230] sm:$0xff]
    %v1222 = vld [vmem:[#allocation2 + $0x240] sm:$0xff]
    %v1223 = vld [vmem:[#allocation2 + $0x248] sm:$0xff]
    %v1224 = vld [vmem:[#allocation2 + $0x258] sm:$0xff]
    %v1225 = vld [vmem:[#allocation2 + $0x260] sm:$0xff]
    %v1226 = vld [vmem:[#allocation2 + $0x270] sm:$0xff]
    %v1227 = vld [vmem:[#allocation2 + $0x278] sm:$0xff]
    %v1228 = vld [vmem:[#allocation2 + $0x288] sm:$0xff]
    %v1229 = vld [vmem:[#allocation2 + $0x290] sm:$0xff]
    %v1230 = vld [vmem:[#allocation2 + $0x2a0] sm:$0xff]
    %v1231 = vld [vmem:[#allocation2 + $0x2a8] sm:$0xff]
    %v1232 = vld [vmem:[#allocation2 + $0x2b8] sm:$0xff]
    %v1233 = vld [vmem:[#allocation2 + $0x2c0] sm:$0xff]
    %v1234 = vld [vmem:[#allocation2 + $0x2d0] sm:$0xff]
    %v1235 = vld [vmem:[#allocation2 + $0x2d8] sm:$0xff]
    %v1236 = vld [vmem:[#allocation2 + $0x2e8] sm:$0xff]
    %v1237 = vld [vmem:[#allocation2 + $0x2f0] sm:$0xff]
    %v1238 = vld [vmem:[#allocation2 + $0x300] sm:$0xff]
    %v1239 = vld [vmem:[#allocation2 + $0x308] sm:$0xff]
    %v1240 = vld [vmem:[#allocation2 + $0x318] sm:$0xff]
    %v1241 = vld [vmem:[#allocation2 + $0x320] sm:$0xff]
    %v1242 = vld [vmem:[#allocation2 + $0x1] sm:$0xff]
    %v1243 = vld [vmem:[#allocation2 + $0x9] sm:$0xff]
    %v1244 = vld [vmem:[#allocation2 + $0x19] sm:$0xff]
    %v1245 = vld [vmem:[#allocation2 + $0x21] sm:$0xff]
    %v1246 = vld [vmem:[#allocation2 + $0x31] sm:$0xff]
    %v1247 = vld [vmem:[#allocation2 + $0x39] sm:$0xff]
    %v1248 = vld [vmem:[#allocation2 + $0x49] sm:$0xff]
    %v1249 = vld [vmem:[#allocation2 + $0x51] sm:$0xff]
    %v1250 = vld [vmem:[#allocation2 + $0x61] sm:$0xff]
    %v1251 = vld [vmem:[#allocation2 + $0x69] sm:$0xff]
    %v1252 = vld [vmem:[#allocation2 + $0x79] sm:$0xff]
    %v1253 = vld [vmem:[#allocation2 + $0x81] sm:$0xff]
    %v1254 = vld [vmem:[#allocation2 + $0x91] sm:$0xff]
    %v1255 = vld [vmem:[#allocation2 + $0x99] sm:$0xff]
    %v1256 = vld [vmem:[#allocation2 + $0xa9] sm:$0xff]
    %v1257 = vld [vmem:[#allocation2 + $0xb1] sm:$0xff]
    %v1258 = vld [vmem:[#allocation2 + $0xc1] sm:$0xff]
    %v1259 = vld [vmem:[#allocation2 + $0xc9] sm:$0xff]
    %v1260 = vld [vmem:[#allocation2 + $0xd9] sm:$0xff]
    %v1261 = vld [vmem:[#allocation2 + $0xe1] sm:$0xff]
    %v1262 = vld [vmem:[#allocation2 + $0xf1] sm:$0xff]
    %v1263 = vld [vmem:[#allocation2 + $0xf9] sm:$0xff]
    %v1264 = vld [vmem:[#allocation2 + $0x109] sm:$0xff]
    %v1265 = vld [vmem:[#allocation2 + $0x111] sm:$0xff]
    %v1266 = vld [vmem:[#allocation2 + $0x121] sm:$0xff]
    %v1267 = vld [vmem:[#allocation2 + $0x129] sm:$0xff]
    %v1268 = vld [vmem:[#allocation2 + $0x139] sm:$0xff]
    %v1269 = vld [vmem:[#allocation2 + $0x141] sm:$0xff]
    %v1270 = vld [vmem:[#allocation2 + $0x151] sm:$0xff]
    %v1271 = vld [vmem:[#allocation2 + $0x159] sm:$0xff]
    %v1272 = vld [vmem:[#allocation2 + $0x169] sm:$0xff]
    %v1273 = vld [vmem:[#allocation2 + $0x171] sm:$0xff]
    %v1274 = vld [vmem:[#allocation2 + $0x1b1] sm:$0xff]
    %v1275 = vld [vmem:[#allocation2 + $0x1b9] sm:$0xff]
    %v1276 = vld [vmem:[#allocation2 + $0x1c9] sm:$0xff]
    %v1277 = vld [vmem:[#allocation2 + $0x1d1] sm:$0xff]
    %v1278 = vld [vmem:[#allocation2 + $0x1e1] sm:$0xff]
    %v1279 = vld [vmem:[#allocation2 + $0x1e9] sm:$0xff]
    %v1280 = vld [vmem:[#allocation2 + $0x1f9] sm:$0xff]
    %v1281 = vld [vmem:[#allocation2 + $0x201] sm:$0xff]
    %v1282 = vld [vmem:[#allocation2 + $0x211] sm:$0xff]
    %v1283 = vld [vmem:[#allocation2 + $0x219] sm:$0xff]
    %v1284 = vld [vmem:[#allocation2 + $0x229] sm:$0xff]
    %v1285 = vld [vmem:[#allocation2 + $0x231] sm:$0xff]
    %v1286 = vld [vmem:[#allocation2 + $0x241] sm:$0xff]
    %v1287 = vld [vmem:[#allocation2 + $0x249] sm:$0xff]
    %v1288 = vld [vmem:[#allocation2 + $0x259] sm:$0xff]
    %v1289 = vld [vmem:[#allocation2 + $0x261] sm:$0xff]
    %v1290 = vld [vmem:[#allocation2 + $0x271] sm:$0xff]
    %v1291 = vld [vmem:[#allocation2 + $0x279] sm:$0xff]
    %v1292 = vld [vmem:[#allocation2 + $0x289] sm:$0xff]
    %v1293 = vld [vmem:[#allocation2 + $0x291] sm:$0xff]
    %v1294 = vld [vmem:[#allocation2 + $0x2a1] sm:$0xff]
    %v1295 = vld [vmem:[#allocation2 + $0x2a9] sm:$0xff]
    %v1296 = vld [vmem:[#allocation2 + $0x2b9] sm:$0xff]
    %v1297 = vld [vmem:[#allocation2 + $0x2c1] sm:$0xff]
    %v1298 = vld [vmem:[#allocation2 + $0x2d1] sm:$0xff]
    %v1299 = vld [vmem:[#allocation2 + $0x2d9] sm:$0xff]
    %v1300 = vld [vmem:[#allocation2 + $0x2e9] sm:$0xff]
    %v1301 = vld [vmem:[#allocation2 + $0x2f1] sm:$0xff]
    %v1302 = vld [vmem:[#allocation2 + $0x301] sm:$0xff]
    %v1303 = vld [vmem:[#allocation2 + $0x309] sm:$0xff]
    %v1304 = vld [vmem:[#allocation2 + $0x319] sm:$0xff]
    %v1305 = vld [vmem:[#allocation2 + $0x321] sm:$0xff]
    %v1306 = vld [vmem:[#allocation2 + $0x2] sm:$0xff]
    %v1307 = vld [vmem:[#allocation2 + $0xa] sm:$0xff]
    %v1308 = vld [vmem:[#allocation2 + $0x1a] sm:$0xff]
    %v1309 = vld [vmem:[#allocation2 + $0x22] sm:$0xff]
    %v1310 = vld [vmem:[#allocation2 + $0x32] sm:$0xff]
    %v1311 = vld [vmem:[#allocation2 + $0x3a] sm:$0xff]
    %v1312 = vld [vmem:[#allocation2 + $0x4a] sm:$0xff]
    %v1313 = vld [vmem:[#allocation2 + $0x52] sm:$0xff]
    %v1314 = vld [vmem:[#allocation2 + $0x62] sm:$0xff]
    %v1315 = vld [vmem:[#allocation2 + $0x6a] sm:$0xff]
    %v1316 = vld [vmem:[#allocation2 + $0x7a] sm:$0xff]
    %v1317 = vld [vmem:[#allocation2 + $0x82] sm:$0xff]
    %v1318 = vld [vmem:[#allocation2 + $0x92] sm:$0xff]
    %v1319 = vld [vmem:[#allocation2 + $0x9a] sm:$0xff]
    %v1320 = vld [vmem:[#allocation2 + $0xaa] sm:$0xff]
    %v1321 = vld [vmem:[#allocation2 + $0xb2] sm:$0xff]
    %v1322 = vld [vmem:[#allocation2 + $0xc2] sm:$0xff]
    %v1323 = vld [vmem:[#allocation2 + $0xca] sm:$0xff]
    %v1324 = vld [vmem:[#allocation2 + $0xda] sm:$0xff]
    %v1325 = vld [vmem:[#allocation2 + $0xe2] sm:$0xff]
    %v1326 = vld [vmem:[#allocation2 + $0xf2] sm:$0xff]
    %v1327 = vld [vmem:[#allocation2 + $0xfa] sm:$0xff]
    %v1328 = vld [vmem:[#allocation2 + $0x10a] sm:$0xff]
    %v1329 = vld [vmem:[#allocation2 + $0x112] sm:$0xff]
    %v1330 = vld [vmem:[#allocation2 + $0x122] sm:$0xff]
    %v1331 = vld [vmem:[#allocation2 + $0x12a] sm:$0xff]
    %v1332 = vld [vmem:[#allocation2 + $0x13a] sm:$0xff]
    %v1333 = vld [vmem:[#allocation2 + $0x142] sm:$0xff]
    %v1334 = vld [vmem:[#allocation2 + $0x152] sm:$0xff]
    %v1335 = vld [vmem:[#allocation2 + $0x15a] sm:$0xff]
    %v1336 = vld [vmem:[#allocation2 + $0x16a] sm:$0xff]
    %v1337 = vld [vmem:[#allocation2 + $0x172] sm:$0xff]
    %v1338 = vld [vmem:[#allocation2 + $0x1b2] sm:$0xff]
    %v1339 = vld [vmem:[#allocation2 + $0x1ba] sm:$0xff]
    %v1340 = vld [vmem:[#allocation2 + $0x1ca] sm:$0xff]
    %v1341 = vld [vmem:[#allocation2 + $0x1d2] sm:$0xff]
    %v1342 = vld [vmem:[#allocation2 + $0x1e2] sm:$0xff]
    %v1343 = vld [vmem:[#allocation2 + $0x1ea] sm:$0xff]
    %v1344 = vld [vmem:[#allocation2 + $0x1fa] sm:$0xff]
    %v1345 = vld [vmem:[#allocation2 + $0x202] sm:$0xff]
    %v1346 = vld [vmem:[#allocation2 + $0x212] sm:$0xff]
    %v1347 = vld [vmem:[#allocation2 + $0x21a] sm:$0xff]
    %v1348 = vld [vmem:[#allocation2 + $0x22a] sm:$0xff]
    %v1349 = vld [vmem:[#allocation2 + $0x232] sm:$0xff]
    %v1350 = vld [vmem:[#allocation2 + $0x242] sm:$0xff]
    %v1351 = vld [vmem:[#allocation2 + $0x24a] sm:$0xff]
    %v1352 = vld [vmem:[#allocation2 + $0x25a] sm:$0xff]
    %v1353 = vld [vmem:[#allocation2 + $0x262] sm:$0xff]
    %v1354 = vld [vmem:[#allocation2 + $0x272] sm:$0xff]
    %v1355 = vld [vmem:[#allocation2 + $0x27a] sm:$0xff]
    %v1356 = vld [vmem:[#allocation2 + $0x28a] sm:$0xff]
    %v1357 = vld [vmem:[#allocation2 + $0x292] sm:$0xff]
    %v1358 = vld [vmem:[#allocation2 + $0x2a2] sm:$0xff]
    %v1359 = vld [vmem:[#allocation2 + $0x2aa] sm:$0xff]
    %v1360 = vld [vmem:[#allocation2 + $0x2ba] sm:$0xff]
    %v1361 = vld [vmem:[#allocation2 + $0x2c2] sm:$0xff]
    %v1362 = vld [vmem:[#allocation2 + $0x2d2] sm:$0xff]
    %v1363 = vld [vmem:[#allocation2 + $0x2da] sm:$0xff]
    %v1364 = vld [vmem:[#allocation2 + $0x2ea] sm:$0xff]
    %v1365 = vld [vmem:[#allocation2 + $0x2f2] sm:$0xff]
    %v1366 = vld [vmem:[#allocation2 + $0x302] sm:$0xff]
    %v1367 = vld [vmem:[#allocation2 + $0x30a] sm:$0xff]
    %v1368 = vld [vmem:[#allocation2 + $0x31a] sm:$0xff]
    %v1369 = vld [vmem:[#allocation2 + $0x322] sm:$0xff]
    %v1370 = vld [vmem:[%s1113] sm:$0xff]
    %v1371 = vld [vmem:[%s1113 + $0x8] sm:$0xff]
    %v1372 = vld [vmem:[%s1113 + $0x18] sm:$0xff]
    %v1373 = vld [vmem:[%s1113 + $0x20] sm:$0xff]
    %v1374 = vld [vmem:[%s1113 + $0x30] sm:$0xff]
    %v1375 = vld [vmem:[%s1113 + $0x38] sm:$0xff]
    %v1376 = vld [vmem:[%s1113 + $0x48] sm:$0xff]
    %v1377 = vld [vmem:[%s1113 + $0x50] sm:$0xff]
    %v1378 = vld [vmem:[%s1113 + $0x60] sm:$0xff]
    %v1379 = vld [vmem:[%s1113 + $0x68] sm:$0xff]
    %v1380 = vld [vmem:[%s1113 + $0x78] sm:$0xff]
    %v1381 = vld [vmem:[%s1113 + $0x80] sm:$0xff]
    %v1382 = vld [vmem:[%s1113 + $0x90] sm:$0xff]
    %v1383 = vld [vmem:[%s1113 + $0x98] sm:$0xff]
    %v1384 = vld [vmem:[%s1113 + $0xa8] sm:$0xff]
    %v1385 = vld [vmem:[%s1113 + $0xb0] sm:$0xff]
    %v1386 = vld [vmem:[%s1113 + $0xc0] sm:$0xff]
    %v1387 = vld [vmem:[%s1113 + $0xc8] sm:$0xff]
    %v1388 = vld [vmem:[%s1113 + $0xd8] sm:$0xff]
    %v1389 = vld [vmem:[%s1113 + $0xe0] sm:$0xff]
    %v1390 = vld [vmem:[%s1113 + $0xf0] sm:$0xff]
    %v1391 = vld [vmem:[%s1113 + $0xf8] sm:$0xff]
    %v1392 = vld [vmem:[%s1113 + $0x108] sm:$0xff]
    %v1393 = vld [vmem:[%s1113 + $0x110] sm:$0xff]
    %v1394 = vld [vmem:[%s1113 + $0x120] sm:$0xff]
    %v1395 = vld [vmem:[%s1113 + $0x128] sm:$0xff]
    %v1396 = vld [vmem:[%s1113 + $0x138] sm:$0xff]
    %v1397 = vld [vmem:[%s1113 + $0x140] sm:$0xff]
    %v1398 = vld [vmem:[%s1113 + $0x150] sm:$0xff]
    %v1399 = vld [vmem:[%s1113 + $0x158] sm:$0xff]
    %v1400 = vld [vmem:[%s1113 + $0x168] sm:$0xff]
    %v1401 = vld [vmem:[%s1113 + $0x170] sm:$0xff]
    %v1402 = vld [vmem:[%s1113 + $0x1b0] sm:$0xff]
    %v1403 = vld [vmem:[%s1113 + $0x1b8] sm:$0xff]
    %v1404 = vld [vmem:[%s1113 + $0x1c8] sm:$0xff]
    %v1405 = vld [vmem:[%s1113 + $0x1d0] sm:$0xff]
    %v1406 = vld [vmem:[%s1113 + $0x1e0] sm:$0xff]
    %v1407 = vld [vmem:[%s1113 + $0x1e8] sm:$0xff]
    %v1408 = vld [vmem:[%s1113 + $0x1f8] sm:$0xff]
    %v1409 = vld [vmem:[%s1113 + $0x200] sm:$0xff]
    %v1410 = vld [vmem:[%s1113 + $0x210] sm:$0xff]
    %v1411 = vld [vmem:[%s1113 + $0x218] sm:$0xff]
    %v1412 = vld [vmem:[%s1113 + $0x228] sm:$0xff]
    %v1413 = vld [vmem:[%s1113 + $0x230] sm:$0xff]
    %v1414 = vld [vmem:[%s1113 + $0x240] sm:$0xff]
    %v1415 = vld [vmem:[%s1113 + $0x248] sm:$0xff]
    %v1416 = vld [vmem:[%s1113 + $0x258] sm:$0xff]
    %v1417 = vld [vmem:[%s1113 + $0x260] sm:$0xff]
    %v1418 = vld [vmem:[%s1113 + $0x270] sm:$0xff]
    %v1419 = vld [vmem:[%s1113 + $0x278] sm:$0xff]
    %v1420 = vld [vmem:[%s1113 + $0x288] sm:$0xff]
    %v1421 = vld [vmem:[%s1113 + $0x290] sm:$0xff]
    %v1422 = vld [vmem:[%s1113 + $0x2a0] sm:$0xff]
    %v1423 = vld [vmem:[%s1113 + $0x2a8] sm:$0xff]
    %v1424 = vld [vmem:[%s1113 + $0x2b8] sm:$0xff]
    %v1425 = vld [vmem:[%s1113 + $0x2c0] sm:$0xff]
    %v1426 = vld [vmem:[%s1113 + $0x2d0] sm:$0xff]
    %v1427 = vld [vmem:[%s1113 + $0x2d8] sm:$0xff]
    %v1428 = vld [vmem:[%s1113 + $0x2e8] sm:$0xff]
    %v1429 = vld [vmem:[%s1113 + $0x2f0] sm:$0xff]
    %v1430 = vld [vmem:[%s1113 + $0x300] sm:$0xff]
    %v1431 = vld [vmem:[%s1113 + $0x308] sm:$0xff]
    %v1432 = vld [vmem:[%s1113 + $0x318] sm:$0xff]
    %v1433 = vld [vmem:[%s1113 + $0x320] sm:$0xff]
    %v1434 = vld [vmem:[%s1113 + $0x1] sm:$0xff]
    %v1435 = vld [vmem:[%s1113 + $0x9] sm:$0xff]
    %v1436 = vld [vmem:[%s1113 + $0x19] sm:$0xff]
    %v1437 = vld [vmem:[%s1113 + $0x21] sm:$0xff]
    %v1438 = vld [vmem:[%s1113 + $0x31] sm:$0xff]
    %v1439 = vld [vmem:[%s1113 + $0x39] sm:$0xff]
    %v1440 = vld [vmem:[%s1113 + $0x49] sm:$0xff]
    %v1441 = vld [vmem:[%s1113 + $0x51] sm:$0xff]
    %v1442 = vld [vmem:[%s1113 + $0x61] sm:$0xff]
    %v1443 = vld [vmem:[%s1113 + $0x69] sm:$0xff]
    %v1444 = vld [vmem:[%s1113 + $0x79] sm:$0xff]
    %v1445 = vld [vmem:[%s1113 + $0x81] sm:$0xff]
    %v1446 = vld [vmem:[%s1113 + $0x91] sm:$0xff]
    %v1447 = vld [vmem:[%s1113 + $0x99] sm:$0xff]
    %v1448 = vld [vmem:[%s1113 + $0xa9] sm:$0xff]
    %v1449 = vld [vmem:[%s1113 + $0xb1] sm:$0xff]
    %v1450 = vld [vmem:[%s1113 + $0xc1] sm:$0xff]
    %v1451 = vld [vmem:[%s1113 + $0xc9] sm:$0xff]
    %v1452 = vld [vmem:[%s1113 + $0xd9] sm:$0xff]
    %v1453 = vld [vmem:[%s1113 + $0xe1] sm:$0xff]
    %v1454 = vld [vmem:[%s1113 + $0xf1] sm:$0xff]
    %v1455 = vld [vmem:[%s1113 + $0xf9] sm:$0xff]
    %v1456 = vld [vmem:[%s1113 + $0x109] sm:$0xff]
    %v1457 = vld [vmem:[%s1113 + $0x111] sm:$0xff]
    %v1458 = vld [vmem:[%s1113 + $0x121] sm:$0xff]
    %v1459 = vld [vmem:[%s1113 + $0x129] sm:$0xff]
    %v1460 = vld [vmem:[%s1113 + $0x139] sm:$0xff]
    %v1461 = vld [vmem:[%s1113 + $0x141] sm:$0xff]
    %v1462 = vld [vmem:[%s1113 + $0x151] sm:$0xff]
    %v1463 = vld [vmem:[%s1113 + $0x159] sm:$0xff]
    %v1464 = vld [vmem:[%s1113 + $0x169] sm:$0xff]
    %v1465 = vld [vmem:[%s1113 + $0x171] sm:$0xff]
    %v1466 = vld [vmem:[%s1113 + $0x1b1] sm:$0xff]
    %v1467 = vld [vmem:[%s1113 + $0x1b9] sm:$0xff]
    %v1468 = vld [vmem:[%s1113 + $0x1c9] sm:$0xff]
    %v1469 = vld [vmem:[%s1113 + $0x1d1] sm:$0xff]
    %v1470 = vld [vmem:[%s1113 + $0x1e1] sm:$0xff]
    %v1471 = vld [vmem:[%s1113 + $0x1e9] sm:$0xff]
    %v1472 = vld [vmem:[%s1113 + $0x1f9] sm:$0xff]
    %v1473 = vld [vmem:[%s1113 + $0x201] sm:$0xff]
    %v1474 = vld [vmem:[%s1113 + $0x211] sm:$0xff]
    %v1475 = vld [vmem:[%s1113 + $0x219] sm:$0xff]
    %v1476 = vld [vmem:[%s1113 + $0x229] sm:$0xff]
    %v1477 = vld [vmem:[%s1113 + $0x231] sm:$0xff]
    %v1478 = vld [vmem:[%s1113 + $0x241] sm:$0xff]
    %v1479 = vld [vmem:[%s1113 + $0x249] sm:$0xff]
    %v1480 = vld [vmem:[%s1113 + $0x259] sm:$0xff]
    %v1481 = vld [vmem:[%s1113 + $0x261] sm:$0xff]
    %v1482 = vld [vmem:[%s1113 + $0x271] sm:$0xff]
    %v1483 = vld [vmem:[%s1113 + $0x279] sm:$0xff]
    %v1484 = vld [vmem:[%s1113 + $0x289] sm:$0xff]
    %v1485 = vld [vmem:[%s1113 + $0x291] sm:$0xff]
    %v1486 = vld [vmem:[%s1113 + $0x2a1] sm:$0xff]
    %v1487 = vld [vmem:[%s1113 + $0x2a9] sm:$0xff]
    %v1488 = vld [vmem:[%s1113 + $0x2b9] sm:$0xff]
    %v1489 = vld [vmem:[%s1113 + $0x2c1] sm:$0xff]
    %v1490 = vld [vmem:[%s1113 + $0x2d1] sm:$0xff]
    %v1491 = vld [vmem:[%s1113 + $0x2d9] sm:$0xff]
    %v1492 = vld [vmem:[%s1113 + $0x2e9] sm:$0xff]
    %v1493 = vld [vmem:[%s1113 + $0x2f1] sm:$0xff]
    %v1494 = vld [vmem:[%s1113 + $0x301] sm:$0xff]
    %v1495 = vld [vmem:[%s1113 + $0x309] sm:$0xff]
    %v1496 = vld [vmem:[%s1113 + $0x319] sm:$0xff]
    %v1497 = vld [vmem:[%s1113 + $0x321] sm:$0xff]
    %v1498 = vld [vmem:[%s1113 + $0x2] sm:$0xff]
    %v1499 = vld [vmem:[%s1113 + $0xa] sm:$0xff]
    %v1500 = vld [vmem:[%s1113 + $0x1a] sm:$0xff]
    %v1501 = vld [vmem:[%s1113 + $0x22] sm:$0xff]
    %v1502 = vld [vmem:[%s1113 + $0x32] sm:$0xff]
    %v1503 = vld [vmem:[%s1113 + $0x3a] sm:$0xff]
    %v1504 = vld [vmem:[%s1113 + $0x4a] sm:$0xff]
    %v1505 = vld [vmem:[%s1113 + $0x52] sm:$0xff]
    %v1506 = vld [vmem:[%s1113 + $0x62] sm:$0xff]
    %v1507 = vld [vmem:[%s1113 + $0x6a] sm:$0xff]
    %v1508 = vld [vmem:[%s1113 + $0x7a] sm:$0xff]
    %v1509 = vld [vmem:[%s1113 + $0x82] sm:$0xff]
    %v1510 = vld [vmem:[%s1113 + $0x92] sm:$0xff]
    %v1511 = vld [vmem:[%s1113 + $0x9a] sm:$0xff]
    %v1512 = vld [vmem:[%s1113 + $0xaa] sm:$0xff]
    %v1513 = vld [vmem:[%s1113 + $0xb2] sm:$0xff]
    %v1514 = vld [vmem:[%s1113 + $0xc2] sm:$0xff]
    %v1515 = vld [vmem:[%s1113 + $0xca] sm:$0xff]
    %v1516 = vld [vmem:[%s1113 + $0xda] sm:$0xff]
    %v1517 = vld [vmem:[%s1113 + $0xe2] sm:$0xff]
    %v1518 = vld [vmem:[%s1113 + $0xf2] sm:$0xff]
    %v1519 = vld [vmem:[%s1113 + $0xfa] sm:$0xff]
    %v1520 = vld [vmem:[%s1113 + $0x10a] sm:$0xff]
    %v1521 = vld [vmem:[%s1113 + $0x112] sm:$0xff]
    %v1522 = vld [vmem:[%s1113 + $0x122] sm:$0xff]
    %v1523 = vld [vmem:[%s1113 + $0x12a] sm:$0xff]
    %v1524 = vld [vmem:[%s1113 + $0x13a] sm:$0xff]
    %v1525 = vld [vmem:[%s1113 + $0x142] sm:$0xff]
    %v1526 = vld [vmem:[%s1113 + $0x152] sm:$0xff]
    %v1527 = vld [vmem:[%s1113 + $0x15a] sm:$0xff]
    %v1528 = vld [vmem:[%s1113 + $0x16a] sm:$0xff]
    %v1529 = vld [vmem:[%s1113 + $0x172] sm:$0xff]
    %v1530 = vld [vmem:[%s1113 + $0x1b2] sm:$0xff]
    %v1531 = vld [vmem:[%s1113 + $0x1ba] sm:$0xff]
    %v1532 = vld [vmem:[%s1113 + $0x1ca] sm:$0xff]
    %v1533 = vld [vmem:[%s1113 + $0x1d2] sm:$0xff]
    %v1534 = vld [vmem:[%s1113 + $0x1e2] sm:$0xff]
    %v1535 = vld [vmem:[%s1113 + $0x1ea] sm:$0xff]
    %v1536 = vld [vmem:[%s1113 + $0x1fa] sm:$0xff]
    %v1537 = vld [vmem:[%s1113 + $0x202] sm:$0xff]
    %v1538 = vld [vmem:[%s1113 + $0x212] sm:$0xff]
    %v1539 = vld [vmem:[%s1113 + $0x21a] sm:$0xff]
    %v1540 = vld [vmem:[%s1113 + $0x22a] sm:$0xff]
    %v1541 = vld [vmem:[%s1113 + $0x232] sm:$0xff]
    %v1542 = vld [vmem:[%s1113 + $0x242] sm:$0xff]
    %v1543 = vld [vmem:[%s1113 + $0x24a] sm:$0xff]
    %v1544 = vld [vmem:[%s1113 + $0x25a] sm:$0xff]
    %v1545 = vld [vmem:[%s1113 + $0x262] sm:$0xff]
    %v1546 = vld [vmem:[%s1113 + $0x272] sm:$0xff]
    %v1547 = vld [vmem:[%s1113 + $0x27a] sm:$0xff]
    %v1548 = vld [vmem:[%s1113 + $0x28a] sm:$0xff]
    %v1549 = vld [vmem:[%s1113 + $0x292] sm:$0xff]
    %v1550 = vld [vmem:[%s1113 + $0x2a2] sm:$0xff]
    %v1551 = vld [vmem:[%s1113 + $0x2aa] sm:$0xff]
    %v1552 = vld [vmem:[%s1113 + $0x2ba] sm:$0xff]
    %v1553 = vld [vmem:[%s1113 + $0x2c2] sm:$0xff]
    %v1554 = vld [vmem:[%s1113 + $0x2d2] sm:$0xff]
    %v1555 = vld [vmem:[%s1113 + $0x2da] sm:$0xff]
    %v1556 = vld [vmem:[%s1113 + $0x2ea] sm:$0xff]
    %v1557 = vld [vmem:[%s1113 + $0x2f2] sm:$0xff]
    %v1558 = vld [vmem:[%s1113 + $0x302] sm:$0xff]
    %v1559 = vld [vmem:[%s1113 + $0x30a] sm:$0xff]
    %v1560 = vld [vmem:[%s1113 + $0x31a] sm:$0xff]
    %v1561 = vld [vmem:[%s1113 + $0x322] sm:$0xff]
    %s1562 = scalar_lea.vmem [#allocation2], 48
    %v1563 = vld [vmem:[%s1562] sm:$0xff]
    %v1564 = vld [vmem:[%s1562 + $0x8] sm:$0xff]
    %v1565 = vld [vmem:[%s1562 + $0x18] sm:$0xff]
    %v1566 = vld [vmem:[%s1562 + $0x20] sm:$0xff]
    %v1567 = vld [vmem:[%s1562 + $0x30] sm:$0xff]
    %v1568 = vld [vmem:[%s1562 + $0x38] sm:$0xff]
    %v1569 = vld [vmem:[%s1562 + $0x48] sm:$0xff]
    %v1570 = vld [vmem:[%s1562 + $0x50] sm:$0xff]
    %v1571 = vld [vmem:[%s1562 + $0x60] sm:$0xff]
    %v1572 = vld [vmem:[%s1562 + $0x68] sm:$0xff]
    %v1573 = vld [vmem:[%s1562 + $0x78] sm:$0xff]
    %v1574 = vld [vmem:[%s1562 + $0x80] sm:$0xff]
    %v1575 = vld [vmem:[%s1562 + $0x90] sm:$0xff]
    %v1576 = vld [vmem:[%s1562 + $0x98] sm:$0xff]
    %v1577 = vld [vmem:[%s1562 + $0xa8] sm:$0xff]
    %v1578 = vld [vmem:[%s1562 + $0xb0] sm:$0xff]
    %v1579 = vld [vmem:[%s1562 + $0xc0] sm:$0xff]
    %v1580 = vld [vmem:[%s1562 + $0xc8] sm:$0xff]
    %v1581 = vld [vmem:[%s1562 + $0xd8] sm:$0xff]
    %v1582 = vld [vmem:[%s1562 + $0xe0] sm:$0xff]
    %v1583 = vld [vmem:[%s1562 + $0xf0] sm:$0xff]
    %v1584 = vld [vmem:[%s1562 + $0xf8] sm:$0xff]
    %v1585 = vld [vmem:[%s1562 + $0x108] sm:$0xff]
    %v1586 = vld [vmem:[%s1562 + $0x110] sm:$0xff]
    %v1587 = vld [vmem:[%s1562 + $0x120] sm:$0xff]
    %v1588 = vld [vmem:[%s1562 + $0x128] sm:$0xff]
    %v1589 = vld [vmem:[%s1562 + $0x138] sm:$0xff]
    %v1590 = vld [vmem:[%s1562 + $0x140] sm:$0xff]
    %v1591 = vld [vmem:[%s1562 + $0x150] sm:$0xff]
    %v1592 = vld [vmem:[%s1562 + $0x158] sm:$0xff]
    %v1593 = vld [vmem:[%s1562 + $0x168] sm:$0xff]
    %v1594 = vld [vmem:[%s1562 + $0x170] sm:$0xff]
    %v1595 = vld [vmem:[%s1562 + $0x1b0] sm:$0xff]
    %v1596 = vld [vmem:[%s1562 + $0x1b8] sm:$0xff]
    %v1597 = vld [vmem:[%s1562 + $0x1c8] sm:$0xff]
    %v1598 = vld [vmem:[%s1562 + $0x1d0] sm:$0xff]
    %v1599 = vld [vmem:[%s1562 + $0x1e0] sm:$0xff]
    %v1600 = vld [vmem:[%s1562 + $0x1e8] sm:$0xff]
    %v1601 = vld [vmem:[%s1562 + $0x1f8] sm:$0xff]
    %v1602 = vld [vmem:[%s1562 + $0x200] sm:$0xff]
    %v1603 = vld [vmem:[%s1562 + $0x210] sm:$0xff]
    %v1604 = vld [vmem:[%s1562 + $0x218] sm:$0xff]
    %v1605 = vld [vmem:[%s1562 + $0x228] sm:$0xff]
    %v1606 = vld [vmem:[%s1562 + $0x230] sm:$0xff]
    %v1607 = vld [vmem:[%s1562 + $0x240] sm:$0xff]
    %v1608 = vld [vmem:[%s1562 + $0x248] sm:$0xff]
    %v1609 = vld [vmem:[%s1562 + $0x258] sm:$0xff]
    %v1610 = vld [vmem:[%s1562 + $0x260] sm:$0xff]
    %v1611 = vld [vmem:[%s1562 + $0x270] sm:$0xff]
    %v1612 = vld [vmem:[%s1562 + $0x278] sm:$0xff]
    %v1613 = vld [vmem:[%s1562 + $0x288] sm:$0xff]
    %v1614 = vld [vmem:[%s1562 + $0x290] sm:$0xff]
    %v1615 = vld [vmem:[%s1562 + $0x2a0] sm:$0xff]
    %v1616 = vld [vmem:[%s1562 + $0x2a8] sm:$0xff]
    %v1617 = vld [vmem:[%s1562 + $0x2b8] sm:$0xff]
    %v1618 = vld [vmem:[%s1562 + $0x2c0] sm:$0xff]
    %v1619 = vld [vmem:[%s1562 + $0x2d0] sm:$0xff]
    %v1620 = vld [vmem:[%s1562 + $0x2d8] sm:$0xff]
    %v1621 = vld [vmem:[%s1562 + $0x2e8] sm:$0xff]
    %v1622 = vld [vmem:[%s1562 + $0x2f0] sm:$0xff]
    %v1623 = vld [vmem:[%s1562 + $0x300] sm:$0xff]
    %v1624 = vld [vmem:[%s1562 + $0x308] sm:$0xff]
    %v1625 = vld [vmem:[%s1562 + $0x318] sm:$0xff]
    %v1626 = vld [vmem:[%s1562 + $0x320] sm:$0xff]
    %v1627 = vld [vmem:[%s1562 + $0x1] sm:$0xff]
    %v1628 = vld [vmem:[%s1562 + $0x9] sm:$0xff]
    %v1629 = vld [vmem:[%s1562 + $0x19] sm:$0xff]
    %v1630 = vld [vmem:[%s1562 + $0x21] sm:$0xff]
    %v1631 = vld [vmem:[%s1562 + $0x31] sm:$0xff]
    %v1632 = vld [vmem:[%s1562 + $0x39] sm:$0xff]
    %v1633 = vld [vmem:[%s1562 + $0x49] sm:$0xff]
    %v1634 = vld [vmem:[%s1562 + $0x51] sm:$0xff]
    %v1635 = vld [vmem:[%s1562 + $0x61] sm:$0xff]
    %v1636 = vld [vmem:[%s1562 + $0x69] sm:$0xff]
    %v1637 = vld [vmem:[%s1562 + $0x79] sm:$0xff]
    %v1638 = vld [vmem:[%s1562 + $0x81] sm:$0xff]
    %v1639 = vld [vmem:[%s1562 + $0x91] sm:$0xff]
    %v1640 = vld [vmem:[%s1562 + $0x99] sm:$0xff]
    %v1641 = vld [vmem:[%s1562 + $0xa9] sm:$0xff]
    %v1642 = vld [vmem:[%s1562 + $0xb1] sm:$0xff]
    %v1643 = vld [vmem:[%s1562 + $0xc1] sm:$0xff]
    %v1644 = vld [vmem:[%s1562 + $0xc9] sm:$0xff]
    %v1645 = vld [vmem:[%s1562 + $0xd9] sm:$0xff]
    %v1646 = vld [vmem:[%s1562 + $0xe1] sm:$0xff]
    %v1647 = vld [vmem:[%s1562 + $0xf1] sm:$0xff]
    %v1648 = vld [vmem:[%s1562 + $0xf9] sm:$0xff]
    %v1649 = vld [vmem:[%s1562 + $0x109] sm:$0xff]
    %v1650 = vld [vmem:[%s1562 + $0x111] sm:$0xff]
    %v1651 = vld [vmem:[%s1562 + $0x121] sm:$0xff]
    %v1652 = vld [vmem:[%s1562 + $0x129] sm:$0xff]
    %v1653 = vld [vmem:[%s1562 + $0x139] sm:$0xff]
    %v1654 = vld [vmem:[%s1562 + $0x141] sm:$0xff]
    %v1655 = vld [vmem:[%s1562 + $0x151] sm:$0xff]
    %v1656 = vld [vmem:[%s1562 + $0x159] sm:$0xff]
    %v1657 = vld [vmem:[%s1562 + $0x169] sm:$0xff]
    %v1658 = vld [vmem:[%s1562 + $0x171] sm:$0xff]
    %v1659 = vld [vmem:[%s1562 + $0x1b1] sm:$0xff]
    %v1660 = vld [vmem:[%s1562 + $0x1b9] sm:$0xff]
    %v1661 = vld [vmem:[%s1562 + $0x1c9] sm:$0xff]
    %v1662 = vld [vmem:[%s1562 + $0x1d1] sm:$0xff]
    %v1663 = vld [vmem:[%s1562 + $0x1e1] sm:$0xff]
    %v1664 = vld [vmem:[%s1562 + $0x1e9] sm:$0xff]
    %v1665 = vld [vmem:[%s1562 + $0x1f9] sm:$0xff]
    %v1666 = vld [vmem:[%s1562 + $0x201] sm:$0xff]
    %v1667 = vld [vmem:[%s1562 + $0x211] sm:$0xff]
    %v1668 = vld [vmem:[%s1562 + $0x219] sm:$0xff]
    %v1669 = vld [vmem:[%s1562 + $0x229] sm:$0xff]
    %v1670 = vld [vmem:[%s1562 + $0x231] sm:$0xff]
    %v1671 = vld [vmem:[%s1562 + $0x241] sm:$0xff]
    %v1672 = vld [vmem:[%s1562 + $0x249] sm:$0xff]
    %v1673 = vld [vmem:[%s1562 + $0x259] sm:$0xff]
    %v1674 = vld [vmem:[%s1562 + $0x261] sm:$0xff]
    %v1675 = vld [vmem:[%s1562 + $0x271] sm:$0xff]
    %v1676 = vld [vmem:[%s1562 + $0x279] sm:$0xff]
    %v1677 = vld [vmem:[%s1562 + $0x289] sm:$0xff]
    %v1678 = vld [vmem:[%s1562 + $0x291] sm:$0xff]
    %v1679 = vld [vmem:[%s1562 + $0x2a1] sm:$0xff]
    %v1680 = vld [vmem:[%s1562 + $0x2a9] sm:$0xff]
    %v1681 = vld [vmem:[%s1562 + $0x2b9] sm:$0xff]
    %v1682 = vld [vmem:[%s1562 + $0x2c1] sm:$0xff]
    %v1683 = vld [vmem:[%s1562 + $0x2d1] sm:$0xff]
    %v1684 = vld [vmem:[%s1562 + $0x2d9] sm:$0xff]
    %v1685 = vld [vmem:[%s1562 + $0x2e9] sm:$0xff]
    %v1686 = vld [vmem:[%s1562 + $0x2f1] sm:$0xff]
    %v1687 = vld [vmem:[%s1562 + $0x301] sm:$0xff]
    %v1688 = vld [vmem:[%s1562 + $0x309] sm:$0xff]
    %v1689 = vld [vmem:[%s1562 + $0x319] sm:$0xff]
    %v1690 = vld [vmem:[%s1562 + $0x321] sm:$0xff]
    %v1691 = vld [vmem:[%s1562 + $0x2] sm:$0xff]
    %v1692 = vld [vmem:[%s1562 + $0xa] sm:$0xff]
    %v1693 = vld [vmem:[%s1562 + $0x1a] sm:$0xff]
    %v1694 = vld [vmem:[%s1562 + $0x22] sm:$0xff]
    %v1695 = vld [vmem:[%s1562 + $0x32] sm:$0xff]
    %v1696 = vld [vmem:[%s1562 + $0x3a] sm:$0xff]
    %v1697 = vld [vmem:[%s1562 + $0x4a] sm:$0xff]
    %v1698 = vld [vmem:[%s1562 + $0x52] sm:$0xff]
    %v1699 = vld [vmem:[%s1562 + $0x62] sm:$0xff]
    %v1700 = vld [vmem:[%s1562 + $0x6a] sm:$0xff]
    %v1701 = vld [vmem:[%s1562 + $0x7a] sm:$0xff]
    %v1702 = vld [vmem:[%s1562 + $0x82] sm:$0xff]
    %v1703 = vld [vmem:[%s1562 + $0x92] sm:$0xff]
    %v1704 = vld [vmem:[%s1562 + $0x9a] sm:$0xff]
    %v1705 = vld [vmem:[%s1562 + $0xaa] sm:$0xff]
    %v1706 = vld [vmem:[%s1562 + $0xb2] sm:$0xff]
    %v1707 = vld [vmem:[%s1562 + $0xc2] sm:$0xff]
    %v1708 = vld [vmem:[%s1562 + $0xca] sm:$0xff]
    %v1709 = vld [vmem:[%s1562 + $0xda] sm:$0xff]
    %v1710 = vld [vmem:[%s1562 + $0xe2] sm:$0xff]
    %v1711 = vld [vmem:[%s1562 + $0xf2] sm:$0xff]
    %v1712 = vld [vmem:[%s1562 + $0xfa] sm:$0xff]
    %v1713 = vld [vmem:[%s1562 + $0x10a] sm:$0xff]
    %v1714 = vld [vmem:[%s1562 + $0x112] sm:$0xff]
    %v1715 = vld [vmem:[%s1562 + $0x122] sm:$0xff]
    %v1716 = vld [vmem:[%s1562 + $0x12a] sm:$0xff]
    %v1717 = vld [vmem:[%s1562 + $0x13a] sm:$0xff]
    %v1718 = vld [vmem:[%s1562 + $0x142] sm:$0xff]
    %v1719 = vld [vmem:[%s1562 + $0x152] sm:$0xff]
    %v1720 = vld [vmem:[%s1562 + $0x15a] sm:$0xff]
    %v1721 = vld [vmem:[%s1562 + $0x16a] sm:$0xff]
    %v1722 = vld [vmem:[%s1562 + $0x172] sm:$0xff]
    %v1723 = vld [vmem:[%s1562 + $0x1b2] sm:$0xff]
    %v1724 = vld [vmem:[%s1562 + $0x1ba] sm:$0xff]
    %v1725 = vld [vmem:[%s1562 + $0x1ca] sm:$0xff]
    %v1726 = vld [vmem:[%s1562 + $0x1d2] sm:$0xff]
    %v1727 = vld [vmem:[%s1562 + $0x1e2] sm:$0xff]
    %v1728 = vld [vmem:[%s1562 + $0x1ea] sm:$0xff]
    %v1729 = vld [vmem:[%s1562 + $0x1fa] sm:$0xff]
    %v1730 = vld [vmem:[%s1562 + $0x202] sm:$0xff]
    %v1731 = vld [vmem:[%s1562 + $0x212] sm:$0xff]
    %v1732 = vld [vmem:[%s1562 + $0x21a] sm:$0xff]
    %v1733 = vld [vmem:[%s1562 + $0x22a] sm:$0xff]
    %v1734 = vld [vmem:[%s1562 + $0x232] sm:$0xff]
    %v1735 = vld [vmem:[%s1562 + $0x242] sm:$0xff]
    %v1736 = vld [vmem:[%s1562 + $0x24a] sm:$0xff]
    %v1737 = vld [vmem:[%s1562 + $0x25a] sm:$0xff]
    %v1738 = vld [vmem:[%s1562 + $0x262] sm:$0xff]
    %v1739 = vld [vmem:[%s1562 + $0x272] sm:$0xff]
    %v1740 = vld [vmem:[%s1562 + $0x27a] sm:$0xff]
    %v1741 = vld [vmem:[%s1562 + $0x28a] sm:$0xff]
    %v1742 = vld [vmem:[%s1562 + $0x292] sm:$0xff]
    %v1743 = vld [vmem:[%s1562 + $0x2a2] sm:$0xff]
    %v1744 = vld [vmem:[%s1562 + $0x2aa] sm:$0xff]
    %v1745 = vld [vmem:[%s1562 + $0x2ba] sm:$0xff]
    %v1746 = vld [vmem:[%s1562 + $0x2c2] sm:$0xff]
    %v1747 = vld [vmem:[%s1562 + $0x2d2] sm:$0xff]
    %v1748 = vld [vmem:[%s1562 + $0x2da] sm:$0xff]
    %v1749 = vld [vmem:[%s1562 + $0x2ea] sm:$0xff]
    %v1750 = vld [vmem:[%s1562 + $0x2f2] sm:$0xff]
    %v1751 = vld [vmem:[%s1562 + $0x302] sm:$0xff]
    %v1752 = vld [vmem:[%s1562 + $0x30a] sm:$0xff]
    %v1753 = vld [vmem:[%s1562 + $0x31a] sm:$0xff]
    %v1754 = vld [vmem:[%s1562 + $0x322] sm:$0xff]
    %v1755 = vpack.c.bf16 %v1179, %v1178
    %v1756 = vpack.c.bf16 %v1243, %v1242
    %v1757 = vpack.c.bf16 %v1307, %v1306
    %v1758 = vpack.c.bf16 %v1371, %v1370
    %v1759 = vpack.c.bf16 %v1435, %v1434
    %v1760 = vpack.c.bf16 %v1499, %v1498
    %v1761 = vpack.c.bf16 %v1564, %v1563
    %v1762 = vpack.c.bf16 %v1628, %v1627
    %v1763 = vpack.c.bf16 %v1692, %v1691
    %v1764 = vpack.c.bf16 %v1181, %v1180
    %v1765 = vpack.c.bf16 %v1245, %v1244
    %v1766 = vpack.c.bf16 %v1309, %v1308
    %v1767 = vpack.c.bf16 %v1373, %v1372
    %v1768 = vpack.c.bf16 %v1437, %v1436
    %v1769 = vpack.c.bf16 %v1501, %v1500
    %v1770 = vpack.c.bf16 %v1566, %v1565
    %v1771 = vpack.c.bf16 %v1630, %v1629
    %v1772 = vpack.c.bf16 %v1694, %v1693
    %v1773 = vpack.c.bf16 %v1183, %v1182
    %v1774 = vpack.c.bf16 %v1247, %v1246
    %v1775 = vpack.c.bf16 %v1311, %v1310
    %v1776 = vpack.c.bf16 %v1375, %v1374
    %v1777 = vpack.c.bf16 %v1439, %v1438
    %v1778 = vpack.c.bf16 %v1503, %v1502
    %v1779 = vpack.c.bf16 %v1568, %v1567
    %v1780 = vpack.c.bf16 %v1632, %v1631
    %v1781 = vpack.c.bf16 %v1696, %v1695
    %v1782 = vpack.c.bf16 %v1185, %v1184
    %v1783 = vpack.c.bf16 %v1249, %v1248
    %v1784 = vpack.c.bf16 %v1313, %v1312
    %v1785 = vpack.c.bf16 %v1377, %v1376
    %v1786 = vpack.c.bf16 %v1441, %v1440
    %v1787 = vpack.c.bf16 %v1505, %v1504
    %v1788 = vpack.c.bf16 %v1570, %v1569
    %v1789 = vpack.c.bf16 %v1634, %v1633
    %v1790 = vpack.c.bf16 %v1698, %v1697
    %v1791 = vpack.c.bf16 %v1187, %v1186
    %v1792 = vpack.c.bf16 %v1251, %v1250
    %v1793 = vpack.c.bf16 %v1315, %v1314
    %v1794 = vpack.c.bf16 %v1379, %v1378
    %v1795 = vpack.c.bf16 %v1443, %v1442
    %v1796 = vpack.c.bf16 %v1507, %v1506
    %v1797 = vpack.c.bf16 %v1572, %v1571
    %v1798 = vpack.c.bf16 %v1636, %v1635
    %v1799 = vpack.c.bf16 %v1700, %v1699
    %v1800 = vpack.c.bf16 %v1189, %v1188
    %v1801 = vpack.c.bf16 %v1253, %v1252
    %v1802 = vpack.c.bf16 %v1317, %v1316
    %v1803 = vpack.c.bf16 %v1381, %v1380
    %v1804 = vpack.c.bf16 %v1445, %v1444
    %v1805 = vpack.c.bf16 %v1509, %v1508
    %v1806 = vpack.c.bf16 %v1574, %v1573
    %v1807 = vpack.c.bf16 %v1638, %v1637
    %v1808 = vpack.c.bf16 %v1702, %v1701
    %v1809 = vpack.c.bf16 %v1191, %v1190
    %v1810 = vpack.c.bf16 %v1255, %v1254
    %v1811 = vpack.c.bf16 %v1319, %v1318
    %v1812 = vpack.c.bf16 %v1383, %v1382
    %v1813 = vpack.c.bf16 %v1447, %v1446
    %v1814 = vpack.c.bf16 %v1511, %v1510
    %v1815 = vpack.c.bf16 %v1576, %v1575
    %v1816 = vpack.c.bf16 %v1640, %v1639
    %v1817 = vpack.c.bf16 %v1704, %v1703
    %v1818 = vpack.c.bf16 %v1193, %v1192
    %v1819 = vpack.c.bf16 %v1257, %v1256
    %v1820 = vpack.c.bf16 %v1321, %v1320
    %v1821 = vpack.c.bf16 %v1385, %v1384
    %v1822 = vpack.c.bf16 %v1449, %v1448
    %v1823 = vpack.c.bf16 %v1513, %v1512
    %v1824 = vpack.c.bf16 %v1578, %v1577
    %v1825 = vpack.c.bf16 %v1642, %v1641
    %v1826 = vpack.c.bf16 %v1706, %v1705
    %v1827 = vpack.c.bf16 %v1195, %v1194
    %v1828 = vpack.c.bf16 %v1259, %v1258
    %v1829 = vpack.c.bf16 %v1323, %v1322
    %v1830 = vpack.c.bf16 %v1387, %v1386
    %v1831 = vpack.c.bf16 %v1451, %v1450
    %v1832 = vpack.c.bf16 %v1515, %v1514
    %v1833 = vpack.c.bf16 %v1580, %v1579
    %v1834 = vpack.c.bf16 %v1644, %v1643
    %v1835 = vpack.c.bf16 %v1708, %v1707
    %v1836 = vpack.c.bf16 %v1197, %v1196
    %v1837 = vpack.c.bf16 %v1261, %v1260
    %v1838 = vpack.c.bf16 %v1325, %v1324
    %v1839 = vpack.c.bf16 %v1389, %v1388
    %v1840 = vpack.c.bf16 %v1453, %v1452
    %v1841 = vpack.c.bf16 %v1517, %v1516
    %v1842 = vpack.c.bf16 %v1582, %v1581
    %v1843 = vpack.c.bf16 %v1646, %v1645
    %v1844 = vpack.c.bf16 %v1710, %v1709
    %v1845 = vpack.c.bf16 %v1199, %v1198
    %v1846 = vpack.c.bf16 %v1263, %v1262
    %v1847 = vpack.c.bf16 %v1327, %v1326
    %v1848 = vpack.c.bf16 %v1391, %v1390
    %v1849 = vpack.c.bf16 %v1455, %v1454
    %v1850 = vpack.c.bf16 %v1519, %v1518
    %v1851 = vpack.c.bf16 %v1584, %v1583
    %v1852 = vpack.c.bf16 %v1648, %v1647
    %v1853 = vpack.c.bf16 %v1712, %v1711
    %v1854 = vpack.c.bf16 %v1201, %v1200
    %v1855 = vpack.c.bf16 %v1265, %v1264
    %v1856 = vpack.c.bf16 %v1329, %v1328
    %v1857 = vpack.c.bf16 %v1393, %v1392
    %v1858 = vpack.c.bf16 %v1457, %v1456
    %v1859 = vpack.c.bf16 %v1521, %v1520
    %v1860 = vpack.c.bf16 %v1586, %v1585
    %v1861 = vpack.c.bf16 %v1650, %v1649
    %v1862 = vpack.c.bf16 %v1714, %v1713
    %v1863 = vpack.c.bf16 %v1203, %v1202
    %v1864 = vpack.c.bf16 %v1267, %v1266
    %v1865 = vpack.c.bf16 %v1331, %v1330
    %v1866 = vpack.c.bf16 %v1395, %v1394
    %v1867 = vpack.c.bf16 %v1459, %v1458
    %v1868 = vpack.c.bf16 %v1523, %v1522
    %v1869 = vpack.c.bf16 %v1588, %v1587
    %v1870 = vpack.c.bf16 %v1652, %v1651
    %v1871 = vpack.c.bf16 %v1716, %v1715
    %v1872 = vpack.c.bf16 %v1205, %v1204
    %v1873 = vpack.c.bf16 %v1269, %v1268
    %v1874 = vpack.c.bf16 %v1333, %v1332
    %v1875 = vpack.c.bf16 %v1397, %v1396
    %v1876 = vpack.c.bf16 %v1461, %v1460
    %v1877 = vpack.c.bf16 %v1525, %v1524
    %v1878 = vpack.c.bf16 %v1590, %v1589
    %v1879 = vpack.c.bf16 %v1654, %v1653
    %v1880 = vpack.c.bf16 %v1718, %v1717
    %v1881 = vpack.c.bf16 %v1207, %v1206
    %v1882 = vpack.c.bf16 %v1271, %v1270
    %v1883 = vpack.c.bf16 %v1335, %v1334
    %v1884 = vpack.c.bf16 %v1399, %v1398
    %v1885 = vpack.c.bf16 %v1463, %v1462
    %v1886 = vpack.c.bf16 %v1527, %v1526
    %v1887 = vpack.c.bf16 %v1592, %v1591
    %v1888 = vpack.c.bf16 %v1656, %v1655
    %v1889 = vpack.c.bf16 %v1720, %v1719
    %v1890 = vpack.c.bf16 %v1209, %v1208
    %v1891 = vpack.c.bf16 %v1273, %v1272
    %v1892 = vpack.c.bf16 %v1337, %v1336
    %v1893 = vpack.c.bf16 %v1401, %v1400
    %v1894 = vpack.c.bf16 %v1465, %v1464
    %v1895 = vpack.c.bf16 %v1529, %v1528
    %v1896 = vpack.c.bf16 %v1594, %v1593
    %v1897 = vpack.c.bf16 %v1658, %v1657
    %v1898 = vpack.c.bf16 %v1722, %v1721
    %v1899 = vpack.c.bf16 %v1211, %v1210
    %v1900 = vpack.c.bf16 %v1275, %v1274
    %v1901 = vpack.c.bf16 %v1339, %v1338
    %v1902 = vpack.c.bf16 %v1403, %v1402
    %v1903 = vpack.c.bf16 %v1467, %v1466
    %v1904 = vpack.c.bf16 %v1531, %v1530
    %v1905 = vpack.c.bf16 %v1596, %v1595
    %v1906 = vpack.c.bf16 %v1660, %v1659
    %v1907 = vpack.c.bf16 %v1724, %v1723
    %v1908 = vpack.c.bf16 %v1213, %v1212
    %v1909 = vpack.c.bf16 %v1277, %v1276
    %v1910 = vpack.c.bf16 %v1341, %v1340
    %v1911 = vpack.c.bf16 %v1405, %v1404
    %v1912 = vpack.c.bf16 %v1469, %v1468
    %v1913 = vpack.c.bf16 %v1533, %v1532
    %v1914 = vpack.c.bf16 %v1598, %v1597
    %v1915 = vpack.c.bf16 %v1662, %v1661
    %v1916 = vpack.c.bf16 %v1726, %v1725
    %v1917 = vpack.c.bf16 %v1215, %v1214
    %v1918 = vpack.c.bf16 %v1279, %v1278
    %v1919 = vpack.c.bf16 %v1343, %v1342
    %v1920 = vpack.c.bf16 %v1407, %v1406
    %v1921 = vpack.c.bf16 %v1471, %v1470
    %v1922 = vpack.c.bf16 %v1535, %v1534
    %v1923 = vpack.c.bf16 %v1600, %v1599
    %v1924 = vpack.c.bf16 %v1664, %v1663
    %v1925 = vpack.c.bf16 %v1728, %v1727
    %v1926 = vpack.c.bf16 %v1217, %v1216
    %v1927 = vpack.c.bf16 %v1281, %v1280
    %v1928 = vpack.c.bf16 %v1345, %v1344
    %v1929 = vpack.c.bf16 %v1409, %v1408
    %v1930 = vpack.c.bf16 %v1473, %v1472
    %v1931 = vpack.c.bf16 %v1537, %v1536
    %v1932 = vpack.c.bf16 %v1602, %v1601
    %v1933 = vpack.c.bf16 %v1666, %v1665
    %v1934 = vpack.c.bf16 %v1730, %v1729
    %v1935 = vpack.c.bf16 %v1219, %v1218
    %v1936 = vpack.c.bf16 %v1283, %v1282
    %v1937 = vpack.c.bf16 %v1347, %v1346
    %v1938 = vpack.c.bf16 %v1411, %v1410
    %v1939 = vpack.c.bf16 %v1475, %v1474
    %v1940 = vpack.c.bf16 %v1539, %v1538
    %v1941 = vpack.c.bf16 %v1604, %v1603
    %v1942 = vpack.c.bf16 %v1668, %v1667
    %v1943 = vpack.c.bf16 %v1732, %v1731
    %v1944 = vpack.c.bf16 %v1221, %v1220
    %v1945 = vpack.c.bf16 %v1285, %v1284
    %v1946 = vpack.c.bf16 %v1349, %v1348
    %v1947 = vpack.c.bf16 %v1413, %v1412
    %v1948 = vpack.c.bf16 %v1477, %v1476
    %v1949 = vpack.c.bf16 %v1541, %v1540
    %v1950 = vpack.c.bf16 %v1606, %v1605
    %v1951 = vpack.c.bf16 %v1670, %v1669
    %v1952 = vpack.c.bf16 %v1734, %v1733
    %v1953 = vpack.c.bf16 %v1223, %v1222
    %v1954 = vpack.c.bf16 %v1287, %v1286
    %v1955 = vpack.c.bf16 %v1351, %v1350
    %v1956 = vpack.c.bf16 %v1415, %v1414
    %v1957 = vpack.c.bf16 %v1479, %v1478
    %v1958 = vpack.c.bf16 %v1543, %v1542
    %v1959 = vpack.c.bf16 %v1608, %v1607
    %v1960 = vpack.c.bf16 %v1672, %v1671
    %v1961 = vpack.c.bf16 %v1736, %v1735
    %v1962 = vpack.c.bf16 %v1225, %v1224
    %v1963 = vpack.c.bf16 %v1289, %v1288
    %v1964 = vpack.c.bf16 %v1353, %v1352
    %v1965 = vpack.c.bf16 %v1417, %v1416
    %v1966 = vpack.c.bf16 %v1481, %v1480
    %v1967 = vpack.c.bf16 %v1545, %v1544
    %v1968 = vpack.c.bf16 %v1610, %v1609
    %v1969 = vpack.c.bf16 %v1674, %v1673
    %v1970 = vpack.c.bf16 %v1738, %v1737
    %v1971 = vpack.c.bf16 %v1227, %v1226
    %v1972 = vpack.c.bf16 %v1291, %v1290
    %v1973 = vpack.c.bf16 %v1355, %v1354
    %v1974 = vpack.c.bf16 %v1419, %v1418
    %v1975 = vpack.c.bf16 %v1483, %v1482
    %v1976 = vpack.c.bf16 %v1547, %v1546
    %v1977 = vpack.c.bf16 %v1612, %v1611
    %v1978 = vpack.c.bf16 %v1676, %v1675
    %v1979 = vpack.c.bf16 %v1740, %v1739
    %v1980 = vpack.c.bf16 %v1229, %v1228
    %v1981 = vpack.c.bf16 %v1293, %v1292
    %v1982 = vpack.c.bf16 %v1357, %v1356
    %v1983 = vpack.c.bf16 %v1421, %v1420
    %v1984 = vpack.c.bf16 %v1485, %v1484
    %v1985 = vpack.c.bf16 %v1549, %v1548
    %v1986 = vpack.c.bf16 %v1614, %v1613
    %v1987 = vpack.c.bf16 %v1678, %v1677
    %v1988 = vpack.c.bf16 %v1742, %v1741
    %v1989 = vpack.c.bf16 %v1231, %v1230
    %v1990 = vpack.c.bf16 %v1295, %v1294
    %v1991 = vpack.c.bf16 %v1359, %v1358
    %v1992 = vpack.c.bf16 %v1423, %v1422
    %v1993 = vpack.c.bf16 %v1487, %v1486
    %v1994 = vpack.c.bf16 %v1551, %v1550
    %v1995 = vpack.c.bf16 %v1616, %v1615
    %v1996 = vpack.c.bf16 %v1680, %v1679
    %v1997 = vpack.c.bf16 %v1744, %v1743
    %v1998 = vpack.c.bf16 %v1233, %v1232
    %v1999 = vpack.c.bf16 %v1297, %v1296
    %v2000 = vpack.c.bf16 %v1361, %v1360
    %v2001 = vpack.c.bf16 %v1425, %v1424
    %v2002 = vpack.c.bf16 %v1489, %v1488
    %v2003 = vpack.c.bf16 %v1553, %v1552
    %v2004 = vpack.c.bf16 %v1618, %v1617
    %v2005 = vpack.c.bf16 %v1682, %v1681
    %v2006 = vpack.c.bf16 %v1746, %v1745
    %v2007 = vpack.c.bf16 %v1235, %v1234
    %v2008 = vpack.c.bf16 %v1299, %v1298
    %v2009 = vpack.c.bf16 %v1363, %v1362
    %v2010 = vpack.c.bf16 %v1427, %v1426
    %v2011 = vpack.c.bf16 %v1491, %v1490
    %v2012 = vpack.c.bf16 %v1555, %v1554
    %v2013 = vpack.c.bf16 %v1620, %v1619
    %v2014 = vpack.c.bf16 %v1684, %v1683
    %v2015 = vpack.c.bf16 %v1748, %v1747
    %v2016 = vpack.c.bf16 %v1237, %v1236
    %v2017 = vpack.c.bf16 %v1301, %v1300
    %v2018 = vpack.c.bf16 %v1365, %v1364
    %v2019 = vpack.c.bf16 %v1429, %v1428
    %v2020 = vpack.c.bf16 %v1493, %v1492
    %v2021 = vpack.c.bf16 %v1557, %v1556
    %v2022 = vpack.c.bf16 %v1622, %v1621
    %v2023 = vpack.c.bf16 %v1686, %v1685
    %v2024 = vpack.c.bf16 %v1750, %v1749
    %v2025 = vpack.c.bf16 %v1239, %v1238
    %v2026 = vpack.c.bf16 %v1303, %v1302
    %v2027 = vpack.c.bf16 %v1367, %v1366
    %v2028 = vpack.c.bf16 %v1431, %v1430
    %v2029 = vpack.c.bf16 %v1495, %v1494
    %v2030 = vpack.c.bf16 %v1559, %v1558
    %v2031 = vpack.c.bf16 %v1624, %v1623
    %v2032 = vpack.c.bf16 %v1688, %v1687
    %v2033 = vpack.c.bf16 %v1752, %v1751
    %v2034 = vpack.c.bf16 %v1241, %v1240
    %v2035 = vpack.c.bf16 %v1305, %v1304
    %v2036 = vpack.c.bf16 %v1369, %v1368
    %v2037 = vpack.c.bf16 %v1433, %v1432
    %v2038 = vpack.c.bf16 %v1497, %v1496
    %v2039 = vpack.c.bf16 %v1561, %v1560
    %v2040 = vpack.c.bf16 %v1626, %v1625
    %v2041 = vpack.c.bf16 %v1690, %v1689
    %v2042 = vpack.c.bf16 %v1754, %v1753
    %v2043 = vld [vmem:[#allocation11] sm:$0xf]
    %v2044 = vld [vmem:[#allocation11 + $0x4] sm:$0xf]
    %v2045 = vld [vmem:[#allocation11 + $0x8] sm:$0xf]
    %v2046 = vld [vmem:[#allocation11 + $0xc] sm:$0xf]
    %v2047 = vld [vmem:[#allocation11 + $0x10] sm:$0xf]
    %v2048 = vld [vmem:[#allocation11 + $0x14] sm:$0xf]
    %v2049 = vld [vmem:[#allocation11 + $0x18] sm:$0xf]
    %v2050 = vld [vmem:[#allocation11 + $0x1c] sm:$0xf]
    %v2051 = vld [vmem:[#allocation11 + $0x20] sm:$0xf]
    %v2052 = vld [vmem:[#allocation11 + $0x24] sm:$0xf]
    %v2053 = vld [vmem:[#allocation11 + $0x28] sm:$0xf]
    %v2054 = vld [vmem:[#allocation11 + $0x2c] sm:$0xf]
    %v2055 = vld [vmem:[#allocation11 + $0x30] sm:$0xf]
    %v2056 = vld [vmem:[#allocation11 + $0x34] sm:$0xf]
    %v2057 = vld [vmem:[#allocation11 + $0x38] sm:$0xf]
    %v2058 = vld [vmem:[#allocation11 + $0x3c] sm:$0xf]
    %v2059 = vld [vmem:[#allocation11 + $0x40] sm:$0xf]
    %v2060 = vld [vmem:[#allocation11 + $0x44] sm:$0xf]
    %v2061 = vld [vmem:[#allocation11 + $0x48] sm:$0xf]
    %v2062 = vld [vmem:[#allocation11 + $0x4c] sm:$0xf]
    %v2063 = vld [vmem:[#allocation11 + $0x50] sm:$0xf]
    %v2064 = vld [vmem:[#allocation11 + $0x54] sm:$0xf]
    %v2065 = vld [vmem:[#allocation11 + $0x58] sm:$0xf]
    %v2066 = vld [vmem:[#allocation11 + $0x5c] sm:$0xf]
    %v2067 = vld [vmem:[#allocation11 + $0x60] sm:$0xf]
    %v2068 = vld [vmem:[#allocation11 + $0x64] sm:$0xf]
    %v2069 = vld [vmem:[#allocation11 + $0x68] sm:$0xf]
    %v2070 = vld [vmem:[#allocation11 + $0x6c] sm:$0xf]
    %v2071 = vld [vmem:[#allocation11 + $0x70] sm:$0xf]
    %v2072 = vld [vmem:[#allocation11 + $0x74] sm:$0xf]
    %v2073 = vld [vmem:[#allocation11 + $0x78] sm:$0xf]
    %v2074 = vld [vmem:[#allocation11 + $0x7c] sm:$0xf]
    %v2075 = vld [vmem:[#allocation11 + $0x80] sm:$0xf]
    %v2076 = vld [vmem:[#allocation11 + $0x84] sm:$0xf]
    %v2077 = vld [vmem:[#allocation11 + $0x88] sm:$0xf]
    %v2078 = vld [vmem:[#allocation11 + $0x8c] sm:$0xf]
    %v2079 = vld [vmem:[#allocation11 + $0x90] sm:$0xf]
    %v2080 = vld [vmem:[#allocation11 + $0x94] sm:$0xf]
    %v2081 = vld [vmem:[#allocation11 + $0x98] sm:$0xf]
    %v2082 = vld [vmem:[#allocation11 + $0x9c] sm:$0xf]
    %v2083 = vld [vmem:[#allocation11 + $0xa0] sm:$0xf]
    %v2084 = vld [vmem:[#allocation11 + $0xa4] sm:$0xf]
    %v2085 = vld [vmem:[#allocation11 + $0xa8] sm:$0xf]
    %v2086 = vld [vmem:[#allocation11 + $0xac] sm:$0xf]
    %v2087 = vld [vmem:[#allocation11 + $0xb0] sm:$0xf]
    %v2088 = vld [vmem:[#allocation11 + $0xb4] sm:$0xf]
    %v2089 = vld [vmem:[#allocation11 + $0xb8] sm:$0xf]
    %v2090 = vld [vmem:[#allocation11 + $0xbc] sm:$0xf]
    %v2091 = vld [vmem:[#allocation11 + $0xc0] sm:$0xf]
    %v2092 = vld [vmem:[#allocation11 + $0xc4] sm:$0xf]
    %v2093 = vld [vmem:[#allocation11 + $0xc8] sm:$0xf]
    %v2094 = vld [vmem:[#allocation11 + $0xcc] sm:$0xf]
    %v2095 = vld [vmem:[#allocation11 + $0xd0] sm:$0xf]
    %v2096 = vld [vmem:[#allocation11 + $0xd4] sm:$0xf]
    %v2097 = vld [vmem:[#allocation11 + $0xd8] sm:$0xf]
    %v2098 = vld [vmem:[#allocation11 + $0xdc] sm:$0xf]
    %v2099 = vld [vmem:[#allocation11 + $0xe0] sm:$0xf]
    %v2100 = vld [vmem:[#allocation11 + $0xe4] sm:$0xf]
    %v2101 = vld [vmem:[#allocation11 + $0xe8] sm:$0xf]
    %v2102 = vld [vmem:[#allocation11 + $0xec] sm:$0xf]
    %v2103 = vld [vmem:[#allocation11 + $0xf0] sm:$0xf]
    %v2104 = vld [vmem:[#allocation11 + $0xf4] sm:$0xf]
    %v2105 = vld [vmem:[#allocation11 + $0xf8] sm:$0xf]
    %v2106 = vld [vmem:[#allocation11 + $0xfc] sm:$0xf]
    %v2107 = vld [vmem:[#allocation11 + $0x100] sm:$0xf]
    %v2108 = vld [vmem:[#allocation11 + $0x104] sm:$0xf]
    %v2109 = vld [vmem:[#allocation11 + $0x108] sm:$0xf]
    %v2110 = vld [vmem:[#allocation11 + $0x10c] sm:$0xf]
    %v2111 = vld [vmem:[#allocation11 + $0x110] sm:$0xf]
    %v2112 = vld [vmem:[#allocation11 + $0x114] sm:$0xf]
    %v2113 = vld [vmem:[#allocation11 + $0x118] sm:$0xf]
    %v2114 = vld [vmem:[#allocation11 + $0x11c] sm:$0xf]
    %v2115 = vld [vmem:[#allocation11 + $0x120] sm:$0xf]
    %v2116 = vld [vmem:[#allocation11 + $0x124] sm:$0xf]
    %v2117 = vld [vmem:[#allocation11 + $0x128] sm:$0xf]
    %v2118 = vld [vmem:[#allocation11 + $0x12c] sm:$0xf]
    %v2119 = vld [vmem:[#allocation11 + $0x130] sm:$0xf]
    %v2120 = vld [vmem:[#allocation11 + $0x134] sm:$0xf]
    %v2121 = vld [vmem:[#allocation11 + $0x138] sm:$0xf]
    %v2122 = vld [vmem:[#allocation11 + $0x13c] sm:$0xf]
    %v2123 = vld [vmem:[#allocation11 + $0x140] sm:$0xf]
    %v2124 = vld [vmem:[#allocation11 + $0x144] sm:$0xf]
    %v2125 = vld [vmem:[#allocation11 + $0x148] sm:$0xf]
    %v2126 = vld [vmem:[#allocation11 + $0x14c] sm:$0xf]
    %v2127 = vld [vmem:[#allocation11 + $0x150] sm:$0xf]
    %v2128 = vld [vmem:[#allocation11 + $0x154] sm:$0xf]
    %v2129 = vld [vmem:[#allocation11 + $0x158] sm:$0xf]
    %v2130 = vld [vmem:[#allocation11 + $0x15c] sm:$0xf]
    %v2131 = vld [vmem:[#allocation11 + $0x160] sm:$0xf]
    %v2132 = vld [vmem:[#allocation11 + $0x164] sm:$0xf]
    %v2133 = vld [vmem:[#allocation11 + $0x168] sm:$0xf]
    %v2134 = vld [vmem:[#allocation11 + $0x16c] sm:$0xf]
    %v2135 = vld [vmem:[#allocation11 + $0x170] sm:$0xf]
    %v2136 = vld [vmem:[#allocation11 + $0x174] sm:$0xf]
    %v2137 = vld [vmem:[#allocation11 + $0x178] sm:$0xf]
    %v2138 = vld [vmem:[#allocation11 + $0x17c] sm:$0xf]
    %v2139 = vld [vmem:[#allocation11 + $0x180] sm:$0xf]
    %v2140 = vld [vmem:[#allocation11 + $0x184] sm:$0xf]
    %v2141 = vld [vmem:[#allocation11 + $0x188] sm:$0xf]
    %v2142 = vld [vmem:[#allocation11 + $0x18c] sm:$0xf]
    %v2143 = vld [vmem:[#allocation11 + $0x190] sm:$0xf]
    %v2144 = vld [vmem:[#allocation11 + $0x194] sm:$0xf]
    %v2145 = vld [vmem:[#allocation11 + $0x198] sm:$0xf]
    %v2146 = vld [vmem:[#allocation11 + $0x19c] sm:$0xf]
    %v2147 = vld [vmem:[#allocation11 + $0x1a0] sm:$0xf]
    %v2148 = vld [vmem:[#allocation11 + $0x1a4] sm:$0xf]
    %v2149 = vld [vmem:[#allocation11 + $0x1a8] sm:$0xf]
    %v2150 = vld [vmem:[#allocation11 + $0x1ac] sm:$0xf]
    %v2151 = vld [vmem:[#allocation11 + $0x1b0] sm:$0xf]
    %v2152 = vld [vmem:[#allocation11 + $0x1b4] sm:$0xf]
    %v2153 = vld [vmem:[#allocation11 + $0x1b8] sm:$0xf]
    %v2154 = vld [vmem:[#allocation11 + $0x1bc] sm:$0xf]
    %v2155 = vld [vmem:[#allocation11 + $0x1c0] sm:$0xf]
    %v2156 = vld [vmem:[#allocation11 + $0x1c4] sm:$0xf]
    %v2157 = vld [vmem:[#allocation11 + $0x1c8] sm:$0xf]
    %v2158 = vld [vmem:[#allocation11 + $0x1cc] sm:$0xf]
    %v2159 = vld [vmem:[#allocation11 + $0x1d0] sm:$0xf]
    %v2160 = vld [vmem:[#allocation11 + $0x1d4] sm:$0xf]
    %v2161 = vld [vmem:[#allocation11 + $0x1d8] sm:$0xf]
    %v2162 = vld [vmem:[#allocation11 + $0x1dc] sm:$0xf]
    %v2163 = vld [vmem:[#allocation11 + $0x1e0] sm:$0xf]
    %v2164 = vld [vmem:[#allocation11 + $0x1e4] sm:$0xf]
    %v2165 = vld [vmem:[#allocation11 + $0x1e8] sm:$0xf]
    %v2166 = vld [vmem:[#allocation11 + $0x1ec] sm:$0xf]
    %v2167 = vld [vmem:[#allocation11 + $0x1f0] sm:$0xf]
    %v2168 = vld [vmem:[#allocation11 + $0x1f4] sm:$0xf]
    %v2169 = vld [vmem:[#allocation11 + $0x1f8] sm:$0xf]
    %v2170 = vld [vmem:[#allocation11 + $0x1fc] sm:$0xf]
    %v2171 = vld [vmem:[#allocation11 + $0x200] sm:$0xf]
    %v2172 = vld [vmem:[#allocation11 + $0x204] sm:$0xf]
    %v2173 = vld [vmem:[#allocation11 + $0x208] sm:$0xf]
    %v2174 = vld [vmem:[#allocation11 + $0x20c] sm:$0xf]
    %v2175 = vld [vmem:[#allocation11 + $0x210] sm:$0xf]
    %v2176 = vld [vmem:[#allocation11 + $0x214] sm:$0xf]
    %v2177 = vld [vmem:[#allocation11 + $0x218] sm:$0xf]
    %v2178 = vld [vmem:[#allocation11 + $0x21c] sm:$0xf]
    %v2179 = vld [vmem:[#allocation11 + $0x220] sm:$0xf]
    %v2180 = vld [vmem:[#allocation11 + $0x224] sm:$0xf]
    %v2181 = vld [vmem:[#allocation11 + $0x228] sm:$0xf]
    %v2182 = vld [vmem:[#allocation11 + $0x22c] sm:$0xf]
    %v2183 = vld [vmem:[#allocation11 + $0x230] sm:$0xf]
    %v2184 = vld [vmem:[#allocation11 + $0x234] sm:$0xf]
    %v2185 = vld [vmem:[#allocation11 + $0x238] sm:$0xf]
    %v2186 = vld [vmem:[#allocation11 + $0x23c] sm:$0xf]
    %v2331 = vunpack.c.l.b16 %v2043
    %v2332 = vunpack.c.l.b16 %v2044
    %v2333 = vunpack.c.l.b16 %v2045
    %v2334 = vunpack.c.l.b16 %v2046
    %v2335 = vunpack.c.l.b16 %v2047
    %v2336 = vunpack.c.l.b16 %v2048
    %v2337 = vunpack.c.l.b16 %v2049
    %v2338 = vunpack.c.l.b16 %v2050
    %v2339 = vunpack.c.l.b16 %v2051
    %v2340 = vunpack.c.l.b16 %v2052
    %v2341 = vunpack.c.l.b16 %v2053
    %v2342 = vunpack.c.l.b16 %v2054
    %v2343 = vunpack.c.l.b16 %v2055
    %v2344 = vunpack.c.l.b16 %v2056
    %v2345 = vunpack.c.l.b16 %v2057
    %v2346 = vunpack.c.l.b16 %v2058
    %v2347 = vunpack.c.l.b16 %v2059
    %v2348 = vunpack.c.l.b16 %v2060
    %v2349 = vunpack.c.l.b16 %v2061
    %v2350 = vunpack.c.l.b16 %v2062
    %v2351 = vunpack.c.l.b16 %v2063
    %v2352 = vunpack.c.l.b16 %v2064
    %v2353 = vunpack.c.l.b16 %v2065
    %v2354 = vunpack.c.l.b16 %v2066
    %v2355 = vunpack.c.l.b16 %v2067
    %v2356 = vunpack.c.l.b16 %v2068
    %v2357 = vunpack.c.l.b16 %v2069
    %v2358 = vunpack.c.l.b16 %v2070
    %v2359 = vunpack.c.l.b16 %v2071
    %v2360 = vunpack.c.l.b16 %v2072
    %v2361 = vunpack.c.l.b16 %v2073
    %v2362 = vunpack.c.l.b16 %v2074
    %v2363 = vunpack.c.l.b16 %v2075
    %v2364 = vunpack.c.l.b16 %v2076
    %v2365 = vunpack.c.l.b16 %v2077
    %v2366 = vunpack.c.l.b16 %v2078
    %v2367 = vunpack.c.l.b16 %v2079
    %v2368 = vunpack.c.l.b16 %v2080
    %v2369 = vunpack.c.l.b16 %v2081
    %v2370 = vunpack.c.l.b16 %v2082
    %v2371 = vunpack.c.l.b16 %v2083
    %v2372 = vunpack.c.l.b16 %v2084
    %v2373 = vunpack.c.l.b16 %v2085
    %v2374 = vunpack.c.l.b16 %v2086
    %v2375 = vunpack.c.l.b16 %v2087
    %v2376 = vunpack.c.l.b16 %v2088
    %v2377 = vunpack.c.l.b16 %v2089
    %v2378 = vunpack.c.l.b16 %v2090
    %v2379 = vunpack.c.l.b16 %v2091
    %v2380 = vunpack.c.l.b16 %v2092
    %v2381 = vunpack.c.l.b16 %v2093
    %v2382 = vunpack.c.l.b16 %v2094
    %v2383 = vunpack.c.l.b16 %v2095
    %v2384 = vunpack.c.l.b16 %v2096
    %v2385 = vunpack.c.l.b16 %v2097
    %v2386 = vunpack.c.l.b16 %v2098
    %v2387 = vunpack.c.l.b16 %v2099
    %v2388 = vunpack.c.l.b16 %v2100
    %v2389 = vunpack.c.l.b16 %v2101
    %v2390 = vunpack.c.l.b16 %v2102
    %v2391 = vunpack.c.l.b16 %v2103
    %v2392 = vunpack.c.l.b16 %v2104
    %v2393 = vunpack.c.l.b16 %v2105
    %v2394 = vunpack.c.l.b16 %v2106
    %v2395 = vunpack.c.l.b16 %v2107
    %v2396 = vunpack.c.l.b16 %v2108
    %v2397 = vunpack.c.l.b16 %v2109
    %v2398 = vunpack.c.l.b16 %v2110
    %v2399 = vunpack.c.l.b16 %v2111
    %v2400 = vunpack.c.l.b16 %v2112
    %v2401 = vunpack.c.l.b16 %v2113
    %v2402 = vunpack.c.l.b16 %v2114
    %v2403 = vunpack.c.l.b16 %v2115
    %v2404 = vunpack.c.l.b16 %v2116
    %v2405 = vunpack.c.l.b16 %v2117
    %v2406 = vunpack.c.l.b16 %v2118
    %v2407 = vunpack.c.l.b16 %v2119
    %v2408 = vunpack.c.l.b16 %v2120
    %v2409 = vunpack.c.l.b16 %v2121
    %v2410 = vunpack.c.l.b16 %v2122
    %v2411 = vunpack.c.l.b16 %v2123
    %v2412 = vunpack.c.l.b16 %v2124
    %v2413 = vunpack.c.l.b16 %v2125
    %v2414 = vunpack.c.l.b16 %v2126
    %v2415 = vunpack.c.l.b16 %v2127
    %v2416 = vunpack.c.l.b16 %v2128
    %v2417 = vunpack.c.l.b16 %v2129
    %v2418 = vunpack.c.l.b16 %v2130
    %v2419 = vunpack.c.l.b16 %v2131
    %v2420 = vunpack.c.l.b16 %v2132
    %v2421 = vunpack.c.l.b16 %v2133
    %v2422 = vunpack.c.l.b16 %v2134
    %v2423 = vunpack.c.l.b16 %v2135
    %v2424 = vunpack.c.l.b16 %v2136
    %v2425 = vunpack.c.l.b16 %v2137
    %v2426 = vunpack.c.l.b16 %v2138
    %v2427 = vunpack.c.l.b16 %v2139
    %v2428 = vunpack.c.l.b16 %v2140
    %v2429 = vunpack.c.l.b16 %v2141
    %v2430 = vunpack.c.l.b16 %v2142
    %v2431 = vunpack.c.l.b16 %v2143
    %v2432 = vunpack.c.l.b16 %v2144
    %v2433 = vunpack.c.l.b16 %v2145
    %v2434 = vunpack.c.l.b16 %v2146
    %v2435 = vunpack.c.l.b16 %v2147
    %v2436 = vunpack.c.l.b16 %v2148
    %v2437 = vunpack.c.l.b16 %v2149
    %v2438 = vunpack.c.l.b16 %v2150
    %v2439 = vunpack.c.l.b16 %v2151
    %v2440 = vunpack.c.l.b16 %v2152
    %v2441 = vunpack.c.l.b16 %v2153
    %v2442 = vunpack.c.l.b16 %v2154
    %v2443 = vunpack.c.l.b16 %v2155
    %v2444 = vunpack.c.l.b16 %v2156
    %v2445 = vunpack.c.l.b16 %v2157
    %v2446 = vunpack.c.l.b16 %v2158
    %v2447 = vunpack.c.l.b16 %v2159
    %v2448 = vunpack.c.l.b16 %v2160
    %v2449 = vunpack.c.l.b16 %v2161
    %v2450 = vunpack.c.l.b16 %v2162
    %v2451 = vunpack.c.l.b16 %v2163
    %v2452 = vunpack.c.l.b16 %v2164
    %v2453 = vunpack.c.l.b16 %v2165
    %v2454 = vunpack.c.l.b16 %v2166
    %v2455 = vunpack.c.l.b16 %v2167
    %v2456 = vunpack.c.l.b16 %v2168
    %v2457 = vunpack.c.l.b16 %v2169
    %v2458 = vunpack.c.l.b16 %v2170
    %v2459 = vunpack.c.l.b16 %v2171
    %v2460 = vunpack.c.l.b16 %v2172
    %v2461 = vunpack.c.l.b16 %v2173
    %v2462 = vunpack.c.l.b16 %v2174
    %v2463 = vunpack.c.l.b16 %v2175
    %v2464 = vunpack.c.l.b16 %v2176
    %v2465 = vunpack.c.l.b16 %v2177
    %v2466 = vunpack.c.l.b16 %v2178
    %v2467 = vunpack.c.l.b16 %v2179
    %v2468 = vunpack.c.l.b16 %v2180
    %v2469 = vunpack.c.l.b16 %v2181
    %v2470 = vunpack.c.l.b16 %v2182
    %v2471 = vunpack.c.l.b16 %v2183
    %v2472 = vunpack.c.l.b16 %v2184
    %v2473 = vunpack.c.l.b16 %v2185
    %v2474 = vunpack.c.l.b16 %v2186
    %v2475 = vpack.c.b16 %v2332, %v2331
    %v2476 = vpack.c.b16 %v2334, %v2333
    %v2477 = vpack.c.b16 %v2336, %v2335
    %v2478 = vpack.c.b16 %v2338, %v2337
    %v2479 = vpack.c.b16 %v2340, %v2339
    %v2480 = vpack.c.b16 %v2342, %v2341
    %v2481 = vpack.c.b16 %v2344, %v2343
    %v2482 = vpack.c.b16 %v2346, %v2345
    %v2483 = vpack.c.b16 %v2348, %v2347
    %v2484 = vpack.c.b16 %v2350, %v2349
    %v2485 = vpack.c.b16 %v2352, %v2351
    %v2486 = vpack.c.b16 %v2354, %v2353
    %v2487 = vpack.c.b16 %v2356, %v2355
    %v2488 = vpack.c.b16 %v2358, %v2357
    %v2489 = vpack.c.b16 %v2360, %v2359
    %v2490 = vpack.c.b16 %v2362, %v2361
    %v2491 = vpack.c.b16 %v2364, %v2363
    %v2492 = vpack.c.b16 %v2366, %v2365
    %v2493 = vpack.c.b16 %v2368, %v2367
    %v2494 = vpack.c.b16 %v2370, %v2369
    %v2495 = vpack.c.b16 %v2372, %v2371
    %v2496 = vpack.c.b16 %v2374, %v2373
    %v2497 = vpack.c.b16 %v2376, %v2375
    %v2498 = vpack.c.b16 %v2378, %v2377
    %v2499 = vpack.c.b16 %v2380, %v2379
    %v2500 = vpack.c.b16 %v2382, %v2381
    %v2501 = vpack.c.b16 %v2384, %v2383
    %v2502 = vpack.c.b16 %v2386, %v2385
    %v2503 = vpack.c.b16 %v2388, %v2387
    %v2504 = vpack.c.b16 %v2390, %v2389
    %v2505 = vpack.c.b16 %v2392, %v2391
    %v2506 = vpack.c.b16 %v2394, %v2393
    %v2507 = vpack.c.b16 %v2396, %v2395
    %v2508 = vpack.c.b16 %v2398, %v2397
    %v2509 = vpack.c.b16 %v2400, %v2399
    %v2510 = vpack.c.b16 %v2402, %v2401
    %v2511 = vpack.c.b16 %v2404, %v2403
    %v2512 = vpack.c.b16 %v2406, %v2405
    %v2513 = vpack.c.b16 %v2408, %v2407
    %v2514 = vpack.c.b16 %v2410, %v2409
    %v2515 = vpack.c.b16 %v2412, %v2411
    %v2516 = vpack.c.b16 %v2414, %v2413
    %v2517 = vpack.c.b16 %v2416, %v2415
    %v2518 = vpack.c.b16 %v2418, %v2417
    %v2519 = vpack.c.b16 %v2420, %v2419
    %v2520 = vpack.c.b16 %v2422, %v2421
    %v2521 = vpack.c.b16 %v2424, %v2423
    %v2522 = vpack.c.b16 %v2426, %v2425
    %v2523 = vpack.c.b16 %v2428, %v2427
    %v2524 = vpack.c.b16 %v2430, %v2429
    %v2525 = vpack.c.b16 %v2432, %v2431
    %v2526 = vpack.c.b16 %v2434, %v2433
    %v2527 = vpack.c.b16 %v2436, %v2435
    %v2528 = vpack.c.b16 %v2438, %v2437
    %v2529 = vpack.c.b16 %v2440, %v2439
    %v2530 = vpack.c.b16 %v2442, %v2441
    %v2531 = vpack.c.b16 %v2444, %v2443
    %v2532 = vpack.c.b16 %v2446, %v2445
    %v2533 = vpack.c.b16 %v2448, %v2447
    %v2534 = vpack.c.b16 %v2450, %v2449
    %v2535 = vpack.c.b16 %v2452, %v2451
    %v2536 = vpack.c.b16 %v2454, %v2453
    %v2537 = vpack.c.b16 %v2456, %v2455
    %v2538 = vpack.c.b16 %v2458, %v2457
    %v2539 = vpack.c.b16 %v2460, %v2459
    %v2540 = vpack.c.b16 %v2462, %v2461
    %v2541 = vpack.c.b16 %v2464, %v2463
    %v2542 = vpack.c.b16 %v2466, %v2465
    %v2543 = vpack.c.b16 %v2468, %v2467
    %v2544 = vpack.c.b16 %v2470, %v2469
    %v2545 = vpack.c.b16 %v2472, %v2471
    %v2546 = vpack.c.b16 %v2474, %v2473
    %2619 = vmatprep.subr.bf16.mxu0 0
    %2620 = vmatpush1.bf16.msra.mxu0 %v2475
    %2621 = vmatprep.subr.bf16.mxu0 0
    %2622 = vmatpush1.bf16.msra.mxu0 %v2476
    %2623 = vmatprep.subr.bf16.mxu0 0
    %2624 = vmatpush1.bf16.msra.mxu0 %v2477
    %2625 = vmatprep.subr.bf16.mxu0 0
    %2626 = vmatpush1.bf16.msra.mxu0 %v2478
    %2627 = vmatprep.subr.bf16.mxu0 0
    %2628 = vmatpush1.bf16.msra.mxu0 %v2479
    %2629 = vmatprep.subr.bf16.mxu0 0
    %2630 = vmatpush1.bf16.msra.mxu0 %v2480
    %2631 = vmatprep.subr.bf16.mxu0 0
    %2632 = vmatpush1.bf16.msra.mxu0 %v2481
    %2633 = vmatprep.subr.bf16.mxu0 0
    %2634 = vmatpush1.bf16.msra.mxu0 %v2482
    %2635 = vmatprep.subr.bf16.mxu0 0
    %2636 = vmatpush1.bf16.msra.mxu0 %v2483
    %2637 = vmatprep.subr.bf16.mxu0 0
    %2638 = vmatpush1.bf16.msra.mxu0 %v2484
    %2639 = vmatprep.subr.bf16.mxu0 0
    %2640 = vmatpush1.bf16.msra.mxu0 %v2485
    %2641 = vmatprep.subr.bf16.mxu0 0
    %2642 = vmatpush1.bf16.msra.mxu0 %v2486
    %2643 = vmatprep.subr.bf16.mxu0 0
    %2644 = vmatpush1.bf16.msra.mxu0 %v2487
    %2645 = vmatprep.subr.bf16.mxu0 0
    %2646 = vmatpush1.bf16.msra.mxu0 %v2488
    %2647 = vmatprep.subr.bf16.mxu0 0
    %2648 = vmatpush1.bf16.msra.mxu0 %v2489
    %2649 = vmatprep.subr.bf16.mxu0 0
    %2650 = vmatpush1.bf16.msra.mxu0 %v2490
    %2651 = vmatprep.mubr.bf16.mxu0 %v1756
    %2652 = vmatmul.mubr.bf16.gmra.mrb[0].mxu0 %v1755
    %v2653 = vpop.f32.mrb[0].mxu0
    %v2654 = vadd.f32 0.0, %v2653
    %v2655 = vpop.f32.mrb[0].mxu0
    %v2656 = vpop.f32.mrb[0].mxu0
    %v2657 = vadd.f32 0.0, %v2656
    %v2658 = vpop.f32.mrb[0].mxu0
    %2659 = vmatprep.mubr.bf16.mxu0 %v1765
    %2660 = vmatmul.mubr.bf16.gmra.mrb[0].mxu0 %v1764
    %v2661 = vpop.f32.mrb[0].mxu0
    %v2662 = vadd.f32 0.0, %v2661
    %v2663 = vpop.f32.mrb[0].mxu0
    %v2664 = vpop.f32.mrb[0].mxu0
    %v2665 = vadd.f32 0.0, %v2664
    %v2666 = vpop.f32.mrb[0].mxu0
    %2667 = vmatprep.mubr.bf16.mxu0 %v1774
    %2668 = vmatmul.mubr.bf16.gmra.mrb[0].mxu0 %v1773
    %v2669 = vpop.f32.mrb[0].mxu0
    %v2670 = vadd.f32 0.0, %v2669
    %v2671 = vpop.f32.mrb[0].mxu0
    %v2672 = vpop.f32.mrb[0].mxu0
    %v2673 = vadd.f32 0.0, %v2672
    %v2674 = vpop.f32.mrb[0].mxu0
    %2675 = vmatprep.mubr.bf16.mxu0 %v1783
    %2676 = vmatmul.mubr.bf16.gmra.mrb[0].mxu0 %v1782
    %v2677 = vpop.f32.mrb[0].mxu0
    %v2678 = vadd.f32 0.0, %v2677
    %v2679 = vpop.f32.mrb[0].mxu0
    %v2680 = vpop.f32.mrb[0].mxu0
    %v2681 = vadd.f32 0.0, %v2680
    %v2682 = vpop.f32.mrb[0].mxu0
    %2683 = vmatprep.mubr.bf16.mxu0 %v1792
    %2684 = vmatmul.mubr.bf16.gmra.mrb[0].mxu0 %v1791
    %v2685 = vpop.f32.mrb[0].mxu0
    %v2686 = vadd.f32 0.0, %v2685
    %v2687 = vpop.f32.mrb[0].mxu0
    %v2688 = vpop.f32.mrb[0].mxu0
    %v2689 = vadd.f32 0.0, %v2688
    %v2690 = vpop.f32.mrb[0].mxu0
    %2691 = vmatprep.mubr.bf16.mxu0 %v1801
    %2692 = vmatmul.mubr.bf16.gmra.mrb[0].mxu0 %v1800
    %v2693 = vpop.f32.mrb[0].mxu0
    %v2694 = vadd.f32 0.0, %v2693
    %v2695 = vpop.f32.mrb[0].mxu0
    %v2696 = vpop.f32.mrb[0].mxu0
    %v2697 = vadd.f32 0.0, %v2696
    %v2698 = vpop.f32.mrb[0].mxu0
    %2699 = vmatprep.mubr.bf16.mxu0 %v1810
    %2700 = vmatmul.mubr.bf16.gmra.mrb[0].mxu0 %v1809
    %v2701 = vpop.f32.mrb[0].mxu0
    %v2702 = vadd.f32 0.0, %v2701
    %v2703 = vpop.f32.mrb[0].mxu0
    %v2704 = vpop.f32.mrb[0].mxu0
    %v2705 = vadd.f32 0.0, %v2704
    %v2706 = vpop.f32.mrb[0].mxu0
    %2707 = vmatprep.mubr.bf16.mxu0 %v1819
    %2708 = vmatmul.mubr.bf16.gmra.mrb[0].mxu0 %v1818
    %v2709 = vpop.f32.mrb[0].mxu0
    %v2710 = vadd.f32 0.0, %v2709
    %v2711 = vpop.f32.mrb[0].mxu0
    %v2712 = vpop.f32.mrb[0].mxu0
    %v2713 = vadd.f32 0.0, %v2712
    %v2714 = vpop.f32.mrb[0].mxu0
    %2715 = vmatprep.mubr.bf16.mxu0 %v1828
    %2716 = vmatmul.mubr.bf16.gmra.mrb[0].mxu0 %v1827
    %v2717 = vpop.f32.mrb[0].mxu0
    %v2718 = vadd.f32 0.0, %v2717
    %v2719 = vpop.f32.mrb[0].mxu0
    %v2720 = vpop.f32.mrb[0].mxu0
    %v2721 = vadd.f32 0.0, %v2720
    %v2722 = vpop.f32.mrb[0].mxu0
    %2723 = vmatprep.mubr.bf16.mxu0 %v1837
    %2724 = vmatmul.mubr.bf16.gmra.mrb[0].mxu0 %v1836
    %v2725 = vpop.f32.mrb[0].mxu0
    %v2726 = vadd.f32 0.0, %v2725
    %v2727 = vpop.f32.mrb[0].mxu0
    %v2728 = vpop.f32.mrb[0].mxu0
    %v2729 = vadd.f32 0.0, %v2728
    %v2730 = vpop.f32.mrb[0].mxu0
    %2731 = vmatprep.mubr.bf16.mxu0 %v1846
    %2732 = vmatmul.mubr.bf16.gmra.mrb[0].mxu0 %v1845
    %v2733 = vpop.f32.mrb[0].mxu0
    %v2734 = vadd.f32 0.0, %v2733
    %v2735 = vpop.f32.mrb[0].mxu0
    %v2736 = vpop.f32.mrb[0].mxu0
    %v2737 = vadd.f32 0.0, %v2736
    %v2738 = vpop.f32.mrb[0].mxu0
    %2739 = vmatprep.mubr.bf16.mxu0 %v1855
    %2740 = vmatmul.mubr.bf16.gmra.mrb[0].mxu0 %v1854
    %v2741 = vpop.f32.mrb[0].mxu0
    %v2742 = vadd.f32 0.0, %v2741
    %v2743 = vpop.f32.mrb[0].mxu0
    %v2744 = vpop.f32.mrb[0].mxu0
    %v2745 = vadd.f32 0.0, %v2744
    %v2746 = vpop.f32.mrb[0].mxu0
    %2747 = vmatprep.mubr.bf16.mxu0 %v1864
    %2748 = vmatmul.mubr.bf16.gmra.mrb[0].mxu0 %v1863
    %v2749 = vpop.f32.mrb[0].mxu0
    %v2750 = vadd.f32 0.0, %v2749
    %v2751 = vpop.f32.mrb[0].mxu0
    %v2752 = vpop.f32.mrb[0].mxu0
    %v2753 = vadd.f32 0.0, %v2752
    %v2754 = vpop.f32.mrb[0].mxu0
    %2755 = vmatprep.mubr.bf16.mxu0 %v1873
    %2756 = vmatmul.mubr.bf16.gmra.mrb[0].mxu0 %v1872
    %v2757 = vpop.f32.mrb[0].mxu0
    %v2758 = vadd.f32 0.0, %v2757
    %v2759 = vpop.f32.mrb[0].mxu0
    %v2760 = vpop.f32.mrb[0].mxu0
    %v2761 = vadd.f32 0.0, %v2760
    %v2762 = vpop.f32.mrb[0].mxu0
    %2763 = vmatprep.mubr.bf16.mxu0 %v1882
    %2764 = vmatmul.mubr.bf16.gmra.mrb[0].mxu0 %v1881
    %v2765 = vpop.f32.mrb[0].mxu0
    %v2766 = vadd.f32 0.0, %v2765
    %v2767 = vpop.f32.mrb[0].mxu0
    %v2768 = vpop.f32.mrb[0].mxu0
    %v2769 = vadd.f32 0.0, %v2768
    %v2770 = vpop.f32.mrb[0].mxu0
    %2771 = vmatprep.mubr.bf16.mxu0 %v1891
    %2772 = vmatmul.mubr.bf16.gmra.mrb[0].mxu0 %v1890
    %v2773 = vpop.f32.mrb[0].mxu0
    %v2774 = vadd.f32 0.0, %v2773
    %v2775 = vpop.f32.mrb[0].mxu0
    %v2776 = vpop.f32.mrb[0].mxu0
    %v2777 = vadd.f32 0.0, %v2776
    %v2778 = vpop.f32.mrb[0].mxu0
    %2779 = vmatprep.mubr.bf16.mxu0 %v1900
    %2780 = vmatmul.mubr.bf16.gmra.mrb[0].mxu0 %v1899
    %v2781 = vpop.f32.mrb[0].mxu0
    %v2782 = vadd.f32 0.0, %v2781
    %v2783 = vpop.f32.mrb[0].mxu0
    %v2784 = vpop.f32.mrb[0].mxu0
    %v2785 = vadd.f32 0.0, %v2784
    %v2786 = vpop.f32.mrb[0].mxu0
    %2787 = vmatprep.mubr.bf16.mxu0 %v1909
    %2788 = vmatmul.mubr.bf16.gmra.mrb[0].mxu0 %v1908
    %v2789 = vpop.f32.mrb[0].mxu0
    %v2790 = vadd.f32 0.0, %v2789
    %v2791 = vpop.f32.mrb[0].mxu0
    %v2792 = vpop.f32.mrb[0].mxu0
    %v2793 = vadd.f32 0.0, %v2792
    %v2794 = vpop.f32.mrb[0].mxu0
    %2795 = vmatprep.mubr.bf16.mxu0 %v1918
    %2796 = vmatmul.mubr.bf16.gmra.mrb[0].mxu0 %v1917
    %v2797 = vpop.f32.mrb[0].mxu0
    %v2798 = vadd.f32 0.0, %v2797
    %v2799 = vpop.f32.mrb[0].mxu0
    %v2800 = vpop.f32.mrb[0].mxu0
    %v2801 = vadd.f32 0.0, %v2800
    %v2802 = vpop.f32.mrb[0].mxu0
    %2803 = vmatprep.mubr.bf16.mxu0 %v1927
    %2804 = vmatmul.mubr.bf16.gmra.mrb[0].mxu0 %v1926
    %v2805 = vpop.f32.mrb[0].mxu0
    %v2806 = vadd.f32 0.0, %v2805
    %v2807 = vpop.f32.mrb[0].mxu0
    %v2808 = vpop.f32.mrb[0].mxu0
    %v2809 = vadd.f32 0.0, %v2808
    %v2810 = vpop.f32.mrb[0].mxu0
    %2811 = vmatprep.mubr.bf16.mxu0 %v1936
    %2812 = vmatmul.mubr.bf16.gmra.mrb[0].mxu0 %v1935
    %v2813 = vpop.f32.mrb[0].mxu0
    %v2814 = vadd.f32 0.0, %v2813
    %v2815 = vpop.f32.mrb[0].mxu0
    %v2816 = vpop.f32.mrb[0].mxu0
    %v2817 = vadd.f32 0.0, %v2816
    %v2818 = vpop.f32.mrb[0].mxu0
    %2819 = vmatprep.mubr.bf16.mxu0 %v1945
    %2820 = vmatmul.mubr.bf16.gmra.mrb[0].mxu0 %v1944
    %v2821 = vpop.f32.mrb[0].mxu0
    %v2822 = vadd.f32 0.0, %v2821
    %v2823 = vpop.f32.mrb[0].mxu0
    %v2824 = vpop.f32.mrb[0].mxu0
    %v2825 = vadd.f32 0.0, %v2824
    %v2826 = vpop.f32.mrb[0].mxu0
    %2827 = vmatprep.mubr.bf16.mxu0 %v1954
    %2828 = vmatmul.mubr.bf16.gmra.mrb[0].mxu0 %v1953
    %v2829 = vpop.f32.mrb[0].mxu0
    %v2830 = vadd.f32 0.0, %v2829
    %v2831 = vpop.f32.mrb[0].mxu0
    %v2832 = vpop.f32.mrb[0].mxu0
    %v2833 = vadd.f32 0.0, %v2832
    %v2834 = vpop.f32.mrb[0].mxu0
    %2835 = vmatprep.mubr.bf16.mxu0 %v1963
    %2836 = vmatmul.mubr.bf16.gmra.mrb[0].mxu0 %v1962
    %v2837 = vpop.f32.mrb[0].mxu0
    %v2838 = vadd.f32 0.0, %v2837
    %v2839 = vpop.f32.mrb[0].mxu0
    %v2840 = vpop.f32.mrb[0].mxu0
    %v2841 = vadd.f32 0.0, %v2840
    %v2842 = vpop.f32.mrb[0].mxu0
    %2843 = vmatprep.mubr.bf16.mxu0 %v1972
    %2844 = vmatmul.mubr.bf16.gmra.mrb[0].mxu0 %v1971
    %v2845 = vpop.f32.mrb[0].mxu0
    %v2846 = vadd.f32 0.0, %v2845
    %v2847 = vpop.f32.mrb[0].mxu0
    %v2848 = vpop.f32.mrb[0].mxu0
    %v2849 = vadd.f32 0.0, %v2848
    %v2850 = vpop.f32.mrb[0].mxu0
    %2851 = vmatprep.mubr.bf16.mxu0 %v1981
    %2852 = vmatmul.mubr.bf16.gmra.mrb[0].mxu0 %v1980
    %v2853 = vpop.f32.mrb[0].mxu0
    %v2854 = vadd.f32 0.0, %v2853
    %v2855 = vpop.f32.mrb[0].mxu0
    %v2856 = vpop.f32.mrb[0].mxu0
    %v2857 = vadd.f32 0.0, %v2856
    %v2858 = vpop.f32.mrb[0].mxu0
    %2859 = vmatprep.mubr.bf16.mxu0 %v1990
    %2860 = vmatmul.mubr.bf16.gmra.mrb[0].mxu0 %v1989
    %v2861 = vpop.f32.mrb[0].mxu0
    %v2862 = vadd.f32 0.0, %v2861
    %v2863 = vpop.f32.mrb[0].mxu0
    %v2864 = vpop.f32.mrb[0].mxu0
    %v2865 = vadd.f32 0.0, %v2864
    %v2866 = vpop.f32.mrb[0].mxu0
    %2867 = vmatprep.mubr.bf16.mxu0 %v1999
    %2868 = vmatmul.mubr.bf16.gmra.mrb[0].mxu0 %v1998
    %v2869 = vpop.f32.mrb[0].mxu0
    %v2870 = vadd.f32 0.0, %v2869
    %v2871 = vpop.f32.mrb[0].mxu0
    %v2872 = vpop.f32.mrb[0].mxu0
    %v2873 = vadd.f32 0.0, %v2872
    %v2874 = vpop.f32.mrb[0].mxu0
    %2875 = vmatprep.mubr.bf16.mxu0 %v2008
    %2876 = vmatmul.mubr.bf16.gmra.mrb[0].mxu0 %v2007
    %v2877 = vpop.f32.mrb[0].mxu0
    %v2878 = vadd.f32 0.0, %v2877
    %v2879 = vpop.f32.mrb[0].mxu0
    %v2880 = vpop.f32.mrb[0].mxu0
    %v2881 = vadd.f32 0.0, %v2880
    %v2882 = vpop.f32.mrb[0].mxu0
    %2883 = vmatprep.mubr.bf16.mxu0 %v2017
    %2884 = vmatmul.mubr.bf16.gmra.mrb[0].mxu0 %v2016
    %v2885 = vpop.f32.mrb[0].mxu0
    %v2886 = vadd.f32 0.0, %v2885
    %v2887 = vpop.f32.mrb[0].mxu0
    %v2888 = vpop.f32.mrb[0].mxu0
    %v2889 = vadd.f32 0.0, %v2888
    %v2890 = vpop.f32.mrb[0].mxu0
    %2891 = vmatprep.mubr.bf16.mxu0 %v2026
    %2892 = vmatmul.mubr.bf16.gmra.mrb[0].mxu0 %v2025
    %v2893 = vpop.f32.mrb[0].mxu0
    %v2894 = vadd.f32 0.0, %v2893
    %v2895 = vpop.f32.mrb[0].mxu0
    %v2896 = vpop.f32.mrb[0].mxu0
    %v2897 = vadd.f32 0.0, %v2896
    %v2898 = vpop.f32.mrb[0].mxu0
    %2899 = vmatprep.mubr.bf16.mxu0 %v2035
    %2900 = vmatmul.mubr.bf16.gmra.mrb[0].mxu0 %v2034
    %v2901 = vpop.f32.mrb[0].mxu0
    %v2902 = vadd.f32 0.0, %v2901
    %v2903 = vpop.f32.mrb[0].mxu0
    %v2904 = vpop.f32.mrb[0].mxu0
    %v2905 = vadd.f32 0.0, %v2904
    %v2906 = vpop.f32.mrb[0].mxu0
    %2907 = vdwg.mxu0
    %2908 = vmatprep.subr.bf16.mxu0 0
    %2909 = vmatpush1.bf16.msra.mxu0 %v2491
    %2910 = vmatprep.subr.bf16.mxu0 0
    %2911 = vmatpush1.bf16.msra.mxu0 %v2492
    %2912 = vmatprep.subr.bf16.mxu0 0
    %2913 = vmatpush1.bf16.msra.mxu0 %v2493
    %2914 = vmatprep.subr.bf16.mxu0 0
    %2915 = vmatpush1.bf16.msra.mxu0 %v2494
    %2916 = vmatprep.subr.bf16.mxu0 0
    %2917 = vmatpush1.bf16.msra.mxu0 %v2495
    %2918 = vmatprep.subr.bf16.mxu0 0
    %2919 = vmatpush1.bf16.msra.mxu0 %v2496
    %2920 = vmatprep.subr.bf16.mxu0 0
    %2921 = vmatpush1.bf16.msra.mxu0 %v2497
    %2922 = vmatprep.subr.bf16.mxu0 0
    %2923 = vmatpush1.bf16.msra.mxu0 %v2498
    %2924 = vmatprep.subr.bf16.mxu0 0
    %2925 = vmatpush1.bf16.msra.mxu0 %v2499
    %2926 = vmatprep.subr.bf16.mxu0 0
    %2927 = vmatpush1.bf16.msra.mxu0 %v2500
    %2928 = vmatprep.subr.bf16.mxu0 0
    %2929 = vmatpush1.bf16.msra.mxu0 %v2501
    %2930 = vmatprep.subr.bf16.mxu0 0
    %2931 = vmatpush1.bf16.msra.mxu0 %v2502
    %2932 = vmatprep.subr.bf16.mxu0 0
    %2933 = vmatpush1.bf16.msra.mxu0 %v2503
    %2934 = vmatprep.subr.bf16.mxu0 0
    %2935 = vmatpush1.bf16.msra.mxu0 %v2504
    %2936 = vmatprep.subr.bf16.mxu0 0
    %2937 = vmatpush1.bf16.msra.mxu0 %v2505
    %2938 = vmatprep.subr.bf16.mxu0 0
    %2939 = vmatpush1.bf16.msra.mxu0 %v2506
    %2940 = vmatprep.mubr.bf16.mxu0 %v1758
    %2941 = vmatmul.mubr.bf16.gmra.mrb[0].mxu0 %v1757
    %v2942 = vpop.f32.mrb[0].mxu0
    %v2943 = vadd.f32 %v2654, %v2942
    %v2944 = vpop.f32.mrb[0].mxu0
    %v2945 = vpop.f32.mrb[0].mxu0
    %v2946 = vadd.f32 %v2657, %v2945
    %v2947 = vpop.f32.mrb[0].mxu0
    %2948 = vmatprep.mubr.bf16.mxu0 %v1767
    %2949 = vmatmul.mubr.bf16.gmra.mrb[0].mxu0 %v1766
    %v2950 = vpop.f32.mrb[0].mxu0
    %v2951 = vadd.f32 %v2662, %v2950
    %v2952 = vpop.f32.mrb[0].mxu0
    %v2953 = vpop.f32.mrb[0].mxu0
    %v2954 = vadd.f32 %v2665, %v2953
    %v2955 = vpop.f32.mrb[0].mxu0
    %2956 = vmatprep.mubr.bf16.mxu0 %v1776
    %2957 = vmatmul.mubr.bf16.gmra.mrb[0].mxu0 %v1775
    %v2958 = vpop.f32.mrb[0].mxu0
    %v2959 = vadd.f32 %v2670, %v2958
    %v2960 = vpop.f32.mrb[0].mxu0
    %v2961 = vpop.f32.mrb[0].mxu0
    %v2962 = vadd.f32 %v2673, %v2961
    %v2963 = vpop.f32.mrb[0].mxu0
    %2964 = vmatprep.mubr.bf16.mxu0 %v1785
    %2965 = vmatmul.mubr.bf16.gmra.mrb[0].mxu0 %v1784
    %v2966 = vpop.f32.mrb[0].mxu0
    %v2967 = vadd.f32 %v2678, %v2966
    %v2968 = vpop.f32.mrb[0].mxu0
    %v2969 = vpop.f32.mrb[0].mxu0
    %v2970 = vadd.f32 %v2681, %v2969
    %v2971 = vpop.f32.mrb[0].mxu0
    %2972 = vmatprep.mubr.bf16.mxu0 %v1794
    %2973 = vmatmul.mubr.bf16.gmra.mrb[0].mxu0 %v1793
    %v2974 = vpop.f32.mrb[0].mxu0
    %v2975 = vadd.f32 %v2686, %v2974
    %v2976 = vpop.f32.mrb[0].mxu0
    %v2977 = vpop.f32.mrb[0].mxu0
    %v2978 = vadd.f32 %v2689, %v2977
    %v2979 = vpop.f32.mrb[0].mxu0
    %2980 = vmatprep.mubr.bf16.mxu0 %v1803
    %2981 = vmatmul.mubr.bf16.gmra.mrb[0].mxu0 %v1802
    %v2982 = vpop.f32.mrb[0].mxu0
    %v2983 = vadd.f32 %v2694, %v2982
    %v2984 = vpop.f32.mrb[0].mxu0
    %v2985 = vpop.f32.mrb[0].mxu0
    %v2986 = vadd.f32 %v2697, %v2985
    %v2987 = vpop.f32.mrb[0].mxu0
    %2988 = vmatprep.mubr.bf16.mxu0 %v1812
    %2989 = vmatmul.mubr.bf16.gmra.mrb[0].mxu0 %v1811
    %v2990 = vpop.f32.mrb[0].mxu0
    %v2991 = vadd.f32 %v2702, %v2990
    %v2992 = vpop.f32.mrb[0].mxu0
    %v2993 = vpop.f32.mrb[0].mxu0
    %v2994 = vadd.f32 %v2705, %v2993
    %v2995 = vpop.f32.mrb[0].mxu0
    %2996 = vmatprep.mubr.bf16.mxu0 %v1821
    %2997 = vmatmul.mubr.bf16.gmra.mrb[0].mxu0 %v1820
    %v2998 = vpop.f32.mrb[0].mxu0
    %v2999 = vadd.f32 %v2710, %v2998
    %v3000 = vpop.f32.mrb[0].mxu0
    %v3001 = vpop.f32.mrb[0].mxu0
    %v3002 = vadd.f32 %v2713, %v3001
    %v3003 = vpop.f32.mrb[0].mxu0
    %3004 = vmatprep.mubr.bf16.mxu0 %v1830
    %3005 = vmatmul.mubr.bf16.gmra.mrb[0].mxu0 %v1829
    %v3006 = vpop.f32.mrb[0].mxu0
    %v3007 = vadd.f32 %v2718, %v3006
    %v3008 = vpop.f32.mrb[0].mxu0
    %v3009 = vpop.f32.mrb[0].mxu0
    %v3010 = vadd.f32 %v2721, %v3009
    %v3011 = vpop.f32.mrb[0].mxu0
    %3012 = vmatprep.mubr.bf16.mxu0 %v1839
    %3013 = vmatmul.mubr.bf16.gmra.mrb[0].mxu0 %v1838
    %v3014 = vpop.f32.mrb[0].mxu0
    %v3015 = vadd.f32 %v2726, %v3014
    %v3016 = vpop.f32.mrb[0].mxu0
    %v3017 = vpop.f32.mrb[0].mxu0
    %v3018 = vadd.f32 %v2729, %v3017
    %v3019 = vpop.f32.mrb[0].mxu0
    %3020 = vmatprep.mubr.bf16.mxu0 %v1848
    %3021 = vmatmul.mubr.bf16.gmra.mrb[0].mxu0 %v1847
    %v3022 = vpop.f32.mrb[0].mxu0
    %v3023 = vadd.f32 %v2734, %v3022
    %v3024 = vpop.f32.mrb[0].mxu0
    %v3025 = vpop.f32.mrb[0].mxu0
    %v3026 = vadd.f32 %v2737, %v3025
    %v3027 = vpop.f32.mrb[0].mxu0
    %3028 = vmatprep.mubr.bf16.mxu0 %v1857
    %3029 = vmatmul.mubr.bf16.gmra.mrb[0].mxu0 %v1856
    %v3030 = vpop.f32.mrb[0].mxu0
    %v3031 = vadd.f32 %v2742, %v3030
    %v3032 = vpop.f32.mrb[0].mxu0
    %v3033 = vpop.f32.mrb[0].mxu0
    %v3034 = vadd.f32 %v2745, %v3033
    %v3035 = vpop.f32.mrb[0].mxu0
    %3036 = vmatprep.mubr.bf16.mxu0 %v1866
    %3037 = vmatmul.mubr.bf16.gmra.mrb[0].mxu0 %v1865
    %v3038 = vpop.f32.mrb[0].mxu0
    %v3039 = vadd.f32 %v2750, %v3038
    %v3040 = vpop.f32.mrb[0].mxu0
    %v3041 = vpop.f32.mrb[0].mxu0
    %v3042 = vadd.f32 %v2753, %v3041
    %v3043 = vpop.f32.mrb[0].mxu0
    %3044 = vmatprep.mubr.bf16.mxu0 %v1875
    %3045 = vmatmul.mubr.bf16.gmra.mrb[0].mxu0 %v1874
    %v3046 = vpop.f32.mrb[0].mxu0
    %v3047 = vadd.f32 %v2758, %v3046
    %v3048 = vpop.f32.mrb[0].mxu0
    %v3049 = vpop.f32.mrb[0].mxu0
    %v3050 = vadd.f32 %v2761, %v3049
    %v3051 = vpop.f32.mrb[0].mxu0
    %3052 = vmatprep.mubr.bf16.mxu0 %v1884
    %3053 = vmatmul.mubr.bf16.gmra.mrb[0].mxu0 %v1883
    %v3054 = vpop.f32.mrb[0].mxu0
    %v3055 = vadd.f32 %v2766, %v3054
    %v3056 = vpop.f32.mrb[0].mxu0
    %v3057 = vpop.f32.mrb[0].mxu0
    %v3058 = vadd.f32 %v2769, %v3057
    %v3059 = vpop.f32.mrb[0].mxu0
    %3060 = vmatprep.mubr.bf16.mxu0 %v1893
    %3061 = vmatmul.mubr.bf16.gmra.mrb[0].mxu0 %v1892
    %v3062 = vpop.f32.mrb[0].mxu0
    %v3063 = vadd.f32 %v2774, %v3062
    %v3064 = vpop.f32.mrb[0].mxu0
    %v3065 = vpop.f32.mrb[0].mxu0
    %v3066 = vadd.f32 %v2777, %v3065
    %v3067 = vpop.f32.mrb[0].mxu0
    %3068 = vmatprep.mubr.bf16.mxu0 %v1902
    %3069 = vmatmul.mubr.bf16.gmra.mrb[0].mxu0 %v1901
    %v3070 = vpop.f32.mrb[0].mxu0
    %v3071 = vadd.f32 %v2782, %v3070
    %v3072 = vpop.f32.mrb[0].mxu0
    %v3073 = vpop.f32.mrb[0].mxu0
    %v3074 = vadd.f32 %v2785, %v3073
    %v3075 = vpop.f32.mrb[0].mxu0
    %3076 = vmatprep.mubr.bf16.mxu0 %v1911
    %3077 = vmatmul.mubr.bf16.gmra.mrb[0].mxu0 %v1910
    %v3078 = vpop.f32.mrb[0].mxu0
    %v3079 = vadd.f32 %v2790, %v3078
    %v3080 = vpop.f32.mrb[0].mxu0
    %v3081 = vpop.f32.mrb[0].mxu0
    %v3082 = vadd.f32 %v2793, %v3081
    %v3083 = vpop.f32.mrb[0].mxu0
    %3084 = vmatprep.mubr.bf16.mxu0 %v1920
    %3085 = vmatmul.mubr.bf16.gmra.mrb[0].mxu0 %v1919
    %v3086 = vpop.f32.mrb[0].mxu0
    %v3087 = vadd.f32 %v2798, %v3086
    %v3088 = vpop.f32.mrb[0].mxu0
    %v3089 = vpop.f32.mrb[0].mxu0
    %v3090 = vadd.f32 %v2801, %v3089
    %v3091 = vpop.f32.mrb[0].mxu0
    %3092 = vmatprep.mubr.bf16.mxu0 %v1929
    %3093 = vmatmul.mubr.bf16.gmra.mrb[0].mxu0 %v1928
    %v3094 = vpop.f32.mrb[0].mxu0
    %v3095 = vadd.f32 %v2806, %v3094
    %v3096 = vpop.f32.mrb[0].mxu0
    %v3097 = vpop.f32.mrb[0].mxu0
    %v3098 = vadd.f32 %v2809, %v3097
    %v3099 = vpop.f32.mrb[0].mxu0
    %3100 = vmatprep.mubr.bf16.mxu0 %v1938
    %3101 = vmatmul.mubr.bf16.gmra.mrb[0].mxu0 %v1937
    %v3102 = vpop.f32.mrb[0].mxu0
    %v3103 = vadd.f32 %v2814, %v3102
    %v3104 = vpop.f32.mrb[0].mxu0
    %v3105 = vpop.f32.mrb[0].mxu0
    %v3106 = vadd.f32 %v2817, %v3105
    %v3107 = vpop.f32.mrb[0].mxu0
    %3108 = vmatprep.mubr.bf16.mxu0 %v1947
    %3109 = vmatmul.mubr.bf16.gmra.mrb[0].mxu0 %v1946
    %v3110 = vpop.f32.mrb[0].mxu0
    %v3111 = vadd.f32 %v2822, %v3110
    %v3112 = vpop.f32.mrb[0].mxu0
    %v3113 = vpop.f32.mrb[0].mxu0
    %v3114 = vadd.f32 %v2825, %v3113
    %v3115 = vpop.f32.mrb[0].mxu0
    %3116 = vmatprep.mubr.bf16.mxu0 %v1956
    %3117 = vmatmul.mubr.bf16.gmra.mrb[0].mxu0 %v1955
    %v3118 = vpop.f32.mrb[0].mxu0
    %v3119 = vadd.f32 %v2830, %v3118
    %v3120 = vpop.f32.mrb[0].mxu0
    %v3121 = vpop.f32.mrb[0].mxu0
    %v3122 = vadd.f32 %v2833, %v3121
    %v3123 = vpop.f32.mrb[0].mxu0
    %3124 = vmatprep.mubr.bf16.mxu0 %v1965
    %3125 = vmatmul.mubr.bf16.gmra.mrb[0].mxu0 %v1964
    %v3126 = vpop.f32.mrb[0].mxu0
    %v3127 = vadd.f32 %v2838, %v3126
    %v3128 = vpop.f32.mrb[0].mxu0
    %v3129 = vpop.f32.mrb[0].mxu0
    %v3130 = vadd.f32 %v2841, %v3129
    %v3131 = vpop.f32.mrb[0].mxu0
    %3132 = vmatprep.mubr.bf16.mxu0 %v1974
    %3133 = vmatmul.mubr.bf16.gmra.mrb[0].mxu0 %v1973
    %v3134 = vpop.f32.mrb[0].mxu0
    %v3135 = vadd.f32 %v2846, %v3134
    %v3136 = vpop.f32.mrb[0].mxu0
    %v3137 = vpop.f32.mrb[0].mxu0
    %v3138 = vadd.f32 %v2849, %v3137
    %v3139 = vpop.f32.mrb[0].mxu0
    %3140 = vmatprep.mubr.bf16.mxu0 %v1983
    %3141 = vmatmul.mubr.bf16.gmra.mrb[0].mxu0 %v1982
    %v3142 = vpop.f32.mrb[0].mxu0
    %v3143 = vadd.f32 %v2854, %v3142
    %v3144 = vpop.f32.mrb[0].mxu0
    %v3145 = vpop.f32.mrb[0].mxu0
    %v3146 = vadd.f32 %v2857, %v3145
    %v3147 = vpop.f32.mrb[0].mxu0
    %3148 = vmatprep.mubr.bf16.mxu0 %v1992
    %3149 = vmatmul.mubr.bf16.gmra.mrb[0].mxu0 %v1991
    %v3150 = vpop.f32.mrb[0].mxu0
    %v3151 = vadd.f32 %v2862, %v3150
    %v3152 = vpop.f32.mrb[0].mxu0
    %v3153 = vpop.f32.mrb[0].mxu0
    %v3154 = vadd.f32 %v2865, %v3153
    %v3155 = vpop.f32.mrb[0].mxu0
    %3156 = vmatprep.mubr.bf16.mxu0 %v2001
    %3157 = vmatmul.mubr.bf16.gmra.mrb[0].mxu0 %v2000
    %v3158 = vpop.f32.mrb[0].mxu0
    %v3159 = vadd.f32 %v2870, %v3158
    %v3160 = vpop.f32.mrb[0].mxu0
    %v3161 = vpop.f32.mrb[0].mxu0
    %v3162 = vadd.f32 %v2873, %v3161
    %v3163 = vpop.f32.mrb[0].mxu0
    %3164 = vmatprep.mubr.bf16.mxu0 %v2010
    %3165 = vmatmul.mubr.bf16.gmra.mrb[0].mxu0 %v2009
    %v3166 = vpop.f32.mrb[0].mxu0
    %v3167 = vadd.f32 %v2878, %v3166
    %v3168 = vpop.f32.mrb[0].mxu0
    %v3169 = vpop.f32.mrb[0].mxu0
    %v3170 = vadd.f32 %v2881, %v3169
    %v3171 = vpop.f32.mrb[0].mxu0
    %3172 = vmatprep.mubr.bf16.mxu0 %v2019
    %3173 = vmatmul.mubr.bf16.gmra.mrb[0].mxu0 %v2018
    %v3174 = vpop.f32.mrb[0].mxu0
    %v3175 = vadd.f32 %v2886, %v3174
    %v3176 = vpop.f32.mrb[0].mxu0
    %v3177 = vpop.f32.mrb[0].mxu0
    %v3178 = vadd.f32 %v2889, %v3177
    %v3179 = vpop.f32.mrb[0].mxu0
    %3180 = vmatprep.mubr.bf16.mxu0 %v2028
    %3181 = vmatmul.mubr.bf16.gmra.mrb[0].mxu0 %v2027
    %v3182 = vpop.f32.mrb[0].mxu0
    %v3183 = vadd.f32 %v2894, %v3182
    %v3184 = vpop.f32.mrb[0].mxu0
    %v3185 = vpop.f32.mrb[0].mxu0
    %v3186 = vadd.f32 %v2897, %v3185
    %v3187 = vpop.f32.mrb[0].mxu0
    %3188 = vmatprep.mubr.bf16.mxu0 %v2037
    %3189 = vmatmul.mubr.bf16.gmra.mrb[0].mxu0 %v2036
    %v3190 = vpop.f32.mrb[0].mxu0
    %v3191 = vadd.f32 %v2902, %v3190
    %v3192 = vpop.f32.mrb[0].mxu0
    %v3193 = vpop.f32.mrb[0].mxu0
    %v3194 = vadd.f32 %v2905, %v3193
    %v3195 = vpop.f32.mrb[0].mxu0
    %3196 = vdwg.mxu0
    %3197 = vmatprep.subr.bf16.mxu0 0
    %3198 = vmatpush1.bf16.msra.mxu0 %v2507
    %3199 = vmatprep.subr.bf16.mxu0 0
    %3200 = vmatpush1.bf16.msra.mxu0 %v2508
    %3201 = vmatprep.subr.bf16.mxu0 0
    %3202 = vmatpush1.bf16.msra.mxu0 %v2509
    %3203 = vmatprep.subr.bf16.mxu0 0
    %3204 = vmatpush1.bf16.msra.mxu0 %v2510
    %3205 = vmatprep.subr.bf16.mxu0 0
    %3206 = vmatpush1.bf16.msra.mxu0 %v2511
    %3207 = vmatprep.subr.bf16.mxu0 0
    %3208 = vmatpush1.bf16.msra.mxu0 %v2512
    %3209 = vmatprep.subr.bf16.mxu0 0
    %3210 = vmatpush1.bf16.msra.mxu0 %v2513
    %3211 = vmatprep.subr.bf16.mxu0 0
    %3212 = vmatpush1.bf16.msra.mxu0 %v2514
    %3213 = vmatprep.subr.bf16.mxu0 0
    %3214 = vmatpush1.bf16.msra.mxu0 %v2515
    %3215 = vmatprep.subr.bf16.mxu0 0
    %3216 = vmatpush1.bf16.msra.mxu0 %v2516
    %3217 = vmatprep.subr.bf16.mxu0 0
    %3218 = vmatpush1.bf16.msra.mxu0 %v2517
    %3219 = vmatprep.subr.bf16.mxu0 0
    %3220 = vmatpush1.bf16.msra.mxu0 %v2518
    %3221 = vmatprep.subr.bf16.mxu0 0
    %3222 = vmatpush1.bf16.msra.mxu0 %v2519
    %3223 = vmatprep.subr.bf16.mxu0 0
    %3224 = vmatpush1.bf16.msra.mxu0 %v2520
    %3225 = vmatprep.subr.bf16.mxu0 0
    %3226 = vmatpush1.bf16.msra.mxu0 %v2521
    %3227 = vmatprep.subr.bf16.mxu0 0
    %3228 = vmatpush1.bf16.msra.mxu0 %v2522
    %3229 = vmatprep.mubr.bf16.mxu0 %v1760
    %3230 = vmatmul.mubr.bf16.gmra.mrb[0].mxu0 %v1759
    %v3231 = vpop.f32.mrb[0].mxu0
    %v3232 = vadd.f32 %v2943, %v3231
    %v3233 = vpop.f32.mrb[0].mxu0
    %v3234 = vpop.f32.mrb[0].mxu0
    %v3235 = vadd.f32 %v2946, %v3234
    %v3236 = vpop.f32.mrb[0].mxu0
    %3237 = vmatprep.mubr.bf16.mxu0 %v1769
    %3238 = vmatmul.mubr.bf16.gmra.mrb[0].mxu0 %v1768
    %v3239 = vpop.f32.mrb[0].mxu0
    %v3240 = vadd.f32 %v2951, %v3239
    %v3241 = vpop.f32.mrb[0].mxu0
    %v3242 = vpop.f32.mrb[0].mxu0
    %v3243 = vadd.f32 %v2954, %v3242
    %v3244 = vpop.f32.mrb[0].mxu0
    %3245 = vmatprep.mubr.bf16.mxu0 %v1778
    %3246 = vmatmul.mubr.bf16.gmra.mrb[0].mxu0 %v1777
    %v3247 = vpop.f32.mrb[0].mxu0
    %v3248 = vadd.f32 %v2959, %v3247
    %v3249 = vpop.f32.mrb[0].mxu0
    %v3250 = vpop.f32.mrb[0].mxu0
    %v3251 = vadd.f32 %v2962, %v3250
    %v3252 = vpop.f32.mrb[0].mxu0
    %3253 = vmatprep.mubr.bf16.mxu0 %v1787
    %3254 = vmatmul.mubr.bf16.gmra.mrb[0].mxu0 %v1786
    %v3255 = vpop.f32.mrb[0].mxu0
    %v3256 = vadd.f32 %v2967, %v3255
    %v3257 = vpop.f32.mrb[0].mxu0
    %v3258 = vpop.f32.mrb[0].mxu0
    %v3259 = vadd.f32 %v2970, %v3258
    %v3260 = vpop.f32.mrb[0].mxu0
    %3261 = vmatprep.mubr.bf16.mxu0 %v1796
    %3262 = vmatmul.mubr.bf16.gmra.mrb[0].mxu0 %v1795
    %v3263 = vpop.f32.mrb[0].mxu0
    %v3264 = vadd.f32 %v2975, %v3263
    %v3265 = vpop.f32.mrb[0].mxu0
    %v3266 = vpop.f32.mrb[0].mxu0
    %v3267 = vadd.f32 %v2978, %v3266
    %v3268 = vpop.f32.mrb[0].mxu0
    %3269 = vmatprep.mubr.bf16.mxu0 %v1805
    %3270 = vmatmul.mubr.bf16.gmra.mrb[0].mxu0 %v1804
    %v3271 = vpop.f32.mrb[0].mxu0
    %v3272 = vadd.f32 %v2983, %v3271
    %v3273 = vpop.f32.mrb[0].mxu0
    %v3274 = vpop.f32.mrb[0].mxu0
    %v3275 = vadd.f32 %v2986, %v3274
    %v3276 = vpop.f32.mrb[0].mxu0
    %3277 = vmatprep.mubr.bf16.mxu0 %v1814
    %3278 = vmatmul.mubr.bf16.gmra.mrb[0].mxu0 %v1813
    %v3279 = vpop.f32.mrb[0].mxu0
    %v3280 = vadd.f32 %v2991, %v3279
    %v3281 = vpop.f32.mrb[0].mxu0
    %v3282 = vpop.f32.mrb[0].mxu0
    %v3283 = vadd.f32 %v2994, %v3282
    %v3284 = vpop.f32.mrb[0].mxu0
    %3285 = vmatprep.mubr.bf16.mxu0 %v1823
    %3286 = vmatmul.mubr.bf16.gmra.mrb[0].mxu0 %v1822
    %v3287 = vpop.f32.mrb[0].mxu0
    %v3288 = vadd.f32 %v2999, %v3287
    %v3289 = vpop.f32.mrb[0].mxu0
    %v3290 = vpop.f32.mrb[0].mxu0
    %v3291 = vadd.f32 %v3002, %v3290
    %v3292 = vpop.f32.mrb[0].mxu0
    %3293 = vmatprep.mubr.bf16.mxu0 %v1832
    %3294 = vmatmul.mubr.bf16.gmra.mrb[0].mxu0 %v1831
    %v3295 = vpop.f32.mrb[0].mxu0
    %v3296 = vadd.f32 %v3007, %v3295
    %v3297 = vpop.f32.mrb[0].mxu0
    %v3298 = vpop.f32.mrb[0].mxu0
    %v3299 = vadd.f32 %v3010, %v3298
    %v3300 = vpop.f32.mrb[0].mxu0
    %3301 = vmatprep.mubr.bf16.mxu0 %v1841
    %3302 = vmatmul.mubr.bf16.gmra.mrb[0].mxu0 %v1840
    %v3303 = vpop.f32.mrb[0].mxu0
    %v3304 = vadd.f32 %v3015, %v3303
    %v3305 = vpop.f32.mrb[0].mxu0
    %v3306 = vpop.f32.mrb[0].mxu0
    %v3307 = vadd.f32 %v3018, %v3306
    %v3308 = vpop.f32.mrb[0].mxu0
    %3309 = vmatprep.mubr.bf16.mxu0 %v1850
    %3310 = vmatmul.mubr.bf16.gmra.mrb[0].mxu0 %v1849
    %v3311 = vpop.f32.mrb[0].mxu0
    %v3312 = vadd.f32 %v3023, %v3311
    %v3313 = vpop.f32.mrb[0].mxu0
    %v3314 = vpop.f32.mrb[0].mxu0
    %v3315 = vadd.f32 %v3026, %v3314
    %v3316 = vpop.f32.mrb[0].mxu0
    %3317 = vmatprep.mubr.bf16.mxu0 %v1859
    %3318 = vmatmul.mubr.bf16.gmra.mrb[0].mxu0 %v1858
    %v3319 = vpop.f32.mrb[0].mxu0
    %v3320 = vadd.f32 %v3031, %v3319
    %v3321 = vpop.f32.mrb[0].mxu0
    %v3322 = vpop.f32.mrb[0].mxu0
    %v3323 = vadd.f32 %v3034, %v3322
    %v3324 = vpop.f32.mrb[0].mxu0
    %3325 = vmatprep.mubr.bf16.mxu0 %v1868
    %3326 = vmatmul.mubr.bf16.gmra.mrb[0].mxu0 %v1867
    %v3327 = vpop.f32.mrb[0].mxu0
    %v3328 = vadd.f32 %v3039, %v3327
    %v3329 = vpop.f32.mrb[0].mxu0
    %v3330 = vpop.f32.mrb[0].mxu0
    %v3331 = vadd.f32 %v3042, %v3330
    %v3332 = vpop.f32.mrb[0].mxu0
    %3333 = vmatprep.mubr.bf16.mxu0 %v1877
    %3334 = vmatmul.mubr.bf16.gmra.mrb[0].mxu0 %v1876
    %v3335 = vpop.f32.mrb[0].mxu0
    %v3336 = vadd.f32 %v3047, %v3335
    %v3337 = vpop.f32.mrb[0].mxu0
    %v3338 = vpop.f32.mrb[0].mxu0
    %v3339 = vadd.f32 %v3050, %v3338
    %v3340 = vpop.f32.mrb[0].mxu0
    %3341 = vmatprep.mubr.bf16.mxu0 %v1886
    %3342 = vmatmul.mubr.bf16.gmra.mrb[0].mxu0 %v1885
    %v3343 = vpop.f32.mrb[0].mxu0
    %v3344 = vadd.f32 %v3055, %v3343
    %v3345 = vpop.f32.mrb[0].mxu0
    %v3346 = vpop.f32.mrb[0].mxu0
    %v3347 = vadd.f32 %v3058, %v3346
    %v3348 = vpop.f32.mrb[0].mxu0
    %3349 = vmatprep.mubr.bf16.mxu0 %v1895
    %3350 = vmatmul.mubr.bf16.gmra.mrb[0].mxu0 %v1894
    %v3351 = vpop.f32.mrb[0].mxu0
    %v3352 = vadd.f32 %v3063, %v3351
    %v3353 = vpop.f32.mrb[0].mxu0
    %v3354 = vpop.f32.mrb[0].mxu0
    %v3355 = vadd.f32 %v3066, %v3354
    %v3356 = vpop.f32.mrb[0].mxu0
    %3357 = vmatprep.mubr.bf16.mxu0 %v1904
    %3358 = vmatmul.mubr.bf16.gmra.mrb[0].mxu0 %v1903
    %v3359 = vpop.f32.mrb[0].mxu0
    %v3360 = vadd.f32 %v3071, %v3359
    %v3361 = vpop.f32.mrb[0].mxu0
    %v3362 = vpop.f32.mrb[0].mxu0
    %v3363 = vadd.f32 %v3074, %v3362
    %v3364 = vpop.f32.mrb[0].mxu0
    %3365 = vmatprep.mubr.bf16.mxu0 %v1913
    %3366 = vmatmul.mubr.bf16.gmra.mrb[0].mxu0 %v1912
    %v3367 = vpop.f32.mrb[0].mxu0
    %v3368 = vadd.f32 %v3079, %v3367
    %v3369 = vpop.f32.mrb[0].mxu0
    %v3370 = vpop.f32.mrb[0].mxu0
    %v3371 = vadd.f32 %v3082, %v3370
    %v3372 = vpop.f32.mrb[0].mxu0
    %3373 = vmatprep.mubr.bf16.mxu0 %v1922
    %3374 = vmatmul.mubr.bf16.gmra.mrb[0].mxu0 %v1921
    %v3375 = vpop.f32.mrb[0].mxu0
    %v3376 = vadd.f32 %v3087, %v3375
    %v3377 = vpop.f32.mrb[0].mxu0
    %v3378 = vpop.f32.mrb[0].mxu0
    %v3379 = vadd.f32 %v3090, %v3378
    %v3380 = vpop.f32.mrb[0].mxu0
    %3381 = vmatprep.mubr.bf16.mxu0 %v1931
    %3382 = vmatmul.mubr.bf16.gmra.mrb[0].mxu0 %v1930
    %v3383 = vpop.f32.mrb[0].mxu0
    %v3384 = vadd.f32 %v3095, %v3383
    %v3385 = vpop.f32.mrb[0].mxu0
    %v3386 = vpop.f32.mrb[0].mxu0
    %v3387 = vadd.f32 %v3098, %v3386
    %v3388 = vpop.f32.mrb[0].mxu0
    %3389 = vmatprep.mubr.bf16.mxu0 %v1940
    %3390 = vmatmul.mubr.bf16.gmra.mrb[0].mxu0 %v1939
    %v3391 = vpop.f32.mrb[0].mxu0
    %v3392 = vadd.f32 %v3103, %v3391
    %v3393 = vpop.f32.mrb[0].mxu0
    %v3394 = vpop.f32.mrb[0].mxu0
    %v3395 = vadd.f32 %v3106, %v3394
    %v3396 = vpop.f32.mrb[0].mxu0
    %3397 = vmatprep.mubr.bf16.mxu0 %v1949
    %3398 = vmatmul.mubr.bf16.gmra.mrb[0].mxu0 %v1948
    %v3399 = vpop.f32.mrb[0].mxu0
    %v3400 = vadd.f32 %v3111, %v3399
    %v3401 = vpop.f32.mrb[0].mxu0
    %v3402 = vpop.f32.mrb[0].mxu0
    %v3403 = vadd.f32 %v3114, %v3402
    %v3404 = vpop.f32.mrb[0].mxu0
    %3405 = vmatprep.mubr.bf16.mxu0 %v1958
    %3406 = vmatmul.mubr.bf16.gmra.mrb[0].mxu0 %v1957
    %v3407 = vpop.f32.mrb[0].mxu0
    %v3408 = vadd.f32 %v3119, %v3407
    %v3409 = vpop.f32.mrb[0].mxu0
    %v3410 = vpop.f32.mrb[0].mxu0
    %v3411 = vadd.f32 %v3122, %v3410
    %v3412 = vpop.f32.mrb[0].mxu0
    %3413 = vmatprep.mubr.bf16.mxu0 %v1967
    %3414 = vmatmul.mubr.bf16.gmra.mrb[0].mxu0 %v1966
    %v3415 = vpop.f32.mrb[0].mxu0
    %v3416 = vadd.f32 %v3127, %v3415
    %v3417 = vpop.f32.mrb[0].mxu0
    %v3418 = vpop.f32.mrb[0].mxu0
    %v3419 = vadd.f32 %v3130, %v3418
    %v3420 = vpop.f32.mrb[0].mxu0
    %3421 = vmatprep.mubr.bf16.mxu0 %v1976
    %3422 = vmatmul.mubr.bf16.gmra.mrb[0].mxu0 %v1975
    %v3423 = vpop.f32.mrb[0].mxu0
    %v3424 = vadd.f32 %v3135, %v3423
    %v3425 = vpop.f32.mrb[0].mxu0
    %v3426 = vpop.f32.mrb[0].mxu0
    %v3427 = vadd.f32 %v3138, %v3426
    %v3428 = vpop.f32.mrb[0].mxu0
    %3429 = vmatprep.mubr.bf16.mxu0 %v1985
    %3430 = vmatmul.mubr.bf16.gmra.mrb[0].mxu0 %v1984
    %v3431 = vpop.f32.mrb[0].mxu0
    %v3432 = vadd.f32 %v3143, %v3431
    %v3433 = vpop.f32.mrb[0].mxu0
    %v3434 = vpop.f32.mrb[0].mxu0
    %v3435 = vadd.f32 %v3146, %v3434
    %v3436 = vpop.f32.mrb[0].mxu0
    %3437 = vmatprep.mubr.bf16.mxu0 %v1994
    %3438 = vmatmul.mubr.bf16.gmra.mrb[0].mxu0 %v1993
    %v3439 = vpop.f32.mrb[0].mxu0
    %v3440 = vadd.f32 %v3151, %v3439
    %v3441 = vpop.f32.mrb[0].mxu0
    %v3442 = vpop.f32.mrb[0].mxu0
    %v3443 = vadd.f32 %v3154, %v3442
    %v3444 = vpop.f32.mrb[0].mxu0
    %3445 = vmatprep.mubr.bf16.mxu0 %v2003
    %3446 = vmatmul.mubr.bf16.gmra.mrb[0].mxu0 %v2002
    %v3447 = vpop.f32.mrb[0].mxu0
    %v3448 = vadd.f32 %v3159, %v3447
    %v3449 = vpop.f32.mrb[0].mxu0
    %v3450 = vpop.f32.mrb[0].mxu0
    %v3451 = vadd.f32 %v3162, %v3450
    %v3452 = vpop.f32.mrb[0].mxu0
    %3453 = vmatprep.mubr.bf16.mxu0 %v2012
    %3454 = vmatmul.mubr.bf16.gmra.mrb[0].mxu0 %v2011
    %v3455 = vpop.f32.mrb[0].mxu0
    %v3456 = vadd.f32 %v3167, %v3455
    %v3457 = vpop.f32.mrb[0].mxu0
    %v3458 = vpop.f32.mrb[0].mxu0
    %v3459 = vadd.f32 %v3170, %v3458
    %v3460 = vpop.f32.mrb[0].mxu0
    %3461 = vmatprep.mubr.bf16.mxu0 %v2021
    %3462 = vmatmul.mubr.bf16.gmra.mrb[0].mxu0 %v2020
    %v3463 = vpop.f32.mrb[0].mxu0
    %v3464 = vadd.f32 %v3175, %v3463
    %v3465 = vpop.f32.mrb[0].mxu0
    %v3466 = vpop.f32.mrb[0].mxu0
    %v3467 = vadd.f32 %v3178, %v3466
    %v3468 = vpop.f32.mrb[0].mxu0
    %3469 = vmatprep.mubr.bf16.mxu0 %v2030
    %3470 = vmatmul.mubr.bf16.gmra.mrb[0].mxu0 %v2029
    %v3471 = vpop.f32.mrb[0].mxu0
    %v3472 = vadd.f32 %v3183, %v3471
    %v3473 = vpop.f32.mrb[0].mxu0
    %v3474 = vpop.f32.mrb[0].mxu0
    %v3475 = vadd.f32 %v3186, %v3474
    %v3476 = vpop.f32.mrb[0].mxu0
    %3477 = vmatprep.mubr.bf16.mxu0 %v2039
    %3478 = vmatmul.mubr.bf16.gmra.mrb[0].mxu0 %v2038
    %v3479 = vpop.f32.mrb[0].mxu0
    %v3480 = vadd.f32 %v3191, %v3479
    %v3481 = vpop.f32.mrb[0].mxu0
    %v3482 = vpop.f32.mrb[0].mxu0
    %v3483 = vadd.f32 %v3194, %v3482
    %v3484 = vpop.f32.mrb[0].mxu0
    %3485 = vdwg.mxu0
    %3486 = vmatprep.subr.bf16.mxu0 0
    %3487 = vmatpush1.bf16.msra.mxu0 %v2523
    %3488 = vmatprep.subr.bf16.mxu0 0
    %3489 = vmatpush1.bf16.msra.mxu0 %v2524
    %3490 = vmatprep.subr.bf16.mxu0 0
    %3491 = vmatpush1.bf16.msra.mxu0 %v2525
    %3492 = vmatprep.subr.bf16.mxu0 0
    %3493 = vmatpush1.bf16.msra.mxu0 %v2526
    %3494 = vmatprep.subr.bf16.mxu0 0
    %3495 = vmatpush1.bf16.msra.mxu0 %v2527
    %3496 = vmatprep.subr.bf16.mxu0 0
    %3497 = vmatpush1.bf16.msra.mxu0 %v2528
    %3498 = vmatprep.subr.bf16.mxu0 0
    %3499 = vmatpush1.bf16.msra.mxu0 %v2529
    %3500 = vmatprep.subr.bf16.mxu0 0
    %3501 = vmatpush1.bf16.msra.mxu0 %v2530
    %3502 = vmatprep.subr.bf16.mxu0 0
    %3503 = vmatpush1.bf16.msra.mxu0 %v2531
    %3504 = vmatprep.subr.bf16.mxu0 0
    %3505 = vmatpush1.bf16.msra.mxu0 %v2532
    %3506 = vmatprep.subr.bf16.mxu0 0
    %3507 = vmatpush1.bf16.msra.mxu0 %v2533
    %3508 = vmatprep.subr.bf16.mxu0 0
    %3509 = vmatpush1.bf16.msra.mxu0 %v2534
    %3510 = vmatprep.subr.bf16.mxu0 0
    %3511 = vmatpush1.bf16.msra.mxu0 %v2535
    %3512 = vmatprep.subr.bf16.mxu0 0
    %3513 = vmatpush1.bf16.msra.mxu0 %v2536
    %3514 = vmatprep.subr.bf16.mxu0 0
    %3515 = vmatpush1.bf16.msra.mxu0 %v2537
    %3516 = vmatprep.subr.bf16.mxu0 0
    %3517 = vmatpush1.bf16.msra.mxu0 %v2538
    %3518 = vmatprep.mubr.bf16.mxu0 %v1762
    %3519 = vmatmul.mubr.bf16.gmra.mrb[0].mxu0 %v1761
    %v3520 = vpop.f32.mrb[0].mxu0
    %v3521 = vadd.f32 %v3232, %v3520
    %v3522 = vpop.f32.mrb[0].mxu0
    %v3523 = vpop.f32.mrb[0].mxu0
    %v3524 = vadd.f32 %v3235, %v3523
    %v3525 = vpop.f32.mrb[0].mxu0
    %3526 = vmatprep.mubr.bf16.mxu0 %v1771
    %3527 = vmatmul.mubr.bf16.gmra.mrb[0].mxu0 %v1770
    %v3528 = vpop.f32.mrb[0].mxu0
    %v3529 = vadd.f32 %v3240, %v3528
    %v3530 = vpop.f32.mrb[0].mxu0
    %v3531 = vpop.f32.mrb[0].mxu0
    %v3532 = vadd.f32 %v3243, %v3531
    %v3533 = vpop.f32.mrb[0].mxu0
    %3534 = vmatprep.mubr.bf16.mxu0 %v1780
    %3535 = vmatmul.mubr.bf16.gmra.mrb[0].mxu0 %v1779
    %v3536 = vpop.f32.mrb[0].mxu0
    %v3537 = vadd.f32 %v3248, %v3536
    %v3538 = vpop.f32.mrb[0].mxu0
    %v3539 = vpop.f32.mrb[0].mxu0
    %v3540 = vadd.f32 %v3251, %v3539
    %v3541 = vpop.f32.mrb[0].mxu0
    %3542 = vmatprep.mubr.bf16.mxu0 %v1789
    %3543 = vmatmul.mubr.bf16.gmra.mrb[0].mxu0 %v1788
    %v3544 = vpop.f32.mrb[0].mxu0
    %v3545 = vadd.f32 %v3256, %v3544
    %v3546 = vpop.f32.mrb[0].mxu0
    %v3547 = vpop.f32.mrb[0].mxu0
    %v3548 = vadd.f32 %v3259, %v3547
    %v3549 = vpop.f32.mrb[0].mxu0
    %3550 = vmatprep.mubr.bf16.mxu0 %v1798
    %3551 = vmatmul.mubr.bf16.gmra.mrb[0].mxu0 %v1797
    %v3552 = vpop.f32.mrb[0].mxu0
    %v3553 = vadd.f32 %v3264, %v3552
    %v3554 = vpop.f32.mrb[0].mxu0
    %v3555 = vpop.f32.mrb[0].mxu0
    %v3556 = vadd.f32 %v3267, %v3555
    %v3557 = vpop.f32.mrb[0].mxu0
    %3558 = vmatprep.mubr.bf16.mxu0 %v1807
    %3559 = vmatmul.mubr.bf16.gmra.mrb[0].mxu0 %v1806
    %v3560 = vpop.f32.mrb[0].mxu0
    %v3561 = vadd.f32 %v3272, %v3560
    %v3562 = vpop.f32.mrb[0].mxu0
    %v3563 = vpop.f32.mrb[0].mxu0
    %v3564 = vadd.f32 %v3275, %v3563
    %v3565 = vpop.f32.mrb[0].mxu0
    %3566 = vmatprep.mubr.bf16.mxu0 %v1816
    %3567 = vmatmul.mubr.bf16.gmra.mrb[0].mxu0 %v1815
    %v3568 = vpop.f32.mrb[0].mxu0
    %v3569 = vadd.f32 %v3280, %v3568
    %v3570 = vpop.f32.mrb[0].mxu0
    %v3571 = vpop.f32.mrb[0].mxu0
    %v3572 = vadd.f32 %v3283, %v3571
    %v3573 = vpop.f32.mrb[0].mxu0
    %3574 = vmatprep.mubr.bf16.mxu0 %v1825
    %3575 = vmatmul.mubr.bf16.gmra.mrb[0].mxu0 %v1824
    %v3576 = vpop.f32.mrb[0].mxu0
    %v3577 = vadd.f32 %v3288, %v3576
    %v3578 = vpop.f32.mrb[0].mxu0
    %v3579 = vpop.f32.mrb[0].mxu0
    %v3580 = vadd.f32 %v3291, %v3579
    %v3581 = vpop.f32.mrb[0].mxu0
    %3582 = vmatprep.mubr.bf16.mxu0 %v1834
    %3583 = vmatmul.mubr.bf16.gmra.mrb[0].mxu0 %v1833
    %v3584 = vpop.f32.mrb[0].mxu0
    %v3585 = vadd.f32 %v3296, %v3584
    %v3586 = vpop.f32.mrb[0].mxu0
    %v3587 = vpop.f32.mrb[0].mxu0
    %v3588 = vadd.f32 %v3299, %v3587
    %v3589 = vpop.f32.mrb[0].mxu0
    %3590 = vmatprep.mubr.bf16.mxu0 %v1843
    %3591 = vmatmul.mubr.bf16.gmra.mrb[0].mxu0 %v1842
    %v3592 = vpop.f32.mrb[0].mxu0
    %v3593 = vadd.f32 %v3304, %v3592
    %v3594 = vpop.f32.mrb[0].mxu0
    %v3595 = vpop.f32.mrb[0].mxu0
    %v3596 = vadd.f32 %v3307, %v3595
    %v3597 = vpop.f32.mrb[0].mxu0
    %3598 = vmatprep.mubr.bf16.mxu0 %v1852
    %3599 = vmatmul.mubr.bf16.gmra.mrb[0].mxu0 %v1851
    %v3600 = vpop.f32.mrb[0].mxu0
    %v3601 = vadd.f32 %v3312, %v3600
    %v3602 = vpop.f32.mrb[0].mxu0
    %v3603 = vpop.f32.mrb[0].mxu0
    %v3604 = vadd.f32 %v3315, %v3603
    %v3605 = vpop.f32.mrb[0].mxu0
    %3606 = vmatprep.mubr.bf16.mxu0 %v1861
    %3607 = vmatmul.mubr.bf16.gmra.mrb[0].mxu0 %v1860
    %v3608 = vpop.f32.mrb[0].mxu0
    %v3609 = vadd.f32 %v3320, %v3608
    %v3610 = vpop.f32.mrb[0].mxu0
    %v3611 = vpop.f32.mrb[0].mxu0
    %v3612 = vadd.f32 %v3323, %v3611
    %v3613 = vpop.f32.mrb[0].mxu0
    %3614 = vmatprep.mubr.bf16.mxu0 %v1870
    %3615 = vmatmul.mubr.bf16.gmra.mrb[0].mxu0 %v1869
    %v3616 = vpop.f32.mrb[0].mxu0
    %v3617 = vadd.f32 %v3328, %v3616
    %v3618 = vpop.f32.mrb[0].mxu0
    %v3619 = vpop.f32.mrb[0].mxu0
    %v3620 = vadd.f32 %v3331, %v3619
    %v3621 = vpop.f32.mrb[0].mxu0
    %3622 = vmatprep.mubr.bf16.mxu0 %v1879
    %3623 = vmatmul.mubr.bf16.gmra.mrb[0].mxu0 %v1878
    %v3624 = vpop.f32.mrb[0].mxu0
    %v3625 = vadd.f32 %v3336, %v3624
    %v3626 = vpop.f32.mrb[0].mxu0
    %v3627 = vpop.f32.mrb[0].mxu0
    %v3628 = vadd.f32 %v3339, %v3627
    %v3629 = vpop.f32.mrb[0].mxu0
    %3630 = vmatprep.mubr.bf16.mxu0 %v1888
    %3631 = vmatmul.mubr.bf16.gmra.mrb[0].mxu0 %v1887
    %v3632 = vpop.f32.mrb[0].mxu0
    %v3633 = vadd.f32 %v3344, %v3632
    %v3634 = vpop.f32.mrb[0].mxu0
    %v3635 = vpop.f32.mrb[0].mxu0
    %v3636 = vadd.f32 %v3347, %v3635
    %v3637 = vpop.f32.mrb[0].mxu0
    %3638 = vmatprep.mubr.bf16.mxu0 %v1897
    %3639 = vmatmul.mubr.bf16.gmra.mrb[0].mxu0 %v1896
    %v3640 = vpop.f32.mrb[0].mxu0
    %v3641 = vadd.f32 %v3352, %v3640
    %v3642 = vpop.f32.mrb[0].mxu0
    %v3643 = vpop.f32.mrb[0].mxu0
    %v3644 = vadd.f32 %v3355, %v3643
    %v3645 = vpop.f32.mrb[0].mxu0
    %3646 = vmatprep.mubr.bf16.mxu0 %v1906
    %3647 = vmatmul.mubr.bf16.gmra.mrb[0].mxu0 %v1905
    %v3648 = vpop.f32.mrb[0].mxu0
    %v3649 = vadd.f32 %v3360, %v3648
    %v3650 = vpop.f32.mrb[0].mxu0
    %v3651 = vpop.f32.mrb[0].mxu0
    %v3652 = vadd.f32 %v3363, %v3651
    %v3653 = vpop.f32.mrb[0].mxu0
    %3654 = vmatprep.mubr.bf16.mxu0 %v1915
    %3655 = vmatmul.mubr.bf16.gmra.mrb[0].mxu0 %v1914
    %v3656 = vpop.f32.mrb[0].mxu0
    %v3657 = vadd.f32 %v3368, %v3656
    %v3658 = vpop.f32.mrb[0].mxu0
    %v3659 = vpop.f32.mrb[0].mxu0
    %v3660 = vadd.f32 %v3371, %v3659
    %v3661 = vpop.f32.mrb[0].mxu0
    %3662 = vmatprep.mubr.bf16.mxu0 %v1924
    %3663 = vmatmul.mubr.bf16.gmra.mrb[0].mxu0 %v1923
    %v3664 = vpop.f32.mrb[0].mxu0
    %v3665 = vadd.f32 %v3376, %v3664
    %v3666 = vpop.f32.mrb[0].mxu0
    %v3667 = vpop.f32.mrb[0].mxu0
    %v3668 = vadd.f32 %v3379, %v3667
    %v3669 = vpop.f32.mrb[0].mxu0
    %3670 = vmatprep.mubr.bf16.mxu0 %v1933
    %3671 = vmatmul.mubr.bf16.gmra.mrb[0].mxu0 %v1932
    %v3672 = vpop.f32.mrb[0].mxu0
    %v3673 = vadd.f32 %v3384, %v3672
    %v3674 = vpop.f32.mrb[0].mxu0
    %v3675 = vpop.f32.mrb[0].mxu0
    %v3676 = vadd.f32 %v3387, %v3675
    %v3677 = vpop.f32.mrb[0].mxu0
    %3678 = vmatprep.mubr.bf16.mxu0 %v1942
    %3679 = vmatmul.mubr.bf16.gmra.mrb[0].mxu0 %v1941
    %v3680 = vpop.f32.mrb[0].mxu0
    %v3681 = vadd.f32 %v3392, %v3680
    %v3682 = vpop.f32.mrb[0].mxu0
    %v3683 = vpop.f32.mrb[0].mxu0
    %v3684 = vadd.f32 %v3395, %v3683
    %v3685 = vpop.f32.mrb[0].mxu0
    %3686 = vmatprep.mubr.bf16.mxu0 %v1951
    %3687 = vmatmul.mubr.bf16.gmra.mrb[0].mxu0 %v1950
    %v3688 = vpop.f32.mrb[0].mxu0
    %v3689 = vadd.f32 %v3400, %v3688
    %v3690 = vpop.f32.mrb[0].mxu0
    %v3691 = vpop.f32.mrb[0].mxu0
    %v3692 = vadd.f32 %v3403, %v3691
    %v3693 = vpop.f32.mrb[0].mxu0
    %3694 = vmatprep.mubr.bf16.mxu0 %v1960
    %3695 = vmatmul.mubr.bf16.gmra.mrb[0].mxu0 %v1959
    %v3696 = vpop.f32.mrb[0].mxu0
    %v3697 = vadd.f32 %v3408, %v3696
    %v3698 = vpop.f32.mrb[0].mxu0
    %v3699 = vpop.f32.mrb[0].mxu0
    %v3700 = vadd.f32 %v3411, %v3699
    %v3701 = vpop.f32.mrb[0].mxu0
    %3702 = vmatprep.mubr.bf16.mxu0 %v1969
    %3703 = vmatmul.mubr.bf16.gmra.mrb[0].mxu0 %v1968
    %v3704 = vpop.f32.mrb[0].mxu0
    %v3705 = vadd.f32 %v3416, %v3704
    %v3706 = vpop.f32.mrb[0].mxu0
    %v3707 = vpop.f32.mrb[0].mxu0
    %v3708 = vadd.f32 %v3419, %v3707
    %v3709 = vpop.f32.mrb[0].mxu0
    %3710 = vmatprep.mubr.bf16.mxu0 %v1978
    %3711 = vmatmul.mubr.bf16.gmra.mrb[0].mxu0 %v1977
    %v3712 = vpop.f32.mrb[0].mxu0
    %v3713 = vadd.f32 %v3424, %v3712
    %v3714 = vpop.f32.mrb[0].mxu0
    %v3715 = vpop.f32.mrb[0].mxu0
    %v3716 = vadd.f32 %v3427, %v3715
    %v3717 = vpop.f32.mrb[0].mxu0
    %3718 = vmatprep.mubr.bf16.mxu0 %v1987
    %3719 = vmatmul.mubr.bf16.gmra.mrb[0].mxu0 %v1986
    %v3720 = vpop.f32.mrb[0].mxu0
    %v3721 = vadd.f32 %v3432, %v3720
    %v3722 = vpop.f32.mrb[0].mxu0
    %v3723 = vpop.f32.mrb[0].mxu0
    %v3724 = vadd.f32 %v3435, %v3723
    %v3725 = vpop.f32.mrb[0].mxu0
    %3726 = vmatprep.mubr.bf16.mxu0 %v1996
    %3727 = vmatmul.mubr.bf16.gmra.mrb[0].mxu0 %v1995
    %v3728 = vpop.f32.mrb[0].mxu0
    %v3729 = vadd.f32 %v3440, %v3728
    %v3730 = vpop.f32.mrb[0].mxu0
    %v3731 = vpop.f32.mrb[0].mxu0
    %v3732 = vadd.f32 %v3443, %v3731
    %v3733 = vpop.f32.mrb[0].mxu0
    %3734 = vmatprep.mubr.bf16.mxu0 %v2005
    %3735 = vmatmul.mubr.bf16.gmra.mrb[0].mxu0 %v2004
    %v3736 = vpop.f32.mrb[0].mxu0
    %v3737 = vadd.f32 %v3448, %v3736
    %v3738 = vpop.f32.mrb[0].mxu0
    %v3739 = vpop.f32.mrb[0].mxu0
    %v3740 = vadd.f32 %v3451, %v3739
    %v3741 = vpop.f32.mrb[0].mxu0
    %3742 = vmatprep.mubr.bf16.mxu0 %v2014
    %3743 = vmatmul.mubr.bf16.gmra.mrb[0].mxu0 %v2013
    %v3744 = vpop.f32.mrb[0].mxu0
    %v3745 = vadd.f32 %v3456, %v3744
    %v3746 = vpop.f32.mrb[0].mxu0
    %v3747 = vpop.f32.mrb[0].mxu0
    %v3748 = vadd.f32 %v3459, %v3747
    %v3749 = vpop.f32.mrb[0].mxu0
    %3750 = vmatprep.mubr.bf16.mxu0 %v2023
    %3751 = vmatmul.mubr.bf16.gmra.mrb[0].mxu0 %v2022
    %v3752 = vpop.f32.mrb[0].mxu0
    %v3753 = vadd.f32 %v3464, %v3752
    %v3754 = vpop.f32.mrb[0].mxu0
    %v3755 = vpop.f32.mrb[0].mxu0
    %v3756 = vadd.f32 %v3467, %v3755
    %v3757 = vpop.f32.mrb[0].mxu0
    %3758 = vmatprep.mubr.bf16.mxu0 %v2032
    %3759 = vmatmul.mubr.bf16.gmra.mrb[0].mxu0 %v2031
    %v3760 = vpop.f32.mrb[0].mxu0
    %v3761 = vadd.f32 %v3472, %v3760
    %v3762 = vpop.f32.mrb[0].mxu0
    %v3763 = vpop.f32.mrb[0].mxu0
    %v3764 = vadd.f32 %v3475, %v3763
    %v3765 = vpop.f32.mrb[0].mxu0
    %3766 = vmatprep.mubr.bf16.mxu0 %v2041
    %3767 = vmatmul.mubr.bf16.gmra.mrb[0].mxu0 %v2040
    %v3768 = vpop.f32.mrb[0].mxu0
    %v3769 = vadd.f32 %v3480, %v3768
    %v3770 = vpop.f32.mrb[0].mxu0
    %v3771 = vpop.f32.mrb[0].mxu0
    %v3772 = vadd.f32 %v3483, %v3771
    %v3773 = vpop.f32.mrb[0].mxu0
    %3774 = vdwg.mxu0
    %3775 = vmatprep.subr.bf16.mxu0 0
    %3776 = vmatpush1.bf16.msra.mxu0 %v2539
    %3777 = vmatprep.subr.bf16.mxu0 0
    %3778 = vmatpush1.bf16.msra.mxu0 %v2540
    %3779 = vmatprep.subr.bf16.mxu0 0
    %3780 = vmatpush1.bf16.msra.mxu0 %v2541
    %3781 = vmatprep.subr.bf16.mxu0 0
    %3782 = vmatpush1.bf16.msra.mxu0 %v2542
    %3783 = vmatprep.subr.bf16.mxu0 0
    %3784 = vmatpush1.bf16.msra.mxu0 %v2543
    %3785 = vmatprep.subr.bf16.mxu0 0
    %3786 = vmatpush1.bf16.msra.mxu0 %v2544
    %3787 = vmatprep.subr.bf16.mxu0 0
    %3788 = vmatpush1.bf16.msra.mxu0 %v2545
    %3789 = vmatprep.subr.bf16.mxu0 0
    %3790 = vmatpush1.bf16.msra.mxu0 %v2546
    %3791 = vmatprep.subr.bf16.mxu0 0
    %3792 = vmatpush1.bf16.msra.mxu0 0
    %3793 = vmatprep.subr.bf16.mxu0 0
    %3794 = vmatpush1.bf16.msra.mxu0 0
    %3795 = vmatprep.subr.bf16.mxu0 0
    %3796 = vmatpush1.bf16.msra.mxu0 0
    %3797 = vmatprep.subr.bf16.mxu0 0
    %3798 = vmatpush1.bf16.msra.mxu0 0
    %3799 = vmatprep.subr.bf16.mxu0 0
    %3800 = vmatpush1.bf16.msra.mxu0 0
    %3801 = vmatprep.subr.bf16.mxu0 0
    %3802 = vmatpush1.bf16.msra.mxu0 0
    %3803 = vmatprep.subr.bf16.mxu0 0
    %3804 = vmatpush1.bf16.msra.mxu0 0
    %3805 = vmatprep.subr.bf16.mxu0 0
    %3806 = vmatpush1.bf16.msra.mxu0 0
    %3807 = vmatprep.mubr.bf16.mxu0 0
    %3808 = vmatmul.mubr.bf16.gmra.mrb[0].mxu0 %v1763
    %v3809 = vpop.f32.mrb[0].mxu0
    %v3810 = vadd.f32 %v3521, %v3809
    %v3811 = vpop.f32.mrb[0].mxu0
    %v3812 = vpop.f32.mrb[0].mxu0
    %v3813 = vadd.f32 %v3524, %v3812
    %v3814 = vpop.f32.mrb[0].mxu0
    %3815 = vmatprep.mubr.bf16.mxu0 0
    %3816 = vmatmul.mubr.bf16.gmra.mrb[0].mxu0 %v1772
    %v3817 = vpop.f32.mrb[0].mxu0
    %v3818 = vadd.f32 %v3529, %v3817
    %v3819 = vpop.f32.mrb[0].mxu0
    %v3820 = vpop.f32.mrb[0].mxu0
    %v3821 = vadd.f32 %v3532, %v3820
    %v3822 = vpop.f32.mrb[0].mxu0
    %3823 = vmatprep.mubr.bf16.mxu0 0
    %3824 = vmatmul.mubr.bf16.gmra.mrb[0].mxu0 %v1781
    %v3825 = vpop.f32.mrb[0].mxu0
    %v3826 = vadd.f32 %v3537, %v3825
    %v3827 = vpop.f32.mrb[0].mxu0
    %v3828 = vpop.f32.mrb[0].mxu0
    %v3829 = vadd.f32 %v3540, %v3828
    %v3830 = vpop.f32.mrb[0].mxu0
    %3831 = vmatprep.mubr.bf16.mxu0 0
    %3832 = vmatmul.mubr.bf16.gmra.mrb[0].mxu0 %v1790
    %v3833 = vpop.f32.mrb[0].mxu0
    %v3834 = vadd.f32 %v3545, %v3833
    %v3835 = vpop.f32.mrb[0].mxu0
    %v3836 = vpop.f32.mrb[0].mxu0
    %v3837 = vadd.f32 %v3548, %v3836
    %v3838 = vpop.f32.mrb[0].mxu0
    %3839 = vmatprep.mubr.bf16.mxu0 0
    %3840 = vmatmul.mubr.bf16.gmra.mrb[0].mxu0 %v1799
    %v3841 = vpop.f32.mrb[0].mxu0
    %v3842 = vadd.f32 %v3553, %v3841
    %v3843 = vpop.f32.mrb[0].mxu0
    %v3844 = vpop.f32.mrb[0].mxu0
    %v3845 = vadd.f32 %v3556, %v3844
    %v3846 = vpop.f32.mrb[0].mxu0
    %3847 = vmatprep.mubr.bf16.mxu0 0
    %3848 = vmatmul.mubr.bf16.gmra.mrb[0].mxu0 %v1808
    %v3849 = vpop.f32.mrb[0].mxu0
    %v3850 = vadd.f32 %v3561, %v3849
    %v3851 = vpop.f32.mrb[0].mxu0
    %v3852 = vpop.f32.mrb[0].mxu0
    %v3853 = vadd.f32 %v3564, %v3852
    %v3854 = vpop.f32.mrb[0].mxu0
    %3855 = vmatprep.mubr.bf16.mxu0 0
    %3856 = vmatmul.mubr.bf16.gmra.mrb[0].mxu0 %v1817
    %v3857 = vpop.f32.mrb[0].mxu0
    %v3858 = vadd.f32 %v3569, %v3857
    %v3859 = vpop.f32.mrb[0].mxu0
    %v3860 = vpop.f32.mrb[0].mxu0
    %v3861 = vadd.f32 %v3572, %v3860
    %v3862 = vpop.f32.mrb[0].mxu0
    %3863 = vmatprep.mubr.bf16.mxu0 0
    %3864 = vmatmul.mubr.bf16.gmra.mrb[0].mxu0 %v1826
    %v3865 = vpop.f32.mrb[0].mxu0
    %v3866 = vadd.f32 %v3577, %v3865
    %v3867 = vpop.f32.mrb[0].mxu0
    %v3868 = vpop.f32.mrb[0].mxu0
    %v3869 = vadd.f32 %v3580, %v3868
    %v3870 = vpop.f32.mrb[0].mxu0
    %3871 = vmatprep.mubr.bf16.mxu0 0
    %3872 = vmatmul.mubr.bf16.gmra.mrb[0].mxu0 %v1835
    %v3873 = vpop.f32.mrb[0].mxu0
    %v3874 = vadd.f32 %v3585, %v3873
    %v3875 = vpop.f32.mrb[0].mxu0
    %v3876 = vpop.f32.mrb[0].mxu0
    %v3877 = vadd.f32 %v3588, %v3876
    %v3878 = vpop.f32.mrb[0].mxu0
    %3879 = vmatprep.mubr.bf16.mxu0 0
    %3880 = vmatmul.mubr.bf16.gmra.mrb[0].mxu0 %v1844
    %v3881 = vpop.f32.mrb[0].mxu0
    %v3882 = vadd.f32 %v3593, %v3881
    %v3883 = vpop.f32.mrb[0].mxu0
    %v3884 = vpop.f32.mrb[0].mxu0
    %v3885 = vadd.f32 %v3596, %v3884
    %v3886 = vpop.f32.mrb[0].mxu0
    %3887 = vmatprep.mubr.bf16.mxu0 0
    %3888 = vmatmul.mubr.bf16.gmra.mrb[0].mxu0 %v1853
    %v3889 = vpop.f32.mrb[0].mxu0
    %v3890 = vadd.f32 %v3601, %v3889
    %v3891 = vpop.f32.mrb[0].mxu0
    %v3892 = vpop.f32.mrb[0].mxu0
    %v3893 = vadd.f32 %v3604, %v3892
    %v3894 = vpop.f32.mrb[0].mxu0
    %3895 = vmatprep.mubr.bf16.mxu0 0
    %3896 = vmatmul.mubr.bf16.gmra.mrb[0].mxu0 %v1862
    %v3897 = vpop.f32.mrb[0].mxu0
    %v3898 = vadd.f32 %v3609, %v3897
    %v3899 = vpop.f32.mrb[0].mxu0
    %v3900 = vpop.f32.mrb[0].mxu0
    %v3901 = vadd.f32 %v3612, %v3900
    %v3902 = vpop.f32.mrb[0].mxu0
    %3903 = vmatprep.mubr.bf16.mxu0 0
    %3904 = vmatmul.mubr.bf16.gmra.mrb[0].mxu0 %v1871
    %v3905 = vpop.f32.mrb[0].mxu0
    %v3906 = vadd.f32 %v3617, %v3905
    %v3907 = vpop.f32.mrb[0].mxu0
    %v3908 = vpop.f32.mrb[0].mxu0
    %v3909 = vadd.f32 %v3620, %v3908
    %v3910 = vpop.f32.mrb[0].mxu0
    %3911 = vmatprep.mubr.bf16.mxu0 0
    %3912 = vmatmul.mubr.bf16.gmra.mrb[0].mxu0 %v1880
    %v3913 = vpop.f32.mrb[0].mxu0
    %v3914 = vadd.f32 %v3625, %v3913
    %v3915 = vpop.f32.mrb[0].mxu0
    %v3916 = vpop.f32.mrb[0].mxu0
    %v3917 = vadd.f32 %v3628, %v3916
    %v3918 = vpop.f32.mrb[0].mxu0
    %3919 = vmatprep.mubr.bf16.mxu0 0
    %3920 = vmatmul.mubr.bf16.gmra.mrb[0].mxu0 %v1889
    %v3921 = vpop.f32.mrb[0].mxu0
    %v3922 = vadd.f32 %v3633, %v3921
    %v3923 = vpop.f32.mrb[0].mxu0
    %v3924 = vpop.f32.mrb[0].mxu0
    %v3925 = vadd.f32 %v3636, %v3924
    %v3926 = vpop.f32.mrb[0].mxu0
    %3927 = vmatprep.mubr.bf16.mxu0 0
    %3928 = vmatmul.mubr.bf16.gmra.mrb[0].mxu0 %v1898
    %v3929 = vpop.f32.mrb[0].mxu0
    %v3930 = vadd.f32 %v3641, %v3929
    %v3931 = vpop.f32.mrb[0].mxu0
    %v3932 = vpop.f32.mrb[0].mxu0
    %v3933 = vadd.f32 %v3644, %v3932
    %v3934 = vpop.f32.mrb[0].mxu0
    %3935 = vmatprep.mubr.bf16.mxu0 0
    %3936 = vmatmul.mubr.bf16.gmra.mrb[0].mxu0 %v1907
    %v3937 = vpop.f32.mrb[0].mxu0
    %v3938 = vadd.f32 %v3649, %v3937
    %v3939 = vpop.f32.mrb[0].mxu0
    %v3940 = vpop.f32.mrb[0].mxu0
    %v3941 = vadd.f32 %v3652, %v3940
    %v3942 = vpop.f32.mrb[0].mxu0
    %3943 = vmatprep.mubr.bf16.mxu0 0
    %3944 = vmatmul.mubr.bf16.gmra.mrb[0].mxu0 %v1916
    %v3945 = vpop.f32.mrb[0].mxu0
    %v3946 = vadd.f32 %v3657, %v3945
    %v3947 = vpop.f32.mrb[0].mxu0
    %v3948 = vpop.f32.mrb[0].mxu0
    %v3949 = vadd.f32 %v3660, %v3948
    %v3950 = vpop.f32.mrb[0].mxu0
    %3951 = vmatprep.mubr.bf16.mxu0 0
    %3952 = vmatmul.mubr.bf16.gmra.mrb[0].mxu0 %v1925
    %v3953 = vpop.f32.mrb[0].mxu0
    %v3954 = vadd.f32 %v3665, %v3953
    %v3955 = vpop.f32.mrb[0].mxu0
    %v3956 = vpop.f32.mrb[0].mxu0
    %v3957 = vadd.f32 %v3668, %v3956
    %v3958 = vpop.f32.mrb[0].mxu0
    %3959 = vmatprep.mubr.bf16.mxu0 0
    %3960 = vmatmul.mubr.bf16.gmra.mrb[0].mxu0 %v1934
    %v3961 = vpop.f32.mrb[0].mxu0
    %v3962 = vadd.f32 %v3673, %v3961
    %v3963 = vpop.f32.mrb[0].mxu0
    %v3964 = vpop.f32.mrb[0].mxu0
    %v3965 = vadd.f32 %v3676, %v3964
    %v3966 = vpop.f32.mrb[0].mxu0
    %3967 = vmatprep.mubr.bf16.mxu0 0
    %3968 = vmatmul.mubr.bf16.gmra.mrb[0].mxu0 %v1943
    %v3969 = vpop.f32.mrb[0].mxu0
    %v3970 = vadd.f32 %v3681, %v3969
    %v3971 = vpop.f32.mrb[0].mxu0
    %v3972 = vpop.f32.mrb[0].mxu0
    %v3973 = vadd.f32 %v3684, %v3972
    %v3974 = vpop.f32.mrb[0].mxu0
    %3975 = vmatprep.mubr.bf16.mxu0 0
    %3976 = vmatmul.mubr.bf16.gmra.mrb[0].mxu0 %v1952
    %v3977 = vpop.f32.mrb[0].mxu0
    %v3978 = vadd.f32 %v3689, %v3977
    %v3979 = vpop.f32.mrb[0].mxu0
    %v3980 = vpop.f32.mrb[0].mxu0
    %v3981 = vadd.f32 %v3692, %v3980
    %v3982 = vpop.f32.mrb[0].mxu0
    %3983 = vmatprep.mubr.bf16.mxu0 0
    %3984 = vmatmul.mubr.bf16.gmra.mrb[0].mxu0 %v1961
    %v3985 = vpop.f32.mrb[0].mxu0
    %v3986 = vadd.f32 %v3697, %v3985
    %v3987 = vpop.f32.mrb[0].mxu0
    %v3988 = vpop.f32.mrb[0].mxu0
    %v3989 = vadd.f32 %v3700, %v3988
    %v3990 = vpop.f32.mrb[0].mxu0
    %3991 = vmatprep.mubr.bf16.mxu0 0
    %3992 = vmatmul.mubr.bf16.gmra.mrb[0].mxu0 %v1970
    %v3993 = vpop.f32.mrb[0].mxu0
    %v3994 = vadd.f32 %v3705, %v3993
    %v3995 = vpop.f32.mrb[0].mxu0
    %v3996 = vpop.f32.mrb[0].mxu0
    %v3997 = vadd.f32 %v3708, %v3996
    %v3998 = vpop.f32.mrb[0].mxu0
    %3999 = vmatprep.mubr.bf16.mxu0 0
    %4000 = vmatmul.mubr.bf16.gmra.mrb[0].mxu0 %v1979
    %v4001 = vpop.f32.mrb[0].mxu0
    %v4002 = vadd.f32 %v3713, %v4001
    %v4003 = vpop.f32.mrb[0].mxu0
    %v4004 = vpop.f32.mrb[0].mxu0
    %v4005 = vadd.f32 %v3716, %v4004
    %v4006 = vpop.f32.mrb[0].mxu0
    %4007 = vmatprep.mubr.bf16.mxu0 0
    %4008 = vmatmul.mubr.bf16.gmra.mrb[0].mxu0 %v1988
    %v4009 = vpop.f32.mrb[0].mxu0
    %v4010 = vadd.f32 %v3721, %v4009
    %v4011 = vpop.f32.mrb[0].mxu0
    %v4012 = vpop.f32.mrb[0].mxu0
    %v4013 = vadd.f32 %v3724, %v4012
    %v4014 = vpop.f32.mrb[0].mxu0
    %4015 = vmatprep.mubr.bf16.mxu0 0
    %4016 = vmatmul.mubr.bf16.gmra.mrb[0].mxu0 %v1997
    %v4017 = vpop.f32.mrb[0].mxu0
    %v4018 = vadd.f32 %v3729, %v4017
    %v4019 = vpop.f32.mrb[0].mxu0
    %v4020 = vpop.f32.mrb[0].mxu0
    %v4021 = vadd.f32 %v3732, %v4020
    %v4022 = vpop.f32.mrb[0].mxu0
    %4023 = vmatprep.mubr.bf16.mxu0 0
    %4024 = vmatmul.mubr.bf16.gmra.mrb[0].mxu0 %v2006
    %v4025 = vpop.f32.mrb[0].mxu0
    %v4026 = vadd.f32 %v3737, %v4025
    %v4027 = vpop.f32.mrb[0].mxu0
    %v4028 = vpop.f32.mrb[0].mxu0
    %v4029 = vadd.f32 %v3740, %v4028
    %v4030 = vpop.f32.mrb[0].mxu0
    %4031 = vmatprep.mubr.bf16.mxu0 0
    %4032 = vmatmul.mubr.bf16.gmra.mrb[0].mxu0 %v2015
    %v4033 = vpop.f32.mrb[0].mxu0
    %v4034 = vadd.f32 %v3745, %v4033
    %v4035 = vpop.f32.mrb[0].mxu0
    %v4036 = vpop.f32.mrb[0].mxu0
    %v4037 = vadd.f32 %v3748, %v4036
    %v4038 = vpop.f32.mrb[0].mxu0
    %4039 = vmatprep.mubr.bf16.mxu0 0
    %4040 = vmatmul.mubr.bf16.gmra.mrb[0].mxu0 %v2024
    %v4041 = vpop.f32.mrb[0].mxu0
    %v4042 = vadd.f32 %v3753, %v4041
    %v4043 = vpop.f32.mrb[0].mxu0
    %v4044 = vpop.f32.mrb[0].mxu0
    %v4045 = vadd.f32 %v3756, %v4044
    %v4046 = vpop.f32.mrb[0].mxu0
    %4047 = vmatprep.mubr.bf16.mxu0 0
    %4048 = vmatmul.mubr.bf16.gmra.mrb[0].mxu0 %v2033
    %v4049 = vpop.f32.mrb[0].mxu0
    %v4050 = vadd.f32 %v3761, %v4049
    %v4051 = vpop.f32.mrb[0].mxu0
    %v4052 = vpop.f32.mrb[0].mxu0
    %v4053 = vadd.f32 %v3764, %v4052
    %v4054 = vpop.f32.mrb[0].mxu0
    %4055 = vmatprep.mubr.bf16.mxu0 0
    %4056 = vmatmul.mubr.bf16.gmra.mrb[0].mxu0 %v2042
    %v4057 = vpop.f32.mrb[0].mxu0
    %v4058 = vadd.f32 %v3769, %v4057
    %v4059 = vpop.f32.mrb[0].mxu0
    %v4060 = vpop.f32.mrb[0].mxu0
    %v4061 = vadd.f32 %v3772, %v4060
    %v4062 = vpop.f32.mrb[0].mxu0
    %4063 = vdwg.mxu0
    %v4064 = vld [vmem:[#allocation12] sm:$0x1]
    %v4065 = vld [vmem:[#allocation14] sm:$0x1]
    %v4066 = vadd.f32 %v3810, %v3813
    %v4067 = vadd.f32 %v4066, %v3818
    %v4068 = vadd.f32 %v4067, %v3821
    %v4069 = vadd.f32 %v4068, %v3826
    %v4070 = vadd.f32 %v4069, %v3829
    %v4071 = vadd.f32 %v4070, %v3834
    %v4072 = vadd.f32 %v4071, %v3837
    %v4073 = vadd.f32 %v4072, %v3842
    %v4074 = vadd.f32 %v4073, %v3845
    %v4075 = vadd.f32 %v4074, %v3850
    %v4076 = vadd.f32 %v4075, %v3853
    %v4077 = vadd.f32 %v4076, %v3858
    %v4078 = vadd.f32 %v4077, %v3861
    %v4079 = vadd.f32 %v4078, %v3866
    %v4080 = vadd.f32 %v4079, %v3869
    %v4081 = vadd.f32 %v4080, %v3874
    %v4082 = vadd.f32 %v4081, %v3877
    %v4083 = vadd.f32 %v4082, %v3882
    %v4084 = vadd.f32 %v4083, %v3885
    %v4085 = vadd.f32 %v4084, %v3890
    %v4086 = vadd.f32 %v4085, %v3893
    %v4087 = vadd.f32 %v4086, %v3898
    %v4088 = vadd.f32 %v4087, %v3901
    %v4089 = vadd.f32 %v4088, %v3906
    %v4090 = vadd.f32 %v4089, %v3909
    %v4091 = vadd.f32 %v4090, %v3914
    %v4092 = vadd.f32 %v4091, %v3917
    %v4093 = vadd.f32 %v4092, %v3922
    %v4094 = vadd.f32 %v4093, %v3925
    %v4095 = vadd.f32 %v4094, %v3930
    %v4096 = vadd.f32 %v4095, %v3933
    %v4097 = vadd.f32 %v4096, %v3938
    %v4098 = vadd.f32 %v4097, %v3941
    %v4099 = vadd.f32 %v4098, %v3946
    %v4100 = vadd.f32 %v4099, %v3949
    %v4101 = vadd.f32 %v4100, %v3954
    %v4102 = vadd.f32 %v4101, %v3957
    %v4103 = vadd.f32 %v4102, %v3962
    %v4104 = vadd.f32 %v4103, %v3965
    %v4105 = vadd.f32 %v4104, %v3970
    %v4106 = vadd.f32 %v4105, %v3973
    %v4107 = vadd.f32 %v4106, %v3978
    %v4108 = vadd.f32 %v4107, %v3981
    %v4109 = vadd.f32 %v4108, %v3986
    %v4110 = vadd.f32 %v4109, %v3989
    %v4111 = vadd.f32 %v4110, %v3994
    %v4112 = vadd.f32 %v4111, %v3997
    %v4113 = vadd.f32 %v4112, %v4002
    %v4114 = vadd.f32 %v4113, %v4005
    %v4115 = vadd.f32 %v4114, %v4010
    %v4116 = vadd.f32 %v4115, %v4013
    %v4117 = vadd.f32 %v4116, %v4018
    %v4118 = vadd.f32 %v4117, %v4021
    %v4119 = vadd.f32 %v4118, %v4026
    %v4120 = vadd.f32 %v4119, %v4029
    %v4121 = vadd.f32 %v4120, %v4034
    %v4122 = vadd.f32 %v4121, %v4037
    %v4123 = vadd.f32 %v4122, %v4042
    %v4124 = vadd.f32 %v4123, %v4045
    %v4125 = vadd.f32 %v4124, %v4050
    %v4126 = vadd.f32 %v4125, %v4053
    %v4127 = vadd.f32 %v4126, %v4058
    %v4128 = vadd.f32 %v4127, %v4061
    %v4129 = vrot.slane %v4128, 4
    %v4130 = vadd.f32 %v4128, %v4129
    %v4131 = vrot.slane %v4130, 2
    %v4132 = vadd.f32 %v4130, %v4131
    %v4133 = vrot.slane %v4132, 1
    %v4134 = vadd.f32 %v4132, %v4133
    %v4135 = vmul.f32 %v4134, 0.001953125
    %v4136 = vmul.f32 %v3810, %v3810
    %v4137 = vmul.f32 %v3813, %v3813
    %v4138 = vmul.f32 %v3818, %v3818
    %v4139 = vmul.f32 %v3821, %v3821
    %v4140 = vmul.f32 %v3826, %v3826
    %v4141 = vmul.f32 %v3829, %v3829
    %v4142 = vmul.f32 %v3834, %v3834
    %v4143 = vmul.f32 %v3837, %v3837
    %v4144 = vmul.f32 %v3842, %v3842
    %v4145 = vmul.f32 %v3845, %v3845
    %v4146 = vmul.f32 %v3850, %v3850
    %v4147 = vmul.f32 %v3853, %v3853
    %v4148 = vmul.f32 %v3858, %v3858
    %v4149 = vmul.f32 %v3861, %v3861
    %v4150 = vmul.f32 %v3866, %v3866
    %v4151 = vmul.f32 %v3869, %v3869
    %v4152 = vmul.f32 %v3874, %v3874
    %v4153 = vmul.f32 %v3877, %v3877
    %v4154 = vmul.f32 %v3882, %v3882
    %v4155 = vmul.f32 %v3885, %v3885
    %v4156 = vmul.f32 %v3890, %v3890
    %v4157 = vmul.f32 %v3893, %v3893
    %v4158 = vmul.f32 %v3898, %v3898
    %v4159 = vmul.f32 %v3901, %v3901
    %v4160 = vmul.f32 %v3906, %v3906
    %v4161 = vmul.f32 %v3909, %v3909
    %v4162 = vmul.f32 %v3914, %v3914
    %v4163 = vmul.f32 %v3917, %v3917
    %v4164 = vmul.f32 %v3922, %v3922
    %v4165 = vmul.f32 %v3925, %v3925
    %v4166 = vmul.f32 %v3930, %v3930
    %v4167 = vmul.f32 %v3933, %v3933
    %v4168 = vmul.f32 %v3938, %v3938
    %v4169 = vmul.f32 %v3941, %v3941
    %v4170 = vmul.f32 %v3946, %v3946
    %v4171 = vmul.f32 %v3949, %v3949
    %v4172 = vmul.f32 %v3954, %v3954
    %v4173 = vmul.f32 %v3957, %v3957
    %v4174 = vmul.f32 %v3962, %v3962
    %v4175 = vmul.f32 %v3965, %v3965
    %v4176 = vmul.f32 %v3970, %v3970
    %v4177 = vmul.f32 %v3973, %v3973
    %v4178 = vmul.f32 %v3978, %v3978
    %v4179 = vmul.f32 %v3981, %v3981
    %v4180 = vmul.f32 %v3986, %v3986
    %v4181 = vmul.f32 %v3989, %v3989
    %v4182 = vmul.f32 %v3994, %v3994
    %v4183 = vmul.f32 %v3997, %v3997
    %v4184 = vmul.f32 %v4002, %v4002
    %v4185 = vmul.f32 %v4005, %v4005
    %v4186 = vmul.f32 %v4010, %v4010
    %v4187 = vmul.f32 %v4013, %v4013
    %v4188 = vmul.f32 %v4018, %v4018
    %v4189 = vmul.f32 %v4021, %v4021
    %v4190 = vmul.f32 %v4026, %v4026
    %v4191 = vmul.f32 %v4029, %v4029
    %v4192 = vmul.f32 %v4034, %v4034
    %v4193 = vmul.f32 %v4037, %v4037
    %v4194 = vmul.f32 %v4042, %v4042
    %v4195 = vmul.f32 %v4045, %v4045
    %v4196 = vmul.f32 %v4050, %v4050
    %v4197 = vmul.f32 %v4053, %v4053
    %v4198 = vmul.f32 %v4058, %v4058
    %v4199 = vmul.f32 %v4061, %v4061
    %v4200 = vadd.f32 %v4136, %v4137
    %v4201 = vadd.f32 %v4200, %v4138
    %v4202 = vadd.f32 %v4201, %v4139
    %v4203 = vadd.f32 %v4202, %v4140
    %v4204 = vadd.f32 %v4203, %v4141
    %v4205 = vadd.f32 %v4204, %v4142
    %v4206 = vadd.f32 %v4205, %v4143
    %v4207 = vadd.f32 %v4206, %v4144
    %v4208 = vadd.f32 %v4207, %v4145
    %v4209 = vadd.f32 %v4208, %v4146
    %v4210 = vadd.f32 %v4209, %v4147
    %v4211 = vadd.f32 %v4210, %v4148
    %v4212 = vadd.f32 %v4211, %v4149
    %v4213 = vadd.f32 %v4212, %v4150
    %v4214 = vadd.f32 %v4213, %v4151
    %v4215 = vadd.f32 %v4214, %v4152
    %v4216 = vadd.f32 %v4215, %v4153
    %v4217 = vadd.f32 %v4216, %v4154
    %v4218 = vadd.f32 %v4217, %v4155
    %v4219 = vadd.f32 %v4218, %v4156
    %v4220 = vadd.f32 %v4219, %v4157
    %v4221 = vadd.f32 %v4220, %v4158
    %v4222 = vadd.f32 %v4221, %v4159
    %v4223 = vadd.f32 %v4222, %v4160
    %v4224 = vadd.f32 %v4223, %v4161
    %v4225 = vadd.f32 %v4224, %v4162
    %v4226 = vadd.f32 %v4225, %v4163
    %v4227 = vadd.f32 %v4226, %v4164
    %v4228 = vadd.f32 %v4227, %v4165
    %v4229 = vadd.f32 %v4228, %v4166
    %v4230 = vadd.f32 %v4229, %v4167
    %v4231 = vadd.f32 %v4230, %v4168
    %v4232 = vadd.f32 %v4231, %v4169
    %v4233 = vadd.f32 %v4232, %v4170
    %v4234 = vadd.f32 %v4233, %v4171
    %v4235 = vadd.f32 %v4234, %v4172
    %v4236 = vadd.f32 %v4235, %v4173
    %v4237 = vadd.f32 %v4236, %v4174
    %v4238 = vadd.f32 %v4237, %v4175
    %v4239 = vadd.f32 %v4238, %v4176
    %v4240 = vadd.f32 %v4239, %v4177
    %v4241 = vadd.f32 %v4240, %v4178
    %v4242 = vadd.f32 %v4241, %v4179
    %v4243 = vadd.f32 %v4242, %v4180
    %v4244 = vadd.f32 %v4243, %v4181
    %v4245 = vadd.f32 %v4244, %v4182
    %v4246 = vadd.f32 %v4245, %v4183
    %v4247 = vadd.f32 %v4246, %v4184
    %v4248 = vadd.f32 %v4247, %v4185
    %v4249 = vadd.f32 %v4248, %v4186
    %v4250 = vadd.f32 %v4249, %v4187
    %v4251 = vadd.f32 %v4250, %v4188
    %v4252 = vadd.f32 %v4251, %v4189
    %v4253 = vadd.f32 %v4252, %v4190
    %v4254 = vadd.f32 %v4253, %v4191
    %v4255 = vadd.f32 %v4254, %v4192
    %v4256 = vadd.f32 %v4255, %v4193
    %v4257 = vadd.f32 %v4256, %v4194
    %v4258 = vadd.f32 %v4257, %v4195
    %v4259 = vadd.f32 %v4258, %v4196
    %v4260 = vadd.f32 %v4259, %v4197
    %v4261 = vadd.f32 %v4260, %v4198
    %v4262 = vadd.f32 %v4261, %v4199
    %v4263 = vrot.slane %v4262, 4
    %v4264 = vadd.f32 %v4262, %v4263
    %v4265 = vrot.slane %v4264, 2
    %v4266 = vadd.f32 %v4264, %v4265
    %v4267 = vrot.slane %v4266, 1
    %v4268 = vadd.f32 %v4266, %v4267
    %v4269 = vmul.f32 %v4268, 0.001953125
    %v4270 = vmul.f32 %v4135, %v4135
    %v4271 = vsub.f32 %v4269, %v4270
    %v4272 = vmax.f32 %v4271, 0.0
    %v4273 = vadd.f32 %v4272, 1e-05
    %v4274 = vrsqrt.pop %v4273
    %v4275 = vmul.f32 %v4064, %v4274
    %v4276 = vmul.f32 %v4135, %v4275
    %v4277 = vsub.f32 %v4065, %v4276
    %v4279 = vlaneseq
    %v4280 = vshrl.u32 %v4279, 7
    %v4281 = vsub.s32 0, %v4280
    %v4282 = vrot.slane %v4275, %v4281
    %v4284 = vmul.f32 %v3810, %v4282
    %v4285 = vmul.f32 %v3813, %v4282
    %v4286 = vmul.f32 %v3818, %v4282
    %v4287 = vmul.f32 %v3821, %v4282
    %v4288 = vmul.f32 %v3826, %v4282
    %v4289 = vmul.f32 %v3829, %v4282
    %v4290 = vmul.f32 %v3834, %v4282
    %v4291 = vmul.f32 %v3837, %v4282
    %v4292 = vmul.f32 %v3842, %v4282
    %v4293 = vmul.f32 %v3845, %v4282
    %v4294 = vmul.f32 %v3850, %v4282
    %v4295 = vmul.f32 %v3853, %v4282
    %v4296 = vmul.f32 %v3858, %v4282
    %v4297 = vmul.f32 %v3861, %v4282
    %v4298 = vmul.f32 %v3866, %v4282
    %v4299 = vmul.f32 %v3869, %v4282
    %v4300 = vmul.f32 %v3874, %v4282
    %v4301 = vmul.f32 %v3877, %v4282
    %v4302 = vmul.f32 %v3882, %v4282
    %v4303 = vmul.f32 %v3885, %v4282
    %v4304 = vmul.f32 %v3890, %v4282
    %v4305 = vmul.f32 %v3893, %v4282
    %v4306 = vmul.f32 %v3898, %v4282
    %v4307 = vmul.f32 %v3901, %v4282
    %v4308 = vmul.f32 %v3906, %v4282
    %v4309 = vmul.f32 %v3909, %v4282
    %v4310 = vmul.f32 %v3914, %v4282
    %v4311 = vmul.f32 %v3917, %v4282
    %v4312 = vmul.f32 %v3922, %v4282
    %v4313 = vmul.f32 %v3925, %v4282
    %v4314 = vmul.f32 %v3930, %v4282
    %v4315 = vmul.f32 %v3933, %v4282
    %v4316 = vmul.f32 %v3938, %v4282
    %v4317 = vmul.f32 %v3941, %v4282
    %v4318 = vmul.f32 %v3946, %v4282
    %v4319 = vmul.f32 %v3949, %v4282
    %v4320 = vmul.f32 %v3954, %v4282
    %v4321 = vmul.f32 %v3957, %v4282
    %v4322 = vmul.f32 %v3962, %v4282
    %v4323 = vmul.f32 %v3965, %v4282
    %v4324 = vmul.f32 %v3970, %v4282
    %v4325 = vmul.f32 %v3973, %v4282
    %v4326 = vmul.f32 %v3978, %v4282
    %v4327 = vmul.f32 %v3981, %v4282
    %v4328 = vmul.f32 %v3986, %v4282
    %v4329 = vmul.f32 %v3989, %v4282
    %v4330 = vmul.f32 %v3994, %v4282
    %v4331 = vmul.f32 %v3997, %v4282
    %v4332 = vmul.f32 %v4002, %v4282
    %v4333 = vmul.f32 %v4005, %v4282
    %v4334 = vmul.f32 %v4010, %v4282
    %v4335 = vmul.f32 %v4013, %v4282
    %v4336 = vmul.f32 %v4018, %v4282
    %v4337 = vmul.f32 %v4021, %v4282
    %v4338 = vmul.f32 %v4026, %v4282
    %v4339 = vmul.f32 %v4029, %v4282
    %v4340 = vmul.f32 %v4034, %v4282
    %v4341 = vmul.f32 %v4037, %v4282
    %v4342 = vmul.f32 %v4042, %v4282
    %v4343 = vmul.f32 %v4045, %v4282
    %v4344 = vmul.f32 %v4050, %v4282
    %v4345 = vmul.f32 %v4053, %v4282
    %v4346 = vmul.f32 %v4058, %v4282
    %v4347 = vmul.f32 %v4061, %v4282
    %v4349 = vlaneseq
    %v4350 = vshrl.u32 %v4349, 7
    %v4351 = vsub.s32 0, %v4350
    %v4352 = vrot.slane %v4277, %v4351
    %v4354 = vadd.f32 %v4284, %v4352
    %v4355 = vadd.f32 %v4285, %v4352
    %v4356 = vadd.f32 %v4286, %v4352
    %v4357 = vadd.f32 %v4287, %v4352
    %v4358 = vadd.f32 %v4288, %v4352
    %v4359 = vadd.f32 %v4289, %v4352
    %v4360 = vadd.f32 %v4290, %v4352
    %v4361 = vadd.f32 %v4291, %v4352
    %v4362 = vadd.f32 %v4292, %v4352
    %v4363 = vadd.f32 %v4293, %v4352
    %v4364 = vadd.f32 %v4294, %v4352
    %v4365 = vadd.f32 %v4295, %v4352
    %v4366 = vadd.f32 %v4296, %v4352
    %v4367 = vadd.f32 %v4297, %v4352
    %v4368 = vadd.f32 %v4298, %v4352
    %v4369 = vadd.f32 %v4299, %v4352
    %v4370 = vadd.f32 %v4300, %v4352
    %v4371 = vadd.f32 %v4301, %v4352
    %v4372 = vadd.f32 %v4302, %v4352
    %v4373 = vadd.f32 %v4303, %v4352
    %v4374 = vadd.f32 %v4304, %v4352
    %v4375 = vadd.f32 %v4305, %v4352
    %v4376 = vadd.f32 %v4306, %v4352
    %v4377 = vadd.f32 %v4307, %v4352
    %v4378 = vadd.f32 %v4308, %v4352
    %v4379 = vadd.f32 %v4309, %v4352
    %v4380 = vadd.f32 %v4310, %v4352
    %v4381 = vadd.f32 %v4311, %v4352
    %v4382 = vadd.f32 %v4312, %v4352
    %v4383 = vadd.f32 %v4313, %v4352
    %v4384 = vadd.f32 %v4314, %v4352
    %v4385 = vadd.f32 %v4315, %v4352
    %v4386 = vadd.f32 %v4316, %v4352
    %v4387 = vadd.f32 %v4317, %v4352
    %v4388 = vadd.f32 %v4318, %v4352
    %v4389 = vadd.f32 %v4319, %v4352
    %v4390 = vadd.f32 %v4320, %v4352
    %v4391 = vadd.f32 %v4321, %v4352
    %v4392 = vadd.f32 %v4322, %v4352
    %v4393 = vadd.f32 %v4323, %v4352
    %v4394 = vadd.f32 %v4324, %v4352
    %v4395 = vadd.f32 %v4325, %v4352
    %v4396 = vadd.f32 %v4326, %v4352
    %v4397 = vadd.f32 %v4327, %v4352
    %v4398 = vadd.f32 %v4328, %v4352
    %v4399 = vadd.f32 %v4329, %v4352
    %v4400 = vadd.f32 %v4330, %v4352
    %v4401 = vadd.f32 %v4331, %v4352
    %v4402 = vadd.f32 %v4332, %v4352
    %v4403 = vadd.f32 %v4333, %v4352
    %v4404 = vadd.f32 %v4334, %v4352
    %v4405 = vadd.f32 %v4335, %v4352
    %v4406 = vadd.f32 %v4336, %v4352
    %v4407 = vadd.f32 %v4337, %v4352
    %v4408 = vadd.f32 %v4338, %v4352
    %v4409 = vadd.f32 %v4339, %v4352
    %v4410 = vadd.f32 %v4340, %v4352
    %v4411 = vadd.f32 %v4341, %v4352
    %v4412 = vadd.f32 %v4342, %v4352
    %v4413 = vadd.f32 %v4343, %v4352
    %v4414 = vadd.f32 %v4344, %v4352
    %v4415 = vadd.f32 %v4345, %v4352
    %v4416 = vadd.f32 %v4346, %v4352
    %v4417 = vadd.f32 %v4347, %v4352
    %v4418 = vmax.f32 %v4354, 0.0
    %v4419 = vmax.f32 %v4355, 0.0
    %v4420 = vmax.f32 %v4356, 0.0
    %v4421 = vmax.f32 %v4357, 0.0
    %v4422 = vmax.f32 %v4358, 0.0
    %v4423 = vmax.f32 %v4359, 0.0
    %v4424 = vmax.f32 %v4360, 0.0
    %v4425 = vmax.f32 %v4361, 0.0
    %v4426 = vmax.f32 %v4362, 0.0
    %v4427 = vmax.f32 %v4363, 0.0
    %v4428 = vmax.f32 %v4364, 0.0
    %v4429 = vmax.f32 %v4365, 0.0
    %v4430 = vmax.f32 %v4366, 0.0
    %v4431 = vmax.f32 %v4367, 0.0
    %v4432 = vmax.f32 %v4368, 0.0
    %v4433 = vmax.f32 %v4369, 0.0
    %v4434 = vmax.f32 %v4370, 0.0
    %v4435 = vmax.f32 %v4371, 0.0
    %v4436 = vmax.f32 %v4372, 0.0
    %v4437 = vmax.f32 %v4373, 0.0
    %v4438 = vmax.f32 %v4374, 0.0
    %v4439 = vmax.f32 %v4375, 0.0
    %v4440 = vmax.f32 %v4376, 0.0
    %v4441 = vmax.f32 %v4377, 0.0
    %v4442 = vmax.f32 %v4378, 0.0
    %v4443 = vmax.f32 %v4379, 0.0
    %v4444 = vmax.f32 %v4380, 0.0
    %v4445 = vmax.f32 %v4381, 0.0
    %v4446 = vmax.f32 %v4382, 0.0
    %v4447 = vmax.f32 %v4383, 0.0
    %v4448 = vmax.f32 %v4384, 0.0
    %v4449 = vmax.f32 %v4385, 0.0
    %v4450 = vmax.f32 %v4386, 0.0
    %v4451 = vmax.f32 %v4387, 0.0
    %v4452 = vmax.f32 %v4388, 0.0
    %v4453 = vmax.f32 %v4389, 0.0
    %v4454 = vmax.f32 %v4390, 0.0
    %v4455 = vmax.f32 %v4391, 0.0
    %v4456 = vmax.f32 %v4392, 0.0
    %v4457 = vmax.f32 %v4393, 0.0
    %v4458 = vmax.f32 %v4394, 0.0
    %v4459 = vmax.f32 %v4395, 0.0
    %v4460 = vmax.f32 %v4396, 0.0
    %v4461 = vmax.f32 %v4397, 0.0
    %v4462 = vmax.f32 %v4398, 0.0
    %v4463 = vmax.f32 %v4399, 0.0
    %v4464 = vmax.f32 %v4400, 0.0
    %v4465 = vmax.f32 %v4401, 0.0
    %v4466 = vmax.f32 %v4402, 0.0
    %v4467 = vmax.f32 %v4403, 0.0
    %v4468 = vmax.f32 %v4404, 0.0
    %v4469 = vmax.f32 %v4405, 0.0
    %v4470 = vmax.f32 %v4406, 0.0
    %v4471 = vmax.f32 %v4407, 0.0
    %v4472 = vmax.f32 %v4408, 0.0
    %v4473 = vmax.f32 %v4409, 0.0
    %v4474 = vmax.f32 %v4410, 0.0
    %v4475 = vmax.f32 %v4411, 0.0
    %v4476 = vmax.f32 %v4412, 0.0
    %v4477 = vmax.f32 %v4413, 0.0
    %v4478 = vmax.f32 %v4414, 0.0
    %v4479 = vmax.f32 %v4415, 0.0
    %v4480 = vmax.f32 %v4416, 0.0
    %v4481 = vmax.f32 %v4417, 0.0
    %v4482 = vpack.c.bf16 %v4419, %v4418
    %v4483 = vpack.c.bf16 %v4421, %v4420
    %v4484 = vpack.c.bf16 %v4423, %v4422
    %v4485 = vpack.c.bf16 %v4425, %v4424
    %v4486 = vpack.c.bf16 %v4427, %v4426
    %v4487 = vpack.c.bf16 %v4429, %v4428
    %v4488 = vpack.c.bf16 %v4431, %v4430
    %v4489 = vpack.c.bf16 %v4433, %v4432
    %v4490 = vpack.c.bf16 %v4435, %v4434
    %v4491 = vpack.c.bf16 %v4437, %v4436
    %v4492 = vpack.c.bf16 %v4439, %v4438
    %v4493 = vpack.c.bf16 %v4441, %v4440
    %v4494 = vpack.c.bf16 %v4443, %v4442
    %v4495 = vpack.c.bf16 %v4445, %v4444
    %v4496 = vpack.c.bf16 %v4447, %v4446
    %v4497 = vpack.c.bf16 %v4449, %v4448
    %v4498 = vpack.c.bf16 %v4451, %v4450
    %v4499 = vpack.c.bf16 %v4453, %v4452
    %v4500 = vpack.c.bf16 %v4455, %v4454
    %v4501 = vpack.c.bf16 %v4457, %v4456
    %v4502 = vpack.c.bf16 %v4459, %v4458
    %v4503 = vpack.c.bf16 %v4461, %v4460
    %v4504 = vpack.c.bf16 %v4463, %v4462
    %v4505 = vpack.c.bf16 %v4465, %v4464
    %v4506 = vpack.c.bf16 %v4467, %v4466
    %v4507 = vpack.c.bf16 %v4469, %v4468
    %v4508 = vpack.c.bf16 %v4471, %v4470
    %v4509 = vpack.c.bf16 %v4473, %v4472
    %v4510 = vpack.c.bf16 %v4475, %v4474
    %v4511 = vpack.c.bf16 %v4477, %v4476
    %v4512 = vpack.c.bf16 %v4479, %v4478
    %v4513 = vpack.c.bf16 %v4481, %v4480
    %v4514 = vld [vmem:[#allocation15] sm:$0xf]
    %v4515 = vld [vmem:[#allocation15 + $0x4] sm:$0xf]
    %v4516 = vld [vmem:[#allocation15 + $0x8] sm:$0xf]
    %v4517 = vld [vmem:[#allocation15 + $0xc] sm:$0xf]
    %v4518 = vld [vmem:[#allocation15 + $0x10] sm:$0xf]
    %v4519 = vld [vmem:[#allocation15 + $0x14] sm:$0xf]
    %v4520 = vld [vmem:[#allocation15 + $0x18] sm:$0xf]
    %v4521 = vld [vmem:[#allocation15 + $0x1c] sm:$0xf]
    %v4522 = vld [vmem:[#allocation15 + $0x20] sm:$0xf]
    %v4523 = vld [vmem:[#allocation15 + $0x24] sm:$0xf]
    %v4524 = vld [vmem:[#allocation15 + $0x28] sm:$0xf]
    %v4525 = vld [vmem:[#allocation15 + $0x2c] sm:$0xf]
    %v4526 = vld [vmem:[#allocation15 + $0x30] sm:$0xf]
    %v4527 = vld [vmem:[#allocation15 + $0x34] sm:$0xf]
    %v4528 = vld [vmem:[#allocation15 + $0x38] sm:$0xf]
    %v4529 = vld [vmem:[#allocation15 + $0x3c] sm:$0xf]
    %v4546 = vunpack.c.l.b16 %v4514
    %v4547 = vunpack.c.l.b16 %v4515
    %v4548 = vunpack.c.l.b16 %v4516
    %v4549 = vunpack.c.l.b16 %v4517
    %v4550 = vunpack.c.l.b16 %v4518
    %v4551 = vunpack.c.l.b16 %v4519
    %v4552 = vunpack.c.l.b16 %v4520
    %v4553 = vunpack.c.l.b16 %v4521
    %v4554 = vunpack.c.l.b16 %v4522
    %v4555 = vunpack.c.l.b16 %v4523
    %v4556 = vunpack.c.l.b16 %v4524
    %v4557 = vunpack.c.l.b16 %v4525
    %v4558 = vunpack.c.l.b16 %v4526
    %v4559 = vunpack.c.l.b16 %v4527
    %v4560 = vunpack.c.l.b16 %v4528
    %v4561 = vunpack.c.l.b16 %v4529
    %v4562 = vpack.c.b16 %v4547, %v4546
    %v4563 = vpack.c.b16 %v4549, %v4548
    %v4564 = vpack.c.b16 %v4551, %v4550
    %v4565 = vpack.c.b16 %v4553, %v4552
    %v4566 = vpack.c.b16 %v4555, %v4554
    %v4567 = vpack.c.b16 %v4557, %v4556
    %v4568 = vpack.c.b16 %v4559, %v4558
    %v4569 = vpack.c.b16 %v4561, %v4560
    %4578 = vmatprep.subr.bf16.mxu0 0
    %4579 = vmatpush1.bf16.msra.mxu0 %v4562
    %4580 = vmatprep.subr.bf16.mxu0 0
    %4581 = vmatpush1.bf16.msra.mxu0 %v4563
    %4582 = vmatprep.subr.bf16.mxu0 0
    %4583 = vmatpush1.bf16.msra.mxu0 %v4564
    %4584 = vmatprep.subr.bf16.mxu0 0
    %4585 = vmatpush1.bf16.msra.mxu0 %v4565
    %4586 = vmatprep.subr.bf16.mxu0 0
    %4587 = vmatpush1.bf16.msra.mxu0 %v4566
    %4588 = vmatprep.subr.bf16.mxu0 0
    %4589 = vmatpush1.bf16.msra.mxu0 %v4567
    %4590 = vmatprep.subr.bf16.mxu0 0
    %4591 = vmatpush1.bf16.msra.mxu0 %v4568
    %4592 = vmatprep.subr.bf16.mxu0 0
    %4593 = vmatpush1.bf16.msra.mxu0 %v4569
    %4594 = vmatprep.subr.bf16.mxu0 0
    %4595 = vmatpush1.bf16.msra.mxu0 0
    %4596 = vmatprep.subr.bf16.mxu0 0
    %4597 = vmatpush1.bf16.msra.mxu0 0
    %4598 = vmatprep.subr.bf16.mxu0 0
    %4599 = vmatpush1.bf16.msra.mxu0 0
    %4600 = vmatprep.subr.bf16.mxu0 0
    %4601 = vmatpush1.bf16.msra.mxu0 0
    %4602 = vmatprep.subr.bf16.mxu0 0
    %4603 = vmatpush1.bf16.msra.mxu0 0
    %4604 = vmatprep.subr.bf16.mxu0 0
    %4605 = vmatpush1.bf16.msra.mxu0 0
    %4606 = vmatprep.subr.bf16.mxu0 0
    %4607 = vmatpush1.bf16.msra.mxu0 0
    %4608 = vmatprep.subr.bf16.mxu0 0
    %4609 = vmatpush1.bf16.msra.mxu0 0
    %4610 = vmatprep.mubr.bf16.mxu0 0
    %4611 = vmatmul.mubr.bf16.gmra.mrb[0].mxu0 %v4482
    %v4612 = vpop.f32.mrb[0].mxu0
    %v4613 = vadd.f32 0.0, %v4612
    %v4614 = vpop.f32.mrb[0].mxu0
    %v4615 = vpop.f32.mrb[0].mxu0
    %v4616 = vadd.f32 0.0, %v4615
    %v4617 = vpop.f32.mrb[0].mxu0
    %4618 = vmatprep.mubr.bf16.mxu0 0
    %4619 = vmatmul.mubr.bf16.gmra.mrb[0].mxu0 %v4483
    %v4620 = vpop.f32.mrb[0].mxu0
    %v4621 = vadd.f32 0.0, %v4620
    %v4622 = vpop.f32.mrb[0].mxu0
    %v4623 = vpop.f32.mrb[0].mxu0
    %v4624 = vadd.f32 0.0, %v4623
    %v4625 = vpop.f32.mrb[0].mxu0
    %4626 = vmatprep.mubr.bf16.mxu0 0
    %4627 = vmatmul.mubr.bf16.gmra.mrb[0].mxu0 %v4484
    %v4628 = vpop.f32.mrb[0].mxu0
    %v4629 = vadd.f32 0.0, %v4628
    %v4630 = vpop.f32.mrb[0].mxu0
    %v4631 = vpop.f32.mrb[0].mxu0
    %v4632 = vadd.f32 0.0, %v4631
    %v4633 = vpop.f32.mrb[0].mxu0
    %4634 = vmatprep.mubr.bf16.mxu0 0
    %4635 = vmatmul.mubr.bf16.gmra.mrb[0].mxu0 %v4485
    %v4636 = vpop.f32.mrb[0].mxu0
    %v4637 = vadd.f32 0.0, %v4636
    %v4638 = vpop.f32.mrb[0].mxu0
    %v4639 = vpop.f32.mrb[0].mxu0
    %v4640 = vadd.f32 0.0, %v4639
    %v4641 = vpop.f32.mrb[0].mxu0
    %4642 = vmatprep.mubr.bf16.mxu0 0
    %4643 = vmatmul.mubr.bf16.gmra.mrb[0].mxu0 %v4486
    %v4644 = vpop.f32.mrb[0].mxu0
    %v4645 = vadd.f32 0.0, %v4644
    %v4646 = vpop.f32.mrb[0].mxu0
    %v4647 = vpop.f32.mrb[0].mxu0
    %v4648 = vadd.f32 0.0, %v4647
    %v4649 = vpop.f32.mrb[0].mxu0
    %4650 = vmatprep.mubr.bf16.mxu0 0
    %4651 = vmatmul.mubr.bf16.gmra.mrb[0].mxu0 %v4487
    %v4652 = vpop.f32.mrb[0].mxu0
    %v4653 = vadd.f32 0.0, %v4652
    %v4654 = vpop.f32.mrb[0].mxu0
    %v4655 = vpop.f32.mrb[0].mxu0
    %v4656 = vadd.f32 0.0, %v4655
    %v4657 = vpop.f32.mrb[0].mxu0
    %4658 = vmatprep.mubr.bf16.mxu0 0
    %4659 = vmatmul.mubr.bf16.gmra.mrb[0].mxu0 %v4488
    %v4660 = vpop.f32.mrb[0].mxu0
    %v4661 = vadd.f32 0.0, %v4660
    %v4662 = vpop.f32.mrb[0].mxu0
    %v4663 = vpop.f32.mrb[0].mxu0
    %v4664 = vadd.f32 0.0, %v4663
    %v4665 = vpop.f32.mrb[0].mxu0
    %4666 = vmatprep.mubr.bf16.mxu0 0
    %4667 = vmatmul.mubr.bf16.gmra.mrb[0].mxu0 %v4489
    %v4668 = vpop.f32.mrb[0].mxu0
    %v4669 = vadd.f32 0.0, %v4668
    %v4670 = vpop.f32.mrb[0].mxu0
    %v4671 = vpop.f32.mrb[0].mxu0
    %v4672 = vadd.f32 0.0, %v4671
    %v4673 = vpop.f32.mrb[0].mxu0
    %4674 = vmatprep.mubr.bf16.mxu0 0
    %4675 = vmatmul.mubr.bf16.gmra.mrb[0].mxu0 %v4490
    %v4676 = vpop.f32.mrb[0].mxu0
    %v4677 = vadd.f32 0.0, %v4676
    %v4678 = vpop.f32.mrb[0].mxu0
    %v4679 = vpop.f32.mrb[0].mxu0
    %v4680 = vadd.f32 0.0, %v4679
    %v4681 = vpop.f32.mrb[0].mxu0
    %4682 = vmatprep.mubr.bf16.mxu0 0
    %4683 = vmatmul.mubr.bf16.gmra.mrb[0].mxu0 %v4491
    %v4684 = vpop.f32.mrb[0].mxu0
    %v4685 = vadd.f32 0.0, %v4684
    %v4686 = vpop.f32.mrb[0].mxu0
    %v4687 = vpop.f32.mrb[0].mxu0
    %v4688 = vadd.f32 0.0, %v4687
    %v4689 = vpop.f32.mrb[0].mxu0
    %4690 = vmatprep.mubr.bf16.mxu0 0
    %4691 = vmatmul.mubr.bf16.gmra.mrb[0].mxu0 %v4492
    %v4692 = vpop.f32.mrb[0].mxu0
    %v4693 = vadd.f32 0.0, %v4692
    %v4694 = vpop.f32.mrb[0].mxu0
    %v4695 = vpop.f32.mrb[0].mxu0
    %v4696 = vadd.f32 0.0, %v4695
    %v4697 = vpop.f32.mrb[0].mxu0
    %4698 = vmatprep.mubr.bf16.mxu0 0
    %4699 = vmatmul.mubr.bf16.gmra.mrb[0].mxu0 %v4493
    %v4700 = vpop.f32.mrb[0].mxu0
    %v4701 = vadd.f32 0.0, %v4700
    %v4702 = vpop.f32.mrb[0].mxu0
    %v4703 = vpop.f32.mrb[0].mxu0
    %v4704 = vadd.f32 0.0, %v4703
    %v4705 = vpop.f32.mrb[0].mxu0
    %4706 = vmatprep.mubr.bf16.mxu0 0
    %4707 = vmatmul.mubr.bf16.gmra.mrb[0].mxu0 %v4494
    %v4708 = vpop.f32.mrb[0].mxu0
    %v4709 = vadd.f32 0.0, %v4708
    %v4710 = vpop.f32.mrb[0].mxu0
    %v4711 = vpop.f32.mrb[0].mxu0
    %v4712 = vadd.f32 0.0, %v4711
    %v4713 = vpop.f32.mrb[0].mxu0
    %4714 = vmatprep.mubr.bf16.mxu0 0
    %4715 = vmatmul.mubr.bf16.gmra.mrb[0].mxu0 %v4495
    %v4716 = vpop.f32.mrb[0].mxu0
    %v4717 = vadd.f32 0.0, %v4716
    %v4718 = vpop.f32.mrb[0].mxu0
    %v4719 = vpop.f32.mrb[0].mxu0
    %v4720 = vadd.f32 0.0, %v4719
    %v4721 = vpop.f32.mrb[0].mxu0
    %4722 = vmatprep.mubr.bf16.mxu0 0
    %4723 = vmatmul.mubr.bf16.gmra.mrb[0].mxu0 %v4496
    %v4724 = vpop.f32.mrb[0].mxu0
    %v4725 = vadd.f32 0.0, %v4724
    %v4726 = vpop.f32.mrb[0].mxu0
    %v4727 = vpop.f32.mrb[0].mxu0
    %v4728 = vadd.f32 0.0, %v4727
    %v4729 = vpop.f32.mrb[0].mxu0
    %4730 = vmatprep.mubr.bf16.mxu0 0
    %4731 = vmatmul.mubr.bf16.gmra.mrb[0].mxu0 %v4497
    %v4732 = vpop.f32.mrb[0].mxu0
    %v4733 = vadd.f32 0.0, %v4732
    %v4734 = vpop.f32.mrb[0].mxu0
    %v4735 = vpop.f32.mrb[0].mxu0
    %v4736 = vadd.f32 0.0, %v4735
    %v4737 = vpop.f32.mrb[0].mxu0
    %4738 = vmatprep.mubr.bf16.mxu0 0
    %4739 = vmatmul.mubr.bf16.gmra.mrb[0].mxu0 %v4498
    %v4740 = vpop.f32.mrb[0].mxu0
    %v4741 = vadd.f32 0.0, %v4740
    %v4742 = vpop.f32.mrb[0].mxu0
    %v4743 = vpop.f32.mrb[0].mxu0
    %v4744 = vadd.f32 0.0, %v4743
    %v4745 = vpop.f32.mrb[0].mxu0
    %4746 = vmatprep.mubr.bf16.mxu0 0
    %4747 = vmatmul.mubr.bf16.gmra.mrb[0].mxu0 %v4499
    %v4748 = vpop.f32.mrb[0].mxu0
    %v4749 = vadd.f32 0.0, %v4748
    %v4750 = vpop.f32.mrb[0].mxu0
    %v4751 = vpop.f32.mrb[0].mxu0
    %v4752 = vadd.f32 0.0, %v4751
    %v4753 = vpop.f32.mrb[0].mxu0
    %4754 = vmatprep.mubr.bf16.mxu0 0
    %4755 = vmatmul.mubr.bf16.gmra.mrb[0].mxu0 %v4500
    %v4756 = vpop.f32.mrb[0].mxu0
    %v4757 = vadd.f32 0.0, %v4756
    %v4758 = vpop.f32.mrb[0].mxu0
    %v4759 = vpop.f32.mrb[0].mxu0
    %v4760 = vadd.f32 0.0, %v4759
    %v4761 = vpop.f32.mrb[0].mxu0
    %4762 = vmatprep.mubr.bf16.mxu0 0
    %4763 = vmatmul.mubr.bf16.gmra.mrb[0].mxu0 %v4501
    %v4764 = vpop.f32.mrb[0].mxu0
    %v4765 = vadd.f32 0.0, %v4764
    %v4766 = vpop.f32.mrb[0].mxu0
    %v4767 = vpop.f32.mrb[0].mxu0
    %v4768 = vadd.f32 0.0, %v4767
    %v4769 = vpop.f32.mrb[0].mxu0
    %4770 = vmatprep.mubr.bf16.mxu0 0
    %4771 = vmatmul.mubr.bf16.gmra.mrb[0].mxu0 %v4502
    %v4772 = vpop.f32.mrb[0].mxu0
    %v4773 = vadd.f32 0.0, %v4772
    %v4774 = vpop.f32.mrb[0].mxu0
    %v4775 = vpop.f32.mrb[0].mxu0
    %v4776 = vadd.f32 0.0, %v4775
    %v4777 = vpop.f32.mrb[0].mxu0
    %4778 = vmatprep.mubr.bf16.mxu0 0
    %4779 = vmatmul.mubr.bf16.gmra.mrb[0].mxu0 %v4503
    %v4780 = vpop.f32.mrb[0].mxu0
    %v4781 = vadd.f32 0.0, %v4780
    %v4782 = vpop.f32.mrb[0].mxu0
    %v4783 = vpop.f32.mrb[0].mxu0
    %v4784 = vadd.f32 0.0, %v4783
    %v4785 = vpop.f32.mrb[0].mxu0
    %4786 = vmatprep.mubr.bf16.mxu0 0
    %4787 = vmatmul.mubr.bf16.gmra.mrb[0].mxu0 %v4504
    %v4788 = vpop.f32.mrb[0].mxu0
    %v4789 = vadd.f32 0.0, %v4788
    %v4790 = vpop.f32.mrb[0].mxu0
    %v4791 = vpop.f32.mrb[0].mxu0
    %v4792 = vadd.f32 0.0, %v4791
    %v4793 = vpop.f32.mrb[0].mxu0
    %4794 = vmatprep.mubr.bf16.mxu0 0
    %4795 = vmatmul.mubr.bf16.gmra.mrb[0].mxu0 %v4505
    %v4796 = vpop.f32.mrb[0].mxu0
    %v4797 = vadd.f32 0.0, %v4796
    %v4798 = vpop.f32.mrb[0].mxu0
    %v4799 = vpop.f32.mrb[0].mxu0
    %v4800 = vadd.f32 0.0, %v4799
    %v4801 = vpop.f32.mrb[0].mxu0
    %4802 = vmatprep.mubr.bf16.mxu0 0
    %4803 = vmatmul.mubr.bf16.gmra.mrb[0].mxu0 %v4506
    %v4804 = vpop.f32.mrb[0].mxu0
    %v4805 = vadd.f32 0.0, %v4804
    %v4806 = vpop.f32.mrb[0].mxu0
    %v4807 = vpop.f32.mrb[0].mxu0
    %v4808 = vadd.f32 0.0, %v4807
    %v4809 = vpop.f32.mrb[0].mxu0
    %4810 = vmatprep.mubr.bf16.mxu0 0
    %4811 = vmatmul.mubr.bf16.gmra.mrb[0].mxu0 %v4507
    %v4812 = vpop.f32.mrb[0].mxu0
    %v4813 = vadd.f32 0.0, %v4812
    %v4814 = vpop.f32.mrb[0].mxu0
    %v4815 = vpop.f32.mrb[0].mxu0
    %v4816 = vadd.f32 0.0, %v4815
    %v4817 = vpop.f32.mrb[0].mxu0
    %4818 = vmatprep.mubr.bf16.mxu0 0
    %4819 = vmatmul.mubr.bf16.gmra.mrb[0].mxu0 %v4508
    %v4820 = vpop.f32.mrb[0].mxu0
    %v4821 = vadd.f32 0.0, %v4820
    %v4822 = vpop.f32.mrb[0].mxu0
    %v4823 = vpop.f32.mrb[0].mxu0
    %v4824 = vadd.f32 0.0, %v4823
    %v4825 = vpop.f32.mrb[0].mxu0
    %4826 = vmatprep.mubr.bf16.mxu0 0
    %4827 = vmatmul.mubr.bf16.gmra.mrb[0].mxu0 %v4509
    %v4828 = vpop.f32.mrb[0].mxu0
    %v4829 = vadd.f32 0.0, %v4828
    %v4830 = vpop.f32.mrb[0].mxu0
    %v4831 = vpop.f32.mrb[0].mxu0
    %v4832 = vadd.f32 0.0, %v4831
    %v4833 = vpop.f32.mrb[0].mxu0
    %4834 = vmatprep.mubr.bf16.mxu0 0
    %4835 = vmatmul.mubr.bf16.gmra.mrb[0].mxu0 %v4510
    %v4836 = vpop.f32.mrb[0].mxu0
    %v4837 = vadd.f32 0.0, %v4836
    %v4838 = vpop.f32.mrb[0].mxu0
    %v4839 = vpop.f32.mrb[0].mxu0
    %v4840 = vadd.f32 0.0, %v4839
    %v4841 = vpop.f32.mrb[0].mxu0
    %4842 = vmatprep.mubr.bf16.mxu0 0
    %4843 = vmatmul.mubr.bf16.gmra.mrb[0].mxu0 %v4511
    %v4844 = vpop.f32.mrb[0].mxu0
    %v4845 = vadd.f32 0.0, %v4844
    %v4846 = vpop.f32.mrb[0].mxu0
    %v4847 = vpop.f32.mrb[0].mxu0
    %v4848 = vadd.f32 0.0, %v4847
    %v4849 = vpop.f32.mrb[0].mxu0
    %4850 = vmatprep.mubr.bf16.mxu0 0
    %4851 = vmatmul.mubr.bf16.gmra.mrb[0].mxu0 %v4512
    %v4852 = vpop.f32.mrb[0].mxu0
    %v4853 = vadd.f32 0.0, %v4852
    %v4854 = vpop.f32.mrb[0].mxu0
    %v4855 = vpop.f32.mrb[0].mxu0
    %v4856 = vadd.f32 0.0, %v4855
    %v4857 = vpop.f32.mrb[0].mxu0
    %4858 = vmatprep.mubr.bf16.mxu0 0
    %4859 = vmatmul.mubr.bf16.gmra.mrb[0].mxu0 %v4513
    %v4860 = vpop.f32.mrb[0].mxu0
    %v4861 = vadd.f32 0.0, %v4860
    %v4862 = vpop.f32.mrb[0].mxu0
    %v4863 = vpop.f32.mrb[0].mxu0
    %v4864 = vadd.f32 0.0, %v4863
    %v4865 = vpop.f32.mrb[0].mxu0
    %4866 = vdwg.mxu0
    %v4867 = vld [vmem:[#allocation17] sm:$0x1]
    %v4868 = vld [vmem:[#allocation18] sm:$0x1]
    %v4869 = vadd.f32 %v4613, %v4616
    %v4870 = vadd.f32 %v4869, %v4621
    %v4871 = vadd.f32 %v4870, %v4624
    %v4872 = vadd.f32 %v4871, %v4629
    %v4873 = vadd.f32 %v4872, %v4632
    %v4874 = vadd.f32 %v4873, %v4637
    %v4875 = vadd.f32 %v4874, %v4640
    %v4876 = vadd.f32 %v4875, %v4645
    %v4877 = vadd.f32 %v4876, %v4648
    %v4878 = vadd.f32 %v4877, %v4653
    %v4879 = vadd.f32 %v4878, %v4656
    %v4880 = vadd.f32 %v4879, %v4661
    %v4881 = vadd.f32 %v4880, %v4664
    %v4882 = vadd.f32 %v4881, %v4669
    %v4883 = vadd.f32 %v4882, %v4672
    %v4884 = vadd.f32 %v4883, %v4677
    %v4885 = vadd.f32 %v4884, %v4680
    %v4886 = vadd.f32 %v4885, %v4685
    %v4887 = vadd.f32 %v4886, %v4688
    %v4888 = vadd.f32 %v4887, %v4693
    %v4889 = vadd.f32 %v4888, %v4696
    %v4890 = vadd.f32 %v4889, %v4701
    %v4891 = vadd.f32 %v4890, %v4704
    %v4892 = vadd.f32 %v4891, %v4709
    %v4893 = vadd.f32 %v4892, %v4712
    %v4894 = vadd.f32 %v4893, %v4717
    %v4895 = vadd.f32 %v4894, %v4720
    %v4896 = vadd.f32 %v4895, %v4725
    %v4897 = vadd.f32 %v4896, %v4728
    %v4898 = vadd.f32 %v4897, %v4733
    %v4899 = vadd.f32 %v4898, %v4736
    %v4900 = vadd.f32 %v4899, %v4741
    %v4901 = vadd.f32 %v4900, %v4744
    %v4902 = vadd.f32 %v4901, %v4749
    %v4903 = vadd.f32 %v4902, %v4752
    %v4904 = vadd.f32 %v4903, %v4757
    %v4905 = vadd.f32 %v4904, %v4760
    %v4906 = vadd.f32 %v4905, %v4765
    %v4907 = vadd.f32 %v4906, %v4768
    %v4908 = vadd.f32 %v4907, %v4773
    %v4909 = vadd.f32 %v4908, %v4776
    %v4910 = vadd.f32 %v4909, %v4781
    %v4911 = vadd.f32 %v4910, %v4784
    %v4912 = vadd.f32 %v4911, %v4789
    %v4913 = vadd.f32 %v4912, %v4792
    %v4914 = vadd.f32 %v4913, %v4797
    %v4915 = vadd.f32 %v4914, %v4800
    %v4916 = vadd.f32 %v4915, %v4805
    %v4917 = vadd.f32 %v4916, %v4808
    %v4918 = vadd.f32 %v4917, %v4813
    %v4919 = vadd.f32 %v4918, %v4816
    %v4920 = vadd.f32 %v4919, %v4821
    %v4921 = vadd.f32 %v4920, %v4824
    %v4922 = vadd.f32 %v4921, %v4829
    %v4923 = vadd.f32 %v4922, %v4832
    %v4924 = vadd.f32 %v4923, %v4837
    %v4925 = vadd.f32 %v4924, %v4840
    %v4926 = vadd.f32 %v4925, %v4845
    %v4927 = vadd.f32 %v4926, %v4848
    %v4928 = vadd.f32 %v4927, %v4853
    %v4929 = vadd.f32 %v4928, %v4856
    %v4930 = vadd.f32 %v4929, %v4861
    %v4931 = vadd.f32 %v4930, %v4864
    %v4932 = vrot.slane %v4931, 4
    %v4933 = vadd.f32 %v4931, %v4932
    %v4934 = vrot.slane %v4933, 2
    %v4935 = vadd.f32 %v4933, %v4934
    %v4936 = vrot.slane %v4935, 1
    %v4937 = vadd.f32 %v4935, %v4936
    %v4938 = vmul.f32 %v4937, 0.001953125
    %v4939 = vmul.f32 %v4613, %v4613
    %v4940 = vmul.f32 %v4616, %v4616
    %v4941 = vmul.f32 %v4621, %v4621
    %v4942 = vmul.f32 %v4624, %v4624
    %v4943 = vmul.f32 %v4629, %v4629
    %v4944 = vmul.f32 %v4632, %v4632
    %v4945 = vmul.f32 %v4637, %v4637
    %v4946 = vmul.f32 %v4640, %v4640
    %v4947 = vmul.f32 %v4645, %v4645
    %v4948 = vmul.f32 %v4648, %v4648
    %v4949 = vmul.f32 %v4653, %v4653
    %v4950 = vmul.f32 %v4656, %v4656
    %v4951 = vmul.f32 %v4661, %v4661
    %v4952 = vmul.f32 %v4664, %v4664
    %v4953 = vmul.f32 %v4669, %v4669
    %v4954 = vmul.f32 %v4672, %v4672
    %v4955 = vmul.f32 %v4677, %v4677
    %v4956 = vmul.f32 %v4680, %v4680
    %v4957 = vmul.f32 %v4685, %v4685
    %v4958 = vmul.f32 %v4688, %v4688
    %v4959 = vmul.f32 %v4693, %v4693
    %v4960 = vmul.f32 %v4696, %v4696
    %v4961 = vmul.f32 %v4701, %v4701
    %v4962 = vmul.f32 %v4704, %v4704
    %v4963 = vmul.f32 %v4709, %v4709
    %v4964 = vmul.f32 %v4712, %v4712
    %v4965 = vmul.f32 %v4717, %v4717
    %v4966 = vmul.f32 %v4720, %v4720
    %v4967 = vmul.f32 %v4725, %v4725
    %v4968 = vmul.f32 %v4728, %v4728
    %v4969 = vmul.f32 %v4733, %v4733
    %v4970 = vmul.f32 %v4736, %v4736
    %v4971 = vmul.f32 %v4741, %v4741
    %v4972 = vmul.f32 %v4744, %v4744
    %v4973 = vmul.f32 %v4749, %v4749
    %v4974 = vmul.f32 %v4752, %v4752
    %v4975 = vmul.f32 %v4757, %v4757
    %v4976 = vmul.f32 %v4760, %v4760
    %v4977 = vmul.f32 %v4765, %v4765
    %v4978 = vmul.f32 %v4768, %v4768
    %v4979 = vmul.f32 %v4773, %v4773
    %v4980 = vmul.f32 %v4776, %v4776
    %v4981 = vmul.f32 %v4781, %v4781
    %v4982 = vmul.f32 %v4784, %v4784
    %v4983 = vmul.f32 %v4789, %v4789
    %v4984 = vmul.f32 %v4792, %v4792
    %v4985 = vmul.f32 %v4797, %v4797
    %v4986 = vmul.f32 %v4800, %v4800
    %v4987 = vmul.f32 %v4805, %v4805
    %v4988 = vmul.f32 %v4808, %v4808
    %v4989 = vmul.f32 %v4813, %v4813
    %v4990 = vmul.f32 %v4816, %v4816
    %v4991 = vmul.f32 %v4821, %v4821
    %v4992 = vmul.f32 %v4824, %v4824
    %v4993 = vmul.f32 %v4829, %v4829
    %v4994 = vmul.f32 %v4832, %v4832
    %v4995 = vmul.f32 %v4837, %v4837
    %v4996 = vmul.f32 %v4840, %v4840
    %v4997 = vmul.f32 %v4845, %v4845
    %v4998 = vmul.f32 %v4848, %v4848
    %v4999 = vmul.f32 %v4853, %v4853
    %v5000 = vmul.f32 %v4856, %v4856
    %v5001 = vmul.f32 %v4861, %v4861
    %v5002 = vmul.f32 %v4864, %v4864
    %v5003 = vadd.f32 %v4939, %v4940
    %v5004 = vadd.f32 %v5003, %v4941
    %v5005 = vadd.f32 %v5004, %v4942
    %v5006 = vadd.f32 %v5005, %v4943
    %v5007 = vadd.f32 %v5006, %v4944
    %v5008 = vadd.f32 %v5007, %v4945
    %v5009 = vadd.f32 %v5008, %v4946
    %v5010 = vadd.f32 %v5009, %v4947
    %v5011 = vadd.f32 %v5010, %v4948
    %v5012 = vadd.f32 %v5011, %v4949
    %v5013 = vadd.f32 %v5012, %v4950
    %v5014 = vadd.f32 %v5013, %v4951
    %v5015 = vadd.f32 %v5014, %v4952
    %v5016 = vadd.f32 %v5015, %v4953
    %v5017 = vadd.f32 %v5016, %v4954
    %v5018 = vadd.f32 %v5017, %v4955
    %v5019 = vadd.f32 %v5018, %v4956
    %v5020 = vadd.f32 %v5019, %v4957
    %v5021 = vadd.f32 %v5020, %v4958
    %v5022 = vadd.f32 %v5021, %v4959
    %v5023 = vadd.f32 %v5022, %v4960
    %v5024 = vadd.f32 %v5023, %v4961
    %v5025 = vadd.f32 %v5024, %v4962
    %v5026 = vadd.f32 %v5025, %v4963
    %v5027 = vadd.f32 %v5026, %v4964
    %v5028 = vadd.f32 %v5027, %v4965
    %v5029 = vadd.f32 %v5028, %v4966
    %v5030 = vadd.f32 %v5029, %v4967
    %v5031 = vadd.f32 %v5030, %v4968
    %v5032 = vadd.f32 %v5031, %v4969
    %v5033 = vadd.f32 %v5032, %v4970
    %v5034 = vadd.f32 %v5033, %v4971
    %v5035 = vadd.f32 %v5034, %v4972
    %v5036 = vadd.f32 %v5035, %v4973
    %v5037 = vadd.f32 %v5036, %v4974
    %v5038 = vadd.f32 %v5037, %v4975
    %v5039 = vadd.f32 %v5038, %v4976
    %v5040 = vadd.f32 %v5039, %v4977
    %v5041 = vadd.f32 %v5040, %v4978
    %v5042 = vadd.f32 %v5041, %v4979
    %v5043 = vadd.f32 %v5042, %v4980
    %v5044 = vadd.f32 %v5043, %v4981
    %v5045 = vadd.f32 %v5044, %v4982
    %v5046 = vadd.f32 %v5045, %v4983
    %v5047 = vadd.f32 %v5046, %v4984
    %v5048 = vadd.f32 %v5047, %v4985
    %v5049 = vadd.f32 %v5048, %v4986
    %v5050 = vadd.f32 %v5049, %v4987
    %v5051 = vadd.f32 %v5050, %v4988
    %v5052 = vadd.f32 %v5051, %v4989
    %v5053 = vadd.f32 %v5052, %v4990
    %v5054 = vadd.f32 %v5053, %v4991
    %v5055 = vadd.f32 %v5054, %v4992
    %v5056 = vadd.f32 %v5055, %v4993
    %v5057 = vadd.f32 %v5056, %v4994
    %v5058 = vadd.f32 %v5057, %v4995
    %v5059 = vadd.f32 %v5058, %v4996
    %v5060 = vadd.f32 %v5059, %v4997
    %v5061 = vadd.f32 %v5060, %v4998
    %v5062 = vadd.f32 %v5061, %v4999
    %v5063 = vadd.f32 %v5062, %v5000
    %v5064 = vadd.f32 %v5063, %v5001
    %v5065 = vadd.f32 %v5064, %v5002
    %v5066 = vrot.slane %v5065, 4
    %v5067 = vadd.f32 %v5065, %v5066
    %v5068 = vrot.slane %v5067, 2
    %v5069 = vadd.f32 %v5067, %v5068
    %v5070 = vrot.slane %v5069, 1
    %v5071 = vadd.f32 %v5069, %v5070
    %v5072 = vmul.f32 %v5071, 0.001953125
    %v5073 = vmul.f32 %v4938, %v4938
    %v5074 = vsub.f32 %v5072, %v5073
    %v5075 = vmax.f32 %v5074, 0.0
    %v5076 = vadd.f32 %v5075, 1e-05
    %v5077 = vrsqrt.pop %v5076
    %v5078 = vmul.f32 %v4867, %v5077
    %v5079 = vmul.f32 %v4938, %v5078
    %v5080 = vsub.f32 %v4868, %v5079
    %v5082 = vlaneseq
    %v5083 = vshrl.u32 %v5082, 7
    %v5084 = vsub.s32 0, %v5083
    %v5085 = vrot.slane %v5078, %v5084
    %v5087 = vmul.f32 %v4613, %v5085
    %v5088 = vmul.f32 %v4616, %v5085
    %v5089 = vmul.f32 %v4621, %v5085
    %v5090 = vmul.f32 %v4624, %v5085
    %v5091 = vmul.f32 %v4629, %v5085
    %v5092 = vmul.f32 %v4632, %v5085
    %v5093 = vmul.f32 %v4637, %v5085
    %v5094 = vmul.f32 %v4640, %v5085
    %v5095 = vmul.f32 %v4645, %v5085
    %v5096 = vmul.f32 %v4648, %v5085
    %v5097 = vmul.f32 %v4653, %v5085
    %v5098 = vmul.f32 %v4656, %v5085
    %v5099 = vmul.f32 %v4661, %v5085
    %v5100 = vmul.f32 %v4664, %v5085
    %v5101 = vmul.f32 %v4669, %v5085
    %v5102 = vmul.f32 %v4672, %v5085
    %v5103 = vmul.f32 %v4677, %v5085
    %v5104 = vmul.f32 %v4680, %v5085
    %v5105 = vmul.f32 %v4685, %v5085
    %v5106 = vmul.f32 %v4688, %v5085
    %v5107 = vmul.f32 %v4693, %v5085
    %v5108 = vmul.f32 %v4696, %v5085
    %v5109 = vmul.f32 %v4701, %v5085
    %v5110 = vmul.f32 %v4704, %v5085
    %v5111 = vmul.f32 %v4709, %v5085
    %v5112 = vmul.f32 %v4712, %v5085
    %v5113 = vmul.f32 %v4717, %v5085
    %v5114 = vmul.f32 %v4720, %v5085
    %v5115 = vmul.f32 %v4725, %v5085
    %v5116 = vmul.f32 %v4728, %v5085
    %v5117 = vmul.f32 %v4733, %v5085
    %v5118 = vmul.f32 %v4736, %v5085
    %v5119 = vmul.f32 %v4741, %v5085
    %v5120 = vmul.f32 %v4744, %v5085
    %v5121 = vmul.f32 %v4749, %v5085
    %v5122 = vmul.f32 %v4752, %v5085
    %v5123 = vmul.f32 %v4757, %v5085
    %v5124 = vmul.f32 %v4760, %v5085
    %v5125 = vmul.f32 %v4765, %v5085
    %v5126 = vmul.f32 %v4768, %v5085
    %v5127 = vmul.f32 %v4773, %v5085
    %v5128 = vmul.f32 %v4776, %v5085
    %v5129 = vmul.f32 %v4781, %v5085
    %v5130 = vmul.f32 %v4784, %v5085
    %v5131 = vmul.f32 %v4789, %v5085
    %v5132 = vmul.f32 %v4792, %v5085
    %v5133 = vmul.f32 %v4797, %v5085
    %v5134 = vmul.f32 %v4800, %v5085
    %v5135 = vmul.f32 %v4805, %v5085
    %v5136 = vmul.f32 %v4808, %v5085
    %v5137 = vmul.f32 %v4813, %v5085
    %v5138 = vmul.f32 %v4816, %v5085
    %v5139 = vmul.f32 %v4821, %v5085
    %v5140 = vmul.f32 %v4824, %v5085
    %v5141 = vmul.f32 %v4829, %v5085
    %v5142 = vmul.f32 %v4832, %v5085
    %v5143 = vmul.f32 %v4837, %v5085
    %v5144 = vmul.f32 %v4840, %v5085
    %v5145 = vmul.f32 %v4845, %v5085
    %v5146 = vmul.f32 %v4848, %v5085
    %v5147 = vmul.f32 %v4853, %v5085
    %v5148 = vmul.f32 %v4856, %v5085
    %v5149 = vmul.f32 %v4861, %v5085
    %v5150 = vmul.f32 %v4864, %v5085
    %v5152 = vlaneseq
    %v5153 = vshrl.u32 %v5152, 7
    %v5154 = vsub.s32 0, %v5153
    %v5155 = vrot.slane %v5080, %v5154
    %v5157 = vadd.f32 %v5087, %v5155
    %v5158 = vadd.f32 %v5088, %v5155
    %v5159 = vadd.f32 %v5089, %v5155
    %v5160 = vadd.f32 %v5090, %v5155
    %v5161 = vadd.f32 %v5091, %v5155
    %v5162 = vadd.f32 %v5092, %v5155
    %v5163 = vadd.f32 %v5093, %v5155
    %v5164 = vadd.f32 %v5094, %v5155
    %v5165 = vadd.f32 %v5095, %v5155
    %v5166 = vadd.f32 %v5096, %v5155
    %v5167 = vadd.f32 %v5097, %v5155
    %v5168 = vadd.f32 %v5098, %v5155
    %v5169 = vadd.f32 %v5099, %v5155
    %v5170 = vadd.f32 %v5100, %v5155
    %v5171 = vadd.f32 %v5101, %v5155
    %v5172 = vadd.f32 %v5102, %v5155
    %v5173 = vadd.f32 %v5103, %v5155
    %v5174 = vadd.f32 %v5104, %v5155
    %v5175 = vadd.f32 %v5105, %v5155
    %v5176 = vadd.f32 %v5106, %v5155
    %v5177 = vadd.f32 %v5107, %v5155
    %v5178 = vadd.f32 %v5108, %v5155
    %v5179 = vadd.f32 %v5109, %v5155
    %v5180 = vadd.f32 %v5110, %v5155
    %v5181 = vadd.f32 %v5111, %v5155
    %v5182 = vadd.f32 %v5112, %v5155
    %v5183 = vadd.f32 %v5113, %v5155
    %v5184 = vadd.f32 %v5114, %v5155
    %v5185 = vadd.f32 %v5115, %v5155
    %v5186 = vadd.f32 %v5116, %v5155
    %v5187 = vadd.f32 %v5117, %v5155
    %v5188 = vadd.f32 %v5118, %v5155
    %v5189 = vadd.f32 %v5119, %v5155
    %v5190 = vadd.f32 %v5120, %v5155
    %v5191 = vadd.f32 %v5121, %v5155
    %v5192 = vadd.f32 %v5122, %v5155
    %v5193 = vadd.f32 %v5123, %v5155
    %v5194 = vadd.f32 %v5124, %v5155
    %v5195 = vadd.f32 %v5125, %v5155
    %v5196 = vadd.f32 %v5126, %v5155
    %v5197 = vadd.f32 %v5127, %v5155
    %v5198 = vadd.f32 %v5128, %v5155
    %v5199 = vadd.f32 %v5129, %v5155
    %v5200 = vadd.f32 %v5130, %v5155
    %v5201 = vadd.f32 %v5131, %v5155
    %v5202 = vadd.f32 %v5132, %v5155
    %v5203 = vadd.f32 %v5133, %v5155
    %v5204 = vadd.f32 %v5134, %v5155
    %v5205 = vadd.f32 %v5135, %v5155
    %v5206 = vadd.f32 %v5136, %v5155
    %v5207 = vadd.f32 %v5137, %v5155
    %v5208 = vadd.f32 %v5138, %v5155
    %v5209 = vadd.f32 %v5139, %v5155
    %v5210 = vadd.f32 %v5140, %v5155
    %v5211 = vadd.f32 %v5141, %v5155
    %v5212 = vadd.f32 %v5142, %v5155
    %v5213 = vadd.f32 %v5143, %v5155
    %v5214 = vadd.f32 %v5144, %v5155
    %v5215 = vadd.f32 %v5145, %v5155
    %v5216 = vadd.f32 %v5146, %v5155
    %v5217 = vadd.f32 %v5147, %v5155
    %v5218 = vadd.f32 %v5148, %v5155
    %v5219 = vadd.f32 %v5149, %v5155
    %v5220 = vadd.f32 %v5150, %v5155
    %v5221 = vmax.f32 %v5157, 0.0
    %v5222 = vmax.f32 %v5158, 0.0
    %v5223 = vmax.f32 %v5159, 0.0
    %v5224 = vmax.f32 %v5160, 0.0
    %v5225 = vmax.f32 %v5161, 0.0
    %v5226 = vmax.f32 %v5162, 0.0
    %v5227 = vmax.f32 %v5163, 0.0
    %v5228 = vmax.f32 %v5164, 0.0
    %v5229 = vmax.f32 %v5165, 0.0
    %v5230 = vmax.f32 %v5166, 0.0
    %v5231 = vmax.f32 %v5167, 0.0
    %v5232 = vmax.f32 %v5168, 0.0
    %v5233 = vmax.f32 %v5169, 0.0
    %v5234 = vmax.f32 %v5170, 0.0
    %v5235 = vmax.f32 %v5171, 0.0
    %v5236 = vmax.f32 %v5172, 0.0
    %v5237 = vmax.f32 %v5173, 0.0
    %v5238 = vmax.f32 %v5174, 0.0
    %v5239 = vmax.f32 %v5175, 0.0
    %v5240 = vmax.f32 %v5176, 0.0
    %v5241 = vmax.f32 %v5177, 0.0
    %v5242 = vmax.f32 %v5178, 0.0
    %v5243 = vmax.f32 %v5179, 0.0
    %v5244 = vmax.f32 %v5180, 0.0
    %v5245 = vmax.f32 %v5181, 0.0
    %v5246 = vmax.f32 %v5182, 0.0
    %v5247 = vmax.f32 %v5183, 0.0
    %v5248 = vmax.f32 %v5184, 0.0
    %v5249 = vmax.f32 %v5185, 0.0
    %v5250 = vmax.f32 %v5186, 0.0
    %v5251 = vmax.f32 %v5187, 0.0
    %v5252 = vmax.f32 %v5188, 0.0
    %v5253 = vmax.f32 %v5189, 0.0
    %v5254 = vmax.f32 %v5190, 0.0
    %v5255 = vmax.f32 %v5191, 0.0
    %v5256 = vmax.f32 %v5192, 0.0
    %v5257 = vmax.f32 %v5193, 0.0
    %v5258 = vmax.f32 %v5194, 0.0
    %v5259 = vmax.f32 %v5195, 0.0
    %v5260 = vmax.f32 %v5196, 0.0
    %v5261 = vmax.f32 %v5197, 0.0
    %v5262 = vmax.f32 %v5198, 0.0
    %v5263 = vmax.f32 %v5199, 0.0
    %v5264 = vmax.f32 %v5200, 0.0
    %v5265 = vmax.f32 %v5201, 0.0
    %v5266 = vmax.f32 %v5202, 0.0
    %v5267 = vmax.f32 %v5203, 0.0
    %v5268 = vmax.f32 %v5204, 0.0
    %v5269 = vmax.f32 %v5205, 0.0
    %v5270 = vmax.f32 %v5206, 0.0
    %v5271 = vmax.f32 %v5207, 0.0
    %v5272 = vmax.f32 %v5208, 0.0
    %v5273 = vmax.f32 %v5209, 0.0
    %v5274 = vmax.f32 %v5210, 0.0
    %v5275 = vmax.f32 %v5211, 0.0
    %v5276 = vmax.f32 %v5212, 0.0
    %v5277 = vmax.f32 %v5213, 0.0
    %v5278 = vmax.f32 %v5214, 0.0
    %v5279 = vmax.f32 %v5215, 0.0
    %v5280 = vmax.f32 %v5216, 0.0
    %v5281 = vmax.f32 %v5217, 0.0
    %v5282 = vmax.f32 %v5218, 0.0
    %v5283 = vmax.f32 %v5219, 0.0
    %v5284 = vmax.f32 %v5220, 0.0
    %v5285 = vadd.f32 %v5221, %v161
    %v5286 = vadd.f32 %v5222, %v162
    %v5287 = vadd.f32 %v5223, %v163
    %v5288 = vadd.f32 %v5224, %v164
    %v5289 = vadd.f32 %v5225, %v165
    %v5290 = vadd.f32 %v5226, %v166
    %v5291 = vadd.f32 %v5227, %v167
    %v5292 = vadd.f32 %v5228, %v168
    %v5293 = vadd.f32 %v5229, %v169
    %v5294 = vadd.f32 %v5230, %v170
    %v5295 = vadd.f32 %v5231, %v171
    %v5296 = vadd.f32 %v5232, %v172
    %v5297 = vadd.f32 %v5233, %v173
    %v5298 = vadd.f32 %v5234, %v174
    %v5299 = vadd.f32 %v5235, %v175
    %v5300 = vadd.f32 %v5236, %v176
    %v5301 = vadd.f32 %v5237, %v177
    %v5302 = vadd.f32 %v5238, %v178
    %v5303 = vadd.f32 %v5239, %v179
    %v5304 = vadd.f32 %v5240, %v180
    %v5305 = vadd.f32 %v5241, %v181
    %v5306 = vadd.f32 %v5242, %v182
    %v5307 = vadd.f32 %v5243, %v183
    %v5308 = vadd.f32 %v5244, %v184
    %v5309 = vadd.f32 %v5245, %v185
    %v5310 = vadd.f32 %v5246, %v186
    %v5311 = vadd.f32 %v5247, %v187
    %v5312 = vadd.f32 %v5248, %v188
    %v5313 = vadd.f32 %v5249, %v189
    %v5314 = vadd.f32 %v5250, %v190
    %v5315 = vadd.f32 %v5251, %v191
    %v5316 = vadd.f32 %v5252, %v192
    %v5317 = vadd.f32 %v5253, %v193
    %v5318 = vadd.f32 %v5254, %v194
    %v5319 = vadd.f32 %v5255, %v195
    %v5320 = vadd.f32 %v5256, %v196
    %v5321 = vadd.f32 %v5257, %v197
    %v5322 = vadd.f32 %v5258, %v198
    %v5323 = vadd.f32 %v5259, %v199
    %v5324 = vadd.f32 %v5260, %v200
    %v5325 = vadd.f32 %v5261, %v201
    %v5326 = vadd.f32 %v5262, %v202
    %v5327 = vadd.f32 %v5263, %v203
    %v5328 = vadd.f32 %v5264, %v204
    %v5329 = vadd.f32 %v5265, %v205
    %v5330 = vadd.f32 %v5266, %v206
    %v5331 = vadd.f32 %v5267, %v207
    %v5332 = vadd.f32 %v5268, %v208
    %v5333 = vadd.f32 %v5269, %v209
    %v5334 = vadd.f32 %v5270, %v210
    %v5335 = vadd.f32 %v5271, %v211
    %v5336 = vadd.f32 %v5272, %v212
    %v5337 = vadd.f32 %v5273, %v213
    %v5338 = vadd.f32 %v5274, %v214
    %v5339 = vadd.f32 %v5275, %v215
    %v5340 = vadd.f32 %v5276, %v216
    %v5341 = vadd.f32 %v5277, %v217
    %v5342 = vadd.f32 %v5278, %v218
    %v5343 = vadd.f32 %v5279, %v219
    %v5344 = vadd.f32 %v5280, %v220
    %v5345 = vadd.f32 %v5281, %v221
    %v5346 = vadd.f32 %v5282, %v222
    %v5347 = vadd.f32 %v5283, %v223
    %v5348 = vadd.f32 %v5284, %v224
    %v5349 = vmax.f32 %v5285, 0.0
    %v5350 = vmax.f32 %v5286, 0.0
    %v5351 = vmax.f32 %v5287, 0.0
    %v5352 = vmax.f32 %v5288, 0.0
    %v5353 = vmax.f32 %v5289, 0.0
    %v5354 = vmax.f32 %v5290, 0.0
    %v5355 = vmax.f32 %v5291, 0.0
    %v5356 = vmax.f32 %v5292, 0.0
    %v5357 = vmax.f32 %v5293, 0.0
    %v5358 = vmax.f32 %v5294, 0.0
    %v5359 = vmax.f32 %v5295, 0.0
    %v5360 = vmax.f32 %v5296, 0.0
    %v5361 = vmax.f32 %v5297, 0.0
    %v5362 = vmax.f32 %v5298, 0.0
    %v5363 = vmax.f32 %v5299, 0.0
    %v5364 = vmax.f32 %v5300, 0.0
    %v5365 = vmax.f32 %v5301, 0.0
    %v5366 = vmax.f32 %v5302, 0.0
    %v5367 = vmax.f32 %v5303, 0.0
    %v5368 = vmax.f32 %v5304, 0.0
    %v5369 = vmax.f32 %v5305, 0.0
    %v5370 = vmax.f32 %v5306, 0.0
    %v5371 = vmax.f32 %v5307, 0.0
    %v5372 = vmax.f32 %v5308, 0.0
    %v5373 = vmax.f32 %v5309, 0.0
    %v5374 = vmax.f32 %v5310, 0.0
    %v5375 = vmax.f32 %v5311, 0.0
    %v5376 = vmax.f32 %v5312, 0.0
    %v5377 = vmax.f32 %v5313, 0.0
    %v5378 = vmax.f32 %v5314, 0.0
    %v5379 = vmax.f32 %v5315, 0.0
    %v5380 = vmax.f32 %v5316, 0.0
    %v5381 = vmax.f32 %v5317, 0.0
    %v5382 = vmax.f32 %v5318, 0.0
    %v5383 = vmax.f32 %v5319, 0.0
    %v5384 = vmax.f32 %v5320, 0.0
    %v5385 = vmax.f32 %v5321, 0.0
    %v5386 = vmax.f32 %v5322, 0.0
    %v5387 = vmax.f32 %v5323, 0.0
    %v5388 = vmax.f32 %v5324, 0.0
    %v5389 = vmax.f32 %v5325, 0.0
    %v5390 = vmax.f32 %v5326, 0.0
    %v5391 = vmax.f32 %v5327, 0.0
    %v5392 = vmax.f32 %v5328, 0.0
    %v5393 = vmax.f32 %v5329, 0.0
    %v5394 = vmax.f32 %v5330, 0.0
    %v5395 = vmax.f32 %v5331, 0.0
    %v5396 = vmax.f32 %v5332, 0.0
    %v5397 = vmax.f32 %v5333, 0.0
    %v5398 = vmax.f32 %v5334, 0.0
    %v5399 = vmax.f32 %v5335, 0.0
    %v5400 = vmax.f32 %v5336, 0.0
    %v5401 = vmax.f32 %v5337, 0.0
    %v5402 = vmax.f32 %v5338, 0.0
    %v5403 = vmax.f32 %v5339, 0.0
    %v5404 = vmax.f32 %v5340, 0.0
    %v5405 = vmax.f32 %v5341, 0.0
    %v5406 = vmax.f32 %v5342, 0.0
    %v5407 = vmax.f32 %v5343, 0.0
    %v5408 = vmax.f32 %v5344, 0.0
    %v5409 = vmax.f32 %v5345, 0.0
    %v5410 = vmax.f32 %v5346, 0.0
    %v5411 = vmax.f32 %v5347, 0.0
    %v5412 = vmax.f32 %v5348, 0.0
    %5413 = vst [vmem:[#allocation20] sm:$0xff] %v5349
    %5414 = vst [vmem:[#allocation20 + $0x8] sm:$0xff] %v5350
    %5415 = vst [vmem:[#allocation20 + $0x10] sm:$0xff] %v5351
    %5416 = vst [vmem:[#allocation20 + $0x18] sm:$0xff] %v5352
    %5417 = vst [vmem:[#allocation20 + $0x20] sm:$0xff] %v5353
    %5418 = vst [vmem:[#allocation20 + $0x28] sm:$0xff] %v5354
    %5419 = vst [vmem:[#allocation20 + $0x30] sm:$0xff] %v5355
    %5420 = vst [vmem:[#allocation20 + $0x38] sm:$0xff] %v5356
    %5421 = vst [vmem:[#allocation20 + $0x40] sm:$0xff] %v5357
    %5422 = vst [vmem:[#allocation20 + $0x48] sm:$0xff] %v5358
    %5423 = vst [vmem:[#allocation20 + $0x50] sm:$0xff] %v5359
    %5424 = vst [vmem:[#allocation20 + $0x58] sm:$0xff] %v5360
    %5425 = vst [vmem:[#allocation20 + $0x60] sm:$0xff] %v5361
    %5426 = vst [vmem:[#allocation20 + $0x68] sm:$0xff] %v5362
    %5427 = vst [vmem:[#allocation20 + $0x70] sm:$0xff] %v5363
    %5428 = vst [vmem:[#allocation20 + $0x78] sm:$0xff] %v5364
    %5429 = vst [vmem:[#allocation20 + $0x80] sm:$0xff] %v5365
    %5430 = vst [vmem:[#allocation20 + $0x88] sm:$0xff] %v5366
    %5431 = vst [vmem:[#allocation20 + $0x90] sm:$0xff] %v5367
    %5432 = vst [vmem:[#allocation20 + $0x98] sm:$0xff] %v5368
    %5433 = vst [vmem:[#allocation20 + $0xa0] sm:$0xff] %v5369
    %5434 = vst [vmem:[#allocation20 + $0xa8] sm:$0xff] %v5370
    %5435 = vst [vmem:[#allocation20 + $0xb0] sm:$0xff] %v5371
    %5436 = vst [vmem:[#allocation20 + $0xb8] sm:$0xff] %v5372
    %5437 = vst [vmem:[#allocation20 + $0xc0] sm:$0xff] %v5373
    %5438 = vst [vmem:[#allocation20 + $0xc8] sm:$0xff] %v5374
    %5439 = vst [vmem:[#allocation20 + $0xd0] sm:$0xff] %v5375
    %5440 = vst [vmem:[#allocation20 + $0xd8] sm:$0xff] %v5376
    %5441 = vst [vmem:[#allocation20 + $0xe0] sm:$0xff] %v5377
    %5442 = vst [vmem:[#allocation20 + $0xe8] sm:$0xff] %v5378
    %5443 = vst [vmem:[#allocation20 + $0xf0] sm:$0xff] %v5379
    %5444 = vst [vmem:[#allocation20 + $0xf8] sm:$0xff] %v5380
    %5445 = vst [vmem:[#allocation20 + $0x100] sm:$0xff] %v5381
    %5446 = vst [vmem:[#allocation20 + $0x108] sm:$0xff] %v5382
    %5447 = vst [vmem:[#allocation20 + $0x110] sm:$0xff] %v5383
    %5448 = vst [vmem:[#allocation20 + $0x118] sm:$0xff] %v5384
    %5449 = vst [vmem:[#allocation20 + $0x120] sm:$0xff] %v5385
    %5450 = vst [vmem:[#allocation20 + $0x128] sm:$0xff] %v5386
    %5451 = vst [vmem:[#allocation20 + $0x130] sm:$0xff] %v5387
    %5452 = vst [vmem:[#allocation20 + $0x138] sm:$0xff] %v5388
    %5453 = vst [vmem:[#allocation20 + $0x140] sm:$0xff] %v5389
    %5454 = vst [vmem:[#allocation20 + $0x148] sm:$0xff] %v5390
    %5455 = vst [vmem:[#allocation20 + $0x150] sm:$0xff] %v5391
    %5456 = vst [vmem:[#allocation20 + $0x158] sm:$0xff] %v5392
    %5457 = vst [vmem:[#allocation20 + $0x160] sm:$0xff] %v5393
    %5458 = vst [vmem:[#allocation20 + $0x168] sm:$0xff] %v5394
    %5459 = vst [vmem:[#allocation20 + $0x170] sm:$0xff] %v5395
    %5460 = vst [vmem:[#allocation20 + $0x178] sm:$0xff] %v5396
    %5461 = vst [vmem:[#allocation20 + $0x180] sm:$0xff] %v5397
    %5462 = vst [vmem:[#allocation20 + $0x188] sm:$0xff] %v5398
    %5463 = vst [vmem:[#allocation20 + $0x190] sm:$0xff] %v5399
    %5464 = vst [vmem:[#allocation20 + $0x198] sm:$0xff] %v5400
    %5465 = vst [vmem:[#allocation20 + $0x1a0] sm:$0xff] %v5401
    %5466 = vst [vmem:[#allocation20 + $0x1a8] sm:$0xff] %v5402
    %5467 = vst [vmem:[#allocation20 + $0x1b0] sm:$0xff] %v5403
    %5468 = vst [vmem:[#allocation20 + $0x1b8] sm:$0xff] %v5404
    %5469 = vst [vmem:[#allocation20 + $0x1c0] sm:$0xff] %v5405
    %5470 = vst [vmem:[#allocation20 + $0x1c8] sm:$0xff] %v5406
    %5471 = vst [vmem:[#allocation20 + $0x1d0] sm:$0xff] %v5407
    %5472 = vst [vmem:[#allocation20 + $0x1d8] sm:$0xff] %v5408
    %5473 = vst [vmem:[#allocation20 + $0x1e0] sm:$0xff] %v5409
    %5474 = vst [vmem:[#allocation20 + $0x1e8] sm:$0xff] %v5410
    %5475 = vst [vmem:[#allocation20 + $0x1f0] sm:$0xff] %v5411
    %5476 = vst [vmem:[#allocation20 + $0x1f8] sm:$0xff] %v5412
    // Predicated region
    $region82: #{tpu_custom_call.1} parent=1 // pred_check
      _
    $region83: #{tpu_custom_call.1} parent=1 // pred_check_branch
      %5478 = sbr.rel (0) target = $region85
    $region84: #{tpu_custom_call.1} parent=1 // pred_region
      %s5480 = ssub.s32 8192, 8192
      %5481 = vsyncadd [#allocation5], %s5480
      %s5482 = sshll.u32 [#allocation20], 4
      %s5483 = int_to_ptr.vmem [resolvable:$true] %s5482
      %5488 = dma.vmem_to_hbm [thread:$0]  %s5483, 8192, %s10, [#allocation5], 128, 128, 8
    $region85: #{tpu_custom_call.1} parent=1 // pred_fallthru
      _
    // Predicated region
    $region86: #{tpu_custom_call.1} parent=1 // pred_check
      _
    $region87: #{tpu_custom_call.1} parent=1 // pred_check_branch
      %5490 = sbr.rel (0) target = $region89
    $region88: #{tpu_custom_call.1} parent=1 // pred_region
      %5491 = dma.done [#allocation5], 8192
    $region89: #{tpu_custom_call.1} parent=1 // pred_fallthru
      _
    %5492 = vsyncpa [#allocation4], 1
    %5493 = vsyncpa [#allocation7], 1
    %5494 = vsyncpa [#allocation10], 1
    %5495 = vsyncpa [#allocation13], 1
    %5496 = vsyncpa [#allocation16], 1
    %5497 = vsyncpa [#allocation19], 1
    %5498 = vsyncpa [#allocation5], 1

</llo_original>
